<compile_context>
chip_gen: v7x
topology: tpu7x:2x2x1
jax: 0.10.0
libtpu: 0.0.40
codegen_flags: <defaults>
</compile_context>

<pallas_src>
import functools

import jax
import jax.numpy as jnp
from jax.experimental import pallas as pl
from jax.experimental.pallas import tpu as pltpu


def _round_up(x, m):
    return (x + m - 1) // m * m


def _fused_kernel(x_ref, w1_ref, gamma_ref, beta_ref, skip_ref, w2_ref,
                  out_ref, sum_ref, ssq_ref, *, inv_count, eps):
    # x_ref:    (Cin_p, TP)  bf16   stride-2-subsampled input pixels (one tile)
    # w1_ref:   (C_p, Cin_p) bf16   1x1 conv #1 weights
    # gamma/beta: (C_p, 1)   f32    BN affine params
    # skip_ref: (C_p, TP)    f32    residual input tile (x151)
    # w2_ref:   (C_p, C_p)   bf16   1x1 conv #2 weights
    # out_ref:  (C_p, TP)    f32
    # sum_ref/ssq_ref: (C_p, 1) f32 VMEM scratch, persist across grid steps
    phase = pl.program_id(0)
    is_first_tile = jnp.logical_and(pl.program_id(1) == 0, pl.program_id(2) == 0)

    # conv2d43 (1x1, stride handled in the wrapper) == matmul.
    # bf16 operands, f32 accumulation on the MXU.
    y = jnp.dot(w1_ref[...], x_ref[...], preferred_element_type=jnp.float32)

    @pl.when(jnp.logical_and(phase == 0, is_first_tile))
    def _():
        sum_ref[...] = jnp.zeros_like(sum_ref)
        ssq_ref[...] = jnp.zeros_like(ssq_ref)

    @pl.when(phase == 0)
    def _():
        # Padded pixel columns are all-zero, so they contribute nothing to the
        # sums; we divide by the *real* pixel count (inv_count) in phase 1.
        sum_ref[...] += jnp.sum(y, axis=1, keepdims=True)
        ssq_ref[...] += jnp.sum(y * y, axis=1, keepdims=True)
        # Keep the output buffer deterministic (it is revisited in phase 1).
        out_ref[...] = jnp.zeros_like(out_ref)

    @pl.when(phase == 1)
    def _():
        # batchnorm2d27, training mode: global biased batch statistics.
        mean = sum_ref[...] * inv_count                        # (C_p, 1)
        var = ssq_ref[...] * inv_count - mean * mean           # biased variance
        inv_std = jax.lax.rsqrt(var + eps)
        scale = gamma_ref[...] * inv_std                       # (C_p, 1)
        shift = beta_ref[...] - mean * scale                   # (C_p, 1)
        # BN + residual add + ReLU in f32 on the VPU.
        z = jnp.maximum(y * scale + shift + skip_ref[...], 0.0)
        # conv2d49 (1x1) == matmul; bf16 operands, f32 accumulation.
        out_ref[...] = jnp.dot(w2_ref[...], z.astype(jnp.bfloat16),
                               preferred_element_type=jnp.float32)


def fused_forward(x135, x151, w1, gamma, beta, w2, *, eps=1e-5):
    """x135: (N, 120, H, W) NCHW; x151: (N, 336, H//2, W//2) NCHW."""
    n, cin, h, w = x135.shape
    cout = w1.shape[0]
    ho, wo = (h + 1) // 2, (w + 1) // 2   # 1x1 conv, stride 2
    hw = ho * wo
    count = n * hw                        # pixels contributing to BN stats

    cin_p = _round_up(cin, 128)           # 120 -> 128 (contraction dim)
    c_p = _round_up(cout, 128)            # 336 -> 384 (lane-dense channels)
    tp = min(512, _round_up(hw, 128))     # pixel tile width (lane dim)
    hw_p = _round_up(hw, tp)
    n_p_tiles = hw_p // tp

    # --- glue: channels-first throughout, so NO transposes are needed.
    # Stride-2 subsample + flatten spatial + zero-pad + bf16 cast.
    x_sub = x135[:, :, ::2, ::2].reshape(n, cin, hw)
    x_pad = jnp.pad(x_sub, ((0, 0), (0, cin_p - cin), (0, hw_p - hw)))
    x_pad = x_pad.astype(jnp.bfloat16)                               # (N, Cin_p, HWp)

    skip = x151.reshape(n, cout, hw)
    skip_pad = jnp.pad(skip, ((0, 0), (0, c_p - cout), (0, hw_p - hw)))  # f32

    w1_m = jnp.pad(w1.reshape(cout, cin),
                   ((0, c_p - cout), (0, cin_p - cin))).astype(jnp.bfloat16)
    w2_m = jnp.pad(w2.reshape(cout, cout),
                   ((0, c_p - cout), (0, c_p - cout))).astype(jnp.bfloat16)
    gamma_c = jnp.pad(gamma, (0, c_p - cout)).reshape(c_p, 1).astype(jnp.float32)
    beta_c = jnp.pad(beta, (0, c_p - cout)).reshape(c_p, 1).astype(jnp.float32)

    flops = 2 * count * (2 * cin_p * c_p + c_p * c_p)   # matmul #1 runs twice
    bytes_accessed = (2 * 2 * n * cin_p * hw_p          # x (bf16, both phases)
                      + 2 * c_p * cin_p + 2 * c_p * c_p  # weights (bf16)
                      + 2 * 4 * n * c_p * hw_p           # skip (f32, both phases)
                      + 4 * n * c_p * hw_p)              # output (f32)

    out_pad = pl.pallas_call(
        functools.partial(_fused_kernel, inv_count=1.0 / count, eps=eps),
        out_shape=jax.ShapeDtypeStruct((n, c_p, hw_p), jnp.float32),
        grid_spec=pltpu.PrefetchScalarGridSpec(
            num_scalar_prefetch=0,
            grid=(2, n, n_p_tiles),                      # (phase, batch, pixel tile)
            in_specs=[
                pl.BlockSpec((None, cin_p, tp), lambda ph, b, p: (b, 0, p)),  # x
                pl.BlockSpec((c_p, cin_p), lambda ph, b, p: (0, 0)),          # w1
                pl.BlockSpec((c_p, 1), lambda ph, b, p: (0, 0)),              # gamma
                pl.BlockSpec((c_p, 1), lambda ph, b, p: (0, 0)),              # beta
                pl.BlockSpec((None, c_p, tp), lambda ph, b, p: (b, 0, p)),    # skip
                pl.BlockSpec((c_p, c_p), lambda ph, b, p: (0, 0)),            # w2
            ],
            out_specs=pl.BlockSpec((None, c_p, tp), lambda ph, b, p: (b, 0, p)),
            scratch_shapes=[pltpu.VMEM((c_p, 1), jnp.float32),   # per-channel sum
                            pltpu.VMEM((c_p, 1), jnp.float32)],  # per-channel sum sq
        ),
        compiler_params=pltpu.CompilerParams(
            # Phase axis must be sequential; batch/pixel axes accumulate into
            # shared VMEM scratch (global BN stats) so they also stay "arbitrary".
            dimension_semantics=("arbitrary", "arbitrary", "arbitrary"),
        ),
        cost_estimate=pl.CostEstimate(flops=flops, transcendentals=c_p,
                                      bytes_accessed=bytes_accessed),
    )(x_pad, w1_m, gamma_c, beta_c, skip_pad, w2_m)

    # Drop channel/pixel padding; channels-first reshape -> NCHW (no transpose).
    return out_pad[:, :cout, :hw].reshape(n, cout, ho, wo)


def reference_forward(x135, x151, w1, gamma, beta, w2, *, eps=1e-5):
    """Pure-JAX f32 reference matching the PyTorch training-mode forward."""
    n, cin, h, w = x135.shape
    cout = w1.shape[0]
    x_sub = x135[:, :, ::2, ::2]
    x_flat = jnp.transpose(x_sub, (0, 2, 3, 1)).reshape(-1, cin)
    y = x_flat @ w1.reshape(cout, cin).T
    mean = jnp.mean(y, axis=0, keepdims=True)
    var = jnp.mean((y - mean) ** 2, axis=0, keepdims=True)
    y_bn = (y - mean) / jnp.sqrt(var + eps) * gamma[None, :] + beta[None, :]
    skip = jnp.transpose(x151, (0, 2, 3, 1)).reshape(-1, cout)
    z = jnp.maximum(y_bn + skip, 0.0)
    out = z @ w2.reshape(cout, cout).T
    ho, wo = (h + 1) // 2, (w + 1) // 2
    return out.reshape(n, ho, wo, cout).transpose(0, 3, 1, 2)


if __name__ == "__main__":
    key = jax.random.PRNGKey(0)
    k1, k2, k3, k4, k5, k6 = jax.random.split(key, 6)

    N, CIN, H, W = 1, 120, 28, 28
    COUT = 336

    x135 = jax.random.normal(k1, (N, CIN, H, W), dtype=jnp.float32)
    x151 = jax.random.normal(k2, (N, COUT, H // 2, W // 2), dtype=jnp.float32)

    # Deterministic synthetic parameters (not a checkpoint).
    w1 = jax.random.normal(k3, (COUT, CIN, 1, 1), dtype=jnp.float32) * 0.05
    w2 = jax.random.normal(k4, (COUT, COUT, 1, 1), dtype=jnp.float32) * 0.05
    gamma = 1.0 + 0.1 * jax.random.normal(k5, (COUT,), dtype=jnp.float32)
    beta = 0.1 * jax.random.normal(k6, (COUT,), dtype=jnp.float32)

    fused = jax.jit(fused_forward)
    out = jax.block_until_ready(fused(x135, x151, w1, gamma, beta, w2))

    ref = reference_forward(x135, x151, w1, gamma, beta, w2)
    assert out.shape == (N, COUT, H // 2, W // 2), out.shape
    # bf16 MXU operands vs f32 reference -> loose-but-meaningful tolerance.
    assert jnp.allclose(out, ref, atol=3e-2, rtol=3e-2), (
        "mismatch vs reference, max abs diff = %f"
        % float(jnp.max(jnp.abs(out - ref))))

    print("KERNEL_OK")
</pallas_src>

<mosaic_0001>
module attributes {stable_mosaic.version = 11 : i64} {
  func.func @_fused_kernel(%arg0: i32, %arg1: i32, %arg2: i32, %arg3: memref<1x128x256xbf16, #tpu.memory_space<vmem>>, %arg4: memref<384x128xbf16, #tpu.memory_space<vmem>>, %arg5: memref<384x1xf32, #tpu.memory_space<vmem>>, %arg6: memref<384x1xf32, #tpu.memory_space<vmem>>, %arg7: memref<1x384x256xf32, #tpu.memory_space<vmem>>, %arg8: memref<384x384xbf16, #tpu.memory_space<vmem>>, %arg9: memref<1x384x256xf32, #tpu.memory_space<vmem>>, %arg10: memref<384x1xf32, #tpu.memory_space<vmem>>, %arg11: memref<384x1xf32, #tpu.memory_space<vmem>>) attributes {dimension_semantics = [#tpu.dimension_semantics<arbitrary>, #tpu.dimension_semantics<arbitrary>, #tpu.dimension_semantics<arbitrary>], iteration_bounds = array<i64: 2, 1, 1>, scalar_prefetch = 0 : i64, scratch_operands = 2 : i64, tpu.core_type = #tpu.core_type<tc>, window_params = [{transform_indices = @transform_0, window_bounds = array<i64: 1, 128, 256>}, {pipeline_mode = #tpu.pipeline_mode<synchronous>, transform_indices = @transform_1, window_bounds = array<i64: 384, 128>}, {pipeline_mode = #tpu.pipeline_mode<synchronous>, transform_indices = @transform_2, window_bounds = array<i64: 384, 1>}, {pipeline_mode = #tpu.pipeline_mode<synchronous>, transform_indices = @transform_3, window_bounds = array<i64: 384, 1>}, {transform_indices = @transform_4, window_bounds = array<i64: 1, 384, 256>}, {pipeline_mode = #tpu.pipeline_mode<synchronous>, transform_indices = @transform_5, window_bounds = array<i64: 384, 384>}, {transform_indices = @transform_6, window_bounds = array<i64: 1, 384, 256>}]} {
    %c0_i32 = arith.constant 0 : i32
    %0 = arith.cmpi eq, %arg1, %c0_i32 : i32
    %c0_i32_0 = arith.constant 0 : i32
    %1 = arith.cmpi eq, %arg2, %c0_i32_0 : i32
    %2 = arith.andi %0, %1 : i1
    %c0 = arith.constant 0 : index
    %c0_1 = arith.constant 0 : index
    %3 = vector.load %arg4[%c0, %c0_1] : memref<384x128xbf16, #tpu.memory_space<vmem>>, vector<384x128xbf16>
    %c0_2 = arith.constant 0 : index
    %c0_3 = arith.constant 0 : index
    %c0_4 = arith.constant 0 : index
    %4 = vector.load %arg3[%c0_2, %c0_3, %c0_4] : memref<1x128x256xbf16, #tpu.memory_space<vmem>>, vector<1x128x256xbf16>
    %5 = vector.shape_cast %4 : vector<1x128x256xbf16> to vector<128x256xbf16>
    %cst = arith.constant dense<0.000000e+00> : vector<384x256xf32>
    %6 = tpu.matmul %3, %5, %cst {dimension_numbers = #tpu.dot_dimension_numbers<[1], [0], [0], [1], [0, 0, 1, 1], [], []>} : vector<384x128xbf16>, vector<128x256xbf16>, vector<384x256xf32> -> vector<384x256xf32>
    %c0_i32_5 = arith.constant 0 : i32
    %7 = arith.cmpi eq, %arg0, %c0_i32_5 : i32
    %8 = arith.andi %7, %2 : i1
    %9 = arith.extui %8 : i1 to i32
    %c0_i32_6 = arith.constant 0 : i32
    %10 = arith.cmpi ne, %9, %c0_i32_6 : i32
    scf.if %10 {
      %cst_10 = arith.constant 0.000000e+00 : f32
      %17 = vector.broadcast %cst_10 : f32 to vector<384x1xf32>
      %c0_11 = arith.constant 0 : index
      %c0_12 = arith.constant 0 : index
      %18 = vector.load %arg10[%c0_11, %c0_12] : memref<384x1xf32, #tpu.memory_space<vmem>>, vector<384x1xf32>
      tpu.vector_store %arg10[%c0_11, %c0_12], %17 {strides = array<i32>} : memref<384x1xf32, #tpu.memory_space<vmem>>, vector<384x1xf32>,
      %cst_13 = arith.constant 0.000000e+00 : f32
      %19 = vector.broadcast %cst_13 : f32 to vector<384x1xf32>
      %c0_14 = arith.constant 0 : index
      %c0_15 = arith.constant 0 : index
      %20 = vector.load %arg11[%c0_14, %c0_15] : memref<384x1xf32, #tpu.memory_space<vmem>>, vector<384x1xf32>
      tpu.vector_store %arg11[%c0_14, %c0_15], %19 {strides = array<i32>} : memref<384x1xf32, #tpu.memory_space<vmem>>, vector<384x1xf32>,
    } else {
    }
    %c0_i32_7 = arith.constant 0 : i32
    %11 = arith.cmpi eq, %arg0, %c0_i32_7 : i32
    %12 = arith.extui %11 : i1 to i32
    %c0_i32_8 = arith.constant 0 : i32
    %13 = arith.cmpi ne, %12, %c0_i32_8 : i32
    scf.if %13 {
      %c0_10 = arith.constant 0 : index
      %c0_11 = arith.constant 0 : index
      %17 = vector.load %arg10[%c0_10, %c0_11] : memref<384x1xf32, #tpu.memory_space<vmem>>, vector<384x1xf32>
      %cst_12 = arith.constant dense<0.000000e+00> : vector<384xf32>
      %18 = vector.multi_reduction <add>, %6, %cst_12 [1] : vector<384x256xf32> to vector<384xf32>
      %19 = vector.shape_cast %18 : vector<384xf32> to vector<384x1xf32>
      %20 = arith.addf %17, %19 : vector<384x1xf32>
      %c0_13 = arith.constant 0 : index
      %c0_14 = arith.constant 0 : index
      %21 = vector.load %arg10[%c0_13, %c0_14] : memref<384x1xf32, #tpu.memory_space<vmem>>, vector<384x1xf32>
      tpu.vector_store %arg10[%c0_13, %c0_14], %20 {strides = array<i32>} : memref<384x1xf32, #tpu.memory_space<vmem>>, vector<384x1xf32>,
      %c0_15 = arith.constant 0 : index
      %c0_16 = arith.constant 0 : index
      %22 = vector.load %arg11[%c0_15, %c0_16] : memref<384x1xf32, #tpu.memory_space<vmem>>, vector<384x1xf32>
      %23 = arith.mulf %6, %6 : vector<384x256xf32>
      %cst_17 = arith.constant dense<0.000000e+00> : vector<384xf32>
      %24 = vector.multi_reduction <add>, %23, %cst_17 [1] : vector<384x256xf32> to vector<384xf32>
      %25 = vector.shape_cast %24 : vector<384xf32> to vector<384x1xf32>
      %26 = arith.addf %22, %25 : vector<384x1xf32>
      %c0_18 = arith.constant 0 : index
      %c0_19 = arith.constant 0 : index
      %27 = vector.load %arg11[%c0_18, %c0_19] : memref<384x1xf32, #tpu.memory_space<vmem>>, vector<384x1xf32>
      tpu.vector_store %arg11[%c0_18, %c0_19], %26 {strides = array<i32>} : memref<384x1xf32, #tpu.memory_space<vmem>>, vector<384x1xf32>,
      %cst_20 = arith.constant 0.000000e+00 : f32
      %28 = vector.broadcast %cst_20 : f32 to vector<384x256xf32>
      %c0_21 = arith.constant 0 : index
      %c0_22 = arith.constant 0 : index
      %c0_23 = arith.constant 0 : index
      %29 = vector.load %arg9[%c0_21, %c0_22, %c0_23] : memref<1x384x256xf32, #tpu.memory_space<vmem>>, vector<1x384x256xf32>
      %30 = vector.shape_cast %29 : vector<1x384x256xf32> to vector<384x256xf32>
      %31 = vector.shape_cast %28 : vector<384x256xf32> to vector<1x384x256xf32>
      tpu.vector_store %arg9[%c0_21, %c0_22, %c0_23], %31 {strides = array<i32>} : memref<1x384x256xf32, #tpu.memory_space<vmem>>, vector<1x384x256xf32>,
    } else {
    }
    %c1_i32 = arith.constant 1 : i32
    %14 = arith.cmpi eq, %arg0, %c1_i32 : i32
    %15 = arith.extui %14 : i1 to i32
    %c0_i32_9 = arith.constant 0 : i32
    %16 = arith.cmpi ne, %15, %c0_i32_9 : i32
    scf.if %16 {
      %c0_10 = arith.constant 0 : index
      %c0_11 = arith.constant 0 : index
      %17 = vector.load %arg10[%c0_10, %c0_11] : memref<384x1xf32, #tpu.memory_space<vmem>>, vector<384x1xf32>
      %cst_12 = arith.constant 0.00510204071 : f32
      %18 = vector.broadcast %cst_12 : f32 to vector<384x1xf32>
      %19 = arith.mulf %17, %18 : vector<384x1xf32>
      %c0_13 = arith.constant 0 : index
      %c0_14 = arith.constant 0 : index
      %20 = vector.load %arg11[%c0_13, %c0_14] : memref<384x1xf32, #tpu.memory_space<vmem>>, vector<384x1xf32>
      %cst_15 = arith.constant 0.00510204071 : f32
      %21 = vector.broadcast %cst_15 : f32 to vector<384x1xf32>
      %22 = arith.mulf %20, %21 : vector<384x1xf32>
      %23 = arith.mulf %19, %19 : vector<384x1xf32>
      %24 = arith.subf %22, %23 : vector<384x1xf32>
      %cst_16 = arith.constant 9.99999974E-6 : f32
      %25 = vector.broadcast %cst_16 : f32 to vector<384x1xf32>
      %26 = arith.addf %24, %25 : vector<384x1xf32>
      %27 = math.rsqrt %26 : vector<384x1xf32>
      %c0_17 = arith.constant 0 : index
      %c0_18 = arith.constant 0 : index
      %28 = vector.load %arg5[%c0_17, %c0_18] : memref<384x1xf32, #tpu.memory_space<vmem>>, vector<384x1xf32>
      %29 = arith.mulf %28, %27 : vector<384x1xf32>
      %c0_19 = arith.constant 0 : index
      %c0_20 = arith.constant 0 : index
      %30 = vector.load %arg6[%c0_19, %c0_20] : memref<384x1xf32, #tpu.memory_space<vmem>>, vector<384x1xf32>
      %31 = arith.mulf %19, %29 : vector<384x1xf32>
      %32 = arith.subf %30, %31 : vector<384x1xf32>
      %33 = vector.broadcast %29 : vector<384x1xf32> to vector<384x256xf32>
      %34 = arith.mulf %6, %33 : vector<384x256xf32>
      %35 = vector.broadcast %32 : vector<384x1xf32> to vector<384x256xf32>
      %36 = arith.addf %34, %35 : vector<384x256xf32>
      %c0_21 = arith.constant 0 : index
      %c0_22 = arith.constant 0 : index
      %c0_23 = arith.constant 0 : index
      %37 = vector.load %arg7[%c0_21, %c0_22, %c0_23] : memref<1x384x256xf32, #tpu.memory_space<vmem>>, vector<1x384x256xf32>
      %38 = vector.shape_cast %37 : vector<1x384x256xf32> to vector<384x256xf32>
      %39 = arith.addf %36, %38 : vector<384x256xf32>
      %cst_24 = arith.constant 0.000000e+00 : f32
      %40 = vector.broadcast %cst_24 : f32 to vector<384x256xf32>
      %41 = arith.maximumf %39, %40 : vector<384x256xf32>
      %c0_25 = arith.constant 0 : index
      %c0_26 = arith.constant 0 : index
      %42 = vector.load %arg8[%c0_25, %c0_26] : memref<384x384xbf16, #tpu.memory_space<vmem>>, vector<384x384xbf16>
      %43 = arith.truncf %41 : vector<384x256xf32> to vector<384x256xbf16>
      %cst_27 = arith.constant dense<0.000000e+00> : vector<384x256xf32>
      %44 = tpu.matmul %42, %43, %cst_27 {dimension_numbers = #tpu.dot_dimension_numbers<[1], [0], [0], [1], [0, 0, 1, 1], [], []>} : vector<384x384xbf16>, vector<384x256xbf16>, vector<384x256xf32> -> vector<384x256xf32>
      %c0_28 = arith.constant 0 : index
      %c0_29 = arith.constant 0 : index
      %c0_30 = arith.constant 0 : index
      %45 = vector.load %arg9[%c0_28, %c0_29, %c0_30] : memref<1x384x256xf32, #tpu.memory_space<vmem>>, vector<1x384x256xf32>
      %46 = vector.shape_cast %45 : vector<1x384x256xf32> to vector<384x256xf32>
      %47 = vector.shape_cast %44 : vector<384x256xf32> to vector<1x384x256xf32>
      tpu.vector_store %arg9[%c0_28, %c0_29, %c0_30], %47 {strides = array<i32>} : memref<1x384x256xf32, #tpu.memory_space<vmem>>, vector<1x384x256xf32>,
    } else {
    }
    return
  }
  func.func @transform_0(%arg0: i32, %arg1: i32, %arg2: i32) -> (i32, i32, i32) {
    %c0_i32 = arith.constant 0 : i32
    %c0_i32_0 = arith.constant 0 : i32
    return %arg1, %c0_i32, %arg2 : i32, i32, i32
  }
  func.func @transform_1(%arg0: i32, %arg1: i32, %arg2: i32) -> (i32, i32) {
    %c0_i32 = arith.constant 0 : i32
    %c0_i32_0 = arith.constant 0 : i32
    %c0_i32_1 = arith.constant 0 : i32
    return %c0_i32, %c0_i32_0 : i32, i32
  }
  func.func @transform_2(%arg0: i32, %arg1: i32, %arg2: i32) -> (i32, i32) {
    %c0_i32 = arith.constant 0 : i32
    %c0_i32_0 = arith.constant 0 : i32
    %c0_i32_1 = arith.constant 0 : i32
    return %c0_i32, %c0_i32_0 : i32, i32
  }
  func.func @transform_3(%arg0: i32, %arg1: i32, %arg2: i32) -> (i32, i32) {
    %c0_i32 = arith.constant 0 : i32
    %c0_i32_0 = arith.constant 0 : i32
    %c0_i32_1 = arith.constant 0 : i32
    return %c0_i32, %c0_i32_0 : i32, i32
  }
  func.func @transform_4(%arg0: i32, %arg1: i32, %arg2: i32) -> (i32, i32, i32) {
    %c0_i32 = arith.constant 0 : i32
    %c0_i32_0 = arith.constant 0 : i32
    return %arg1, %c0_i32, %arg2 : i32, i32, i32
  }
  func.func @transform_5(%arg0: i32, %arg1: i32, %arg2: i32) -> (i32, i32) {
    %c0_i32 = arith.constant 0 : i32
    %c0_i32_0 = arith.constant 0 : i32
    %c0_i32_1 = arith.constant 0 : i32
    return %c0_i32, %c0_i32_0 : i32, i32
  }
  func.func @transform_6(%arg0: i32, %arg1: i32, %arg2: i32) -> (i32, i32, i32) {
    %c0_i32 = arith.constant 0 : i32
    %c0_i32_0 = arith.constant 0 : i32
    return %arg1, %c0_i32, %arg2 : i32, i32, i32
  }
}

</mosaic_0001>

<llo_original>
// kernel: fused_forward.1
$region0: #{fused_forward.1}
  #allocation0 [shape = 'u32[]', space=smem, size = 0x4, offset = 0x4, fixed_abs, tag = 'smem constant byte address 0x4 - core index']
  #allocation1 [shape = 'u32[144,128]{1,0:T(1,128)}', space=vmem, size = 0x12000, scoped, tag = 'internal scratch']
  #allocation2 [shape = 'f32[384,1]{1,0:T(8,128)}', space=vmem, size = 0x30000, scoped, tag = 'scratch operand']
  #allocation3 [shape = 'f32[384,1]{1,0:T(8,128)}', space=vmem, size = 0x30000, scoped, tag = 'scratch operand']
  %s0 = inlined_call_operand.vmem [shape: bf16[1,128,256], index: 0, kind: input, shape index: {}]
  %s1 = inlined_call_operand.vmem [shape: bf16[384,128], index: 1, kind: input, shape index: {}]
  %s2 = inlined_call_operand.vmem [shape: f32[384,1], index: 2, kind: input, shape index: {}]
  %s3 = inlined_call_operand.vmem [shape: f32[384,1], index: 3, kind: input, shape index: {}]
  %s4 = inlined_call_operand.vmem [shape: f32[1,384,256], index: 4, kind: input, shape index: {}]
  %s5 = inlined_call_operand.vmem [shape: bf16[384,384], index: 5, kind: input, shape index: {}]
  %s6 = inlined_call_operand.vmem [shape: f32[1,384,256], index: 6, kind: output, shape index: {}]
  %s7 = sld [smem:[#allocation0]]
  $region69: #{fused_forward.1} parent=0
    _
  %s9 = ssub.s32 1, %s7
  %s10 = scalar_select 0, %s9, %s7
  loop: start=0, step=1, limit=4
  $region2: #{fused_forward.1} parent=0 // loop_pre_header
    _
  $region3: #{fused_forward.1} parent=0 // loop_header
    %s12 = sphi 0, %s16
    %p13 = scmp.ge.s32.totalorder %s12, 4
    %s19 = sphi 0, %s38
    %s20 = sphi 0, %s34
    %s21 = sphi 0, %s30
    %s22 = sphi 0, %s19
    %s23 = sphi 0, %s20
    %s24 = sphi 0, %s21
    %s25 = sphi 0, %s22
    %s26 = sphi 0, %s23
    %s27 = sphi 0, %s24
    %s43 = sphi 0, %s45
    %s46 = sphi 0, %s43
    %s47 = sphi 0, %s46
    %s63 = sphi 0, %s47
    %s67 = sphi 0, %s67
    %s69 = sphi 0, %s67
    %s70 = sphi 0, %s69
    %s84 = sphi 0, %s70
    %s88 = sphi 0, %s88
    %s90 = sphi 0, %s88
    %s91 = sphi 0, %s90
    %s105 = sphi 0, %s91
    %s109 = sphi 0, %s109
    %s111 = sphi 0, %s109
    %s112 = sphi 0, %s111
    %s126 = sphi 0, %s112
    %s134 = sphi 0, %s136
    %s137 = sphi 0, %s134
    %s138 = sphi 0, %s137
    %s154 = sphi 0, %s138
    %s158 = sphi 0, %s158
    %s160 = sphi 0, %s158
    %s161 = sphi 0, %s160
    %s175 = sphi 0, %s161
    %s183 = sphi 0, %s185
    %s186 = sphi 0, %s183
    %s187 = sphi 0, %s186
    %s203 = sphi 0, %s187
  $region4: #{fused_forward.1} parent=0 // loop_header_branch
    %15 = sbr.rel (%p13) target = $region8
  $region5: #{fused_forward.1} parent=0 // loop_body
    %s17 = ssub.s32 %s12, 1
    %s18 = ssub.s32 %s12, 2
    %s28 = sadd.s32 1, %s21
    %p29 = scmp.ge.s32.totalorder %s28, 1
    %s30 = scalar_select %p29, 0, %s28
    %s31 = sadd.s32 1, %s20
    %s32 = scalar_select %p29, %s31, %s20
    %p33 = scmp.ge.s32.totalorder %s32, 1
    %s34 = scalar_select %p33, 0, %s32
    %s35 = sadd.s32 1, %s19
    %s36 = scalar_select %p33, %s35, %s19
    %p37 = scmp.ge.s32.totalorder %s36, 2
    %s38 = scalar_select %p37, 0, %s36
    %s39 = ssub.s32 %s20, %s34
    %s40 = ssub.s32 %s21, %s30
    %s41 = sor.u32 %s39, %s40
    %p42 = scmp.eq.s32.totalorder %s41, 0
    %s44 = sadd.s32 %s43, 1
    %s45 = scalar_select %p42, %s43, %s44
    %p48 = pneg %p42
    %p49 = scmp.eq.s32.totalorder %s12, 1
    %p50 = por %p48, %p49
    %p51 = scmp.ne.s32.totalorder %s43, %s46
    %p52 = scmp.eq.s32.totalorder %s12, 0
    %p53 = por %p51, %p52
    %p54 = scmp.ne.s32.totalorder %s43, %s46
    %p55 = scmp.eq.s32.totalorder %s17, 1
    %p56 = por %p54, %p55
    %p57 = scmp.ne.s32.totalorder %s46, %s47
    %p58 = scmp.eq.s32.totalorder %s17, 0
    %p59 = por %p57, %p58
    %p60 = scmp.ne.s32.totalorder %s46, %s47
    %p61 = scmp.eq.s32.totalorder %s18, 1
    %p62 = por %p60, %p61
    %p64 = scmp.ne.s32.totalorder %s47, %s63
    %p65 = scmp.eq.s32.totalorder %s18, 0
    %p66 = por %p64, %p65
    %s68 = sadd.s32 %s67, 1
    %p71 = scmp.eq.s32.totalorder %s12, 1
    %p72 = scmp.ne.s32.totalorder %s67, %s69
    %p73 = scmp.eq.s32.totalorder %s12, 0
    %p74 = por %p72, %p73
    %p75 = scmp.ne.s32.totalorder %s67, %s69
    %p76 = scmp.eq.s32.totalorder %s17, 1
    %p77 = por %p75, %p76
    %p78 = scmp.ne.s32.totalorder %s69, %s70
    %p79 = scmp.eq.s32.totalorder %s17, 0
    %p80 = por %p78, %p79
    %p81 = scmp.ne.s32.totalorder %s69, %s70
    %p82 = scmp.eq.s32.totalorder %s18, 1
    %p83 = por %p81, %p82
    %p85 = scmp.ne.s32.totalorder %s70, %s84
    %p86 = scmp.eq.s32.totalorder %s18, 0
    %p87 = por %p85, %p86
    %s89 = sadd.s32 %s88, 1
    %p92 = scmp.eq.s32.totalorder %s12, 1
    %p93 = scmp.ne.s32.totalorder %s88, %s90
    %p94 = scmp.eq.s32.totalorder %s12, 0
    %p95 = por %p93, %p94
    %p96 = scmp.ne.s32.totalorder %s88, %s90
    %p97 = scmp.eq.s32.totalorder %s17, 1
    %p98 = por %p96, %p97
    %p99 = scmp.ne.s32.totalorder %s90, %s91
    %p100 = scmp.eq.s32.totalorder %s17, 0
    %p101 = por %p99, %p100
    %p102 = scmp.ne.s32.totalorder %s90, %s91
    %p103 = scmp.eq.s32.totalorder %s18, 1
    %p104 = por %p102, %p103
    %p106 = scmp.ne.s32.totalorder %s91, %s105
    %p107 = scmp.eq.s32.totalorder %s18, 0
    %p108 = por %p106, %p107
    %s110 = sadd.s32 %s109, 1
    %p113 = scmp.eq.s32.totalorder %s12, 1
    %p114 = scmp.ne.s32.totalorder %s109, %s111
    %p115 = scmp.eq.s32.totalorder %s12, 0
    %p116 = por %p114, %p115
    %p117 = scmp.ne.s32.totalorder %s109, %s111
    %p118 = scmp.eq.s32.totalorder %s17, 1
    %p119 = por %p117, %p118
    %p120 = scmp.ne.s32.totalorder %s111, %s112
    %p121 = scmp.eq.s32.totalorder %s17, 0
    %p122 = por %p120, %p121
    %p123 = scmp.ne.s32.totalorder %s111, %s112
    %p124 = scmp.eq.s32.totalorder %s18, 1
    %p125 = por %p123, %p124
    %p127 = scmp.ne.s32.totalorder %s112, %s126
    %p128 = scmp.eq.s32.totalorder %s18, 0
    %p129 = por %p127, %p128
    %s130 = ssub.s32 %s20, %s34
    %s131 = ssub.s32 %s21, %s30
    %s132 = sor.u32 %s130, %s131
    %p133 = scmp.eq.s32.totalorder %s132, 0
    %s135 = sadd.s32 %s134, 1
    %s136 = scalar_select %p133, %s134, %s135
    %p139 = pneg %p133
    %p140 = scmp.eq.s32.totalorder %s12, 1
    %p141 = por %p139, %p140
    %p142 = scmp.ne.s32.totalorder %s134, %s137
    %p143 = scmp.eq.s32.totalorder %s12, 0
    %p144 = por %p142, %p143
    %p145 = scmp.ne.s32.totalorder %s134, %s137
    %p146 = scmp.eq.s32.totalorder %s17, 1
    %p147 = por %p145, %p146
    %p148 = scmp.ne.s32.totalorder %s137, %s138
    %p149 = scmp.eq.s32.totalorder %s17, 0
    %p150 = por %p148, %p149
    %p151 = scmp.ne.s32.totalorder %s137, %s138
    %p152 = scmp.eq.s32.totalorder %s18, 1
    %p153 = por %p151, %p152
    %p155 = scmp.ne.s32.totalorder %s138, %s154
    %p156 = scmp.eq.s32.totalorder %s18, 0
    %p157 = por %p155, %p156
    %s159 = sadd.s32 %s158, 1
    %p162 = scmp.eq.s32.totalorder %s12, 1
    %p163 = scmp.ne.s32.totalorder %s158, %s160
    %p164 = scmp.eq.s32.totalorder %s12, 0
    %p165 = por %p163, %p164
    %p166 = scmp.ne.s32.totalorder %s158, %s160
    %p167 = scmp.eq.s32.totalorder %s17, 1
    %p168 = por %p166, %p167
    %p169 = scmp.ne.s32.totalorder %s160, %s161
    %p170 = scmp.eq.s32.totalorder %s17, 0
    %p171 = por %p169, %p170
    %p172 = scmp.ne.s32.totalorder %s160, %s161
    %p173 = scmp.eq.s32.totalorder %s18, 1
    %p174 = por %p172, %p173
    %p176 = scmp.ne.s32.totalorder %s161, %s175
    %p177 = scmp.eq.s32.totalorder %s18, 0
    %p178 = por %p176, %p177
    %s179 = ssub.s32 %s20, %s34
    %s180 = ssub.s32 %s21, %s30
    %s181 = sor.u32 %s179, %s180
    %p182 = scmp.eq.s32.totalorder %s181, 0
    %s184 = sadd.s32 %s183, 1
    %s185 = scalar_select %p182, %s183, %s184
    %p188 = pneg %p182
    %p189 = scmp.eq.s32.totalorder %s12, 1
    %p190 = por %p188, %p189
    %p191 = scmp.ne.s32.totalorder %s183, %s186
    %p192 = scmp.eq.s32.totalorder %s12, 0
    %p193 = por %p191, %p192
    %p194 = scmp.ne.s32.totalorder %s183, %s186
    %p195 = scmp.eq.s32.totalorder %s17, 1
    %p196 = por %p194, %p195
    %p197 = scmp.ne.s32.totalorder %s186, %s187
    %p198 = scmp.eq.s32.totalorder %s17, 0
    %p199 = por %p197, %p198
    %p200 = scmp.ne.s32.totalorder %s186, %s187
    %p201 = scmp.eq.s32.totalorder %s18, 1
    %p202 = por %p200, %p201
    %p204 = scmp.ne.s32.totalorder %s187, %s203
    %p205 = scmp.eq.s32.totalorder %s18, 0
    %p206 = por %p204, %p205
    %p207 = scmp.le.s32.totalorder 1, %s12
    %p208 = scmp.lt.s32.totalorder %s12, 3
    %p209 = pnand %p207, %p208
    %p210 = pneg %p209
    // Predicated region
    $region9: #{fused_forward.1} parent=5 // pred_check
      _
    $region10: #{fused_forward.1} parent=5 // pred_check_branch
      %212 = sbr.rel (%p209) target = $region12
    $region11: #{fused_forward.1} parent=5 // pred_region
      %s213 = ssub.s32 %s12, 1
      // Predicated region
      $region13: #{fused_forward.1} parent=11 // pred_check
        %p214 = pneg %p59
      $region14: #{fused_forward.1} parent=11 // pred_check_branch
        %216 = sbr.rel (%p214) target = $region16
      $region15: #{fused_forward.1} parent=11 // pred_region
        %s217 = smul.u32 2, %s24
        %p218 = scmp.lt.s32.totalorder %s23, 0
        %s219 = scalar_select %p218, %s23, 0
        %p220 = scmp.lt.s32.totalorder %s217, 1
        %s221 = scalar_select %p220, %s217, 1
        %s222 = smul.addr %s219, 32
        %s223 = sadd.s32 %s221, %s222
        %s224 = smul.addr %s223, 4
        %s225 = scalar_lea.vmem %s0, %s224
        %s226 = smul.u32 2, %s24
      $region16: #{fused_forward.1} parent=11 // pred_fallthru
        _
      // Predicated region
      $region17: #{fused_forward.1} parent=11 // pred_check
        %p227 = pneg %p80
      $region18: #{fused_forward.1} parent=11 // pred_check_branch
        %229 = sbr.rel (%p227) target = $region20
      $region19: #{fused_forward.1} parent=11 // pred_region
        _
      $region20: #{fused_forward.1} parent=11 // pred_fallthru
        _
      // Predicated region
      $region21: #{fused_forward.1} parent=11 // pred_check
        %p230 = pneg %p101
      $region22: #{fused_forward.1} parent=11 // pred_check_branch
        %232 = sbr.rel (%p230) target = $region24
      $region23: #{fused_forward.1} parent=11 // pred_region
        _
      $region24: #{fused_forward.1} parent=11 // pred_fallthru
        _
      // Predicated region
      $region25: #{fused_forward.1} parent=11 // pred_check
        %p233 = pneg %p122
      $region26: #{fused_forward.1} parent=11 // pred_check_branch
        %235 = sbr.rel (%p233) target = $region28
      $region27: #{fused_forward.1} parent=11 // pred_region
        _
      $region28: #{fused_forward.1} parent=11 // pred_fallthru
        _
      // Predicated region
      $region29: #{fused_forward.1} parent=11 // pred_check
        %p236 = pneg %p150
      $region30: #{fused_forward.1} parent=11 // pred_check_branch
        %238 = sbr.rel (%p236) target = $region32
      $region31: #{fused_forward.1} parent=11 // pred_region
        %s239 = smul.u32 2, %s24
        %p240 = scmp.lt.s32.totalorder %s23, 0
        %s241 = scalar_select %p240, %s23, 0
        %p242 = scmp.lt.s32.totalorder %s239, 1
        %s243 = scalar_select %p242, %s239, 1
        %s244 = smul.addr %s241, 96
        %s245 = sadd.s32 %s243, %s244
        %s246 = smul.addr %s245, 8
        %s247 = scalar_lea.vmem %s4, %s246
        %s248 = smul.u32 2, %s24
      $region32: #{fused_forward.1} parent=11 // pred_fallthru
        _
      // Predicated region
      $region33: #{fused_forward.1} parent=11 // pred_check
        %p249 = pneg %p171
      $region34: #{fused_forward.1} parent=11 // pred_check_branch
        %251 = sbr.rel (%p249) target = $region36
      $region35: #{fused_forward.1} parent=11 // pred_region
        _
      $region36: #{fused_forward.1} parent=11 // pred_fallthru
        _
    $region12: #{fused_forward.1} parent=5 // pred_fallthru
      _
    %p252 = scmp.lt.s32.totalorder %s12, 2
    // Predicated region
    $region37: #{fused_forward.1} parent=5 // pred_check
      %p253 = pneg %p252
    $region38: #{fused_forward.1} parent=5 // pred_check_branch
      %255 = sbr.rel (%p253) target = $region40
    $region39: #{fused_forward.1} parent=5 // pred_region
      _
    $region40: #{fused_forward.1} parent=5 // pred_fallthru
      _
    %p256 = scmp.le.s32.totalorder 1, %s12
    %p257 = scmp.lt.s32.totalorder %s12, 3
    %p258 = pnand %p256, %p257
    %p259 = pneg %p258
    // Predicated region
    $region41: #{fused_forward.1} parent=5 // pred_check
      _
    $region42: #{fused_forward.1} parent=5 // pred_check_branch
      %261 = sbr.rel (%p258) target = $region44
    $region43: #{fused_forward.1} parent=5 // pred_region
      %s262 = ssub.s32 %s12, 1
      %s263 = smul.u32 2, %s24
      %p264 = scmp.lt.s32.totalorder %s23, 0
      %s265 = scalar_select %p264, %s23, 0
      %p266 = scmp.lt.s32.totalorder %s263, 1
      %s267 = scalar_select %p266, %s263, 1
      %s268 = smul.addr %s265, 32
      %s269 = sadd.s32 %s267, %s268
      %s270 = smul.addr %s269, 4
      %s271 = scalar_lea.vmem %s0, %s270
      %p272 = pneg %p59
      %p273 = pneg %p56
      %p274 = pneg %p80
      %p275 = pneg %p77
      %p276 = pneg %p101
      %p277 = pneg %p98
      %p278 = pneg %p122
      %p279 = pneg %p119
      %s280 = smul.u32 2, %s24
      %p281 = scmp.lt.s32.totalorder %s23, 0
      %s282 = scalar_select %p281, %s23, 0
      %p283 = scmp.lt.s32.totalorder %s280, 1
      %s284 = scalar_select %p283, %s280, 1
      %s285 = smul.addr %s282, 96
      %s286 = sadd.s32 %s284, %s285
      %s287 = smul.addr %s286, 8
      %s288 = scalar_lea.vmem %s4, %s287
      %p289 = pneg %p150
      %p290 = pneg %p147
      %p291 = pneg %p171
      %p292 = pneg %p168
      %p293 = pneg %p199
      %p294 = pneg %p196
      %s295 = smul.u32 2, %s24
      %p296 = scmp.lt.s32.totalorder %s23, 0
      %s297 = scalar_select %p296, %s23, 0
      %p298 = scmp.lt.s32.totalorder %s295, 1
      %s299 = scalar_select %p298, %s295, 1
      %s300 = smul.addr %s297, 96
      %s301 = sadd.s32 %s299, %s300
      %s302 = smul.addr %s301, 8
      %s303 = scalar_lea.vmem %s6, %s302
      %s304 = smul.u32 2, %s24
      %p305 = scmp.lt.s32.totalorder %s23, 0
      %s306 = scalar_select %p305, %s23, 0
      %p307 = scmp.lt.s32.totalorder %s304, 1
      %s308 = scalar_select %p307, %s304, 1
      %s309 = smul.addr %s306, 32
      %s310 = sadd.s32 %s308, %s309
      %s311 = smul.addr %s310, 4
      %s312 = scalar_lea.vmem %s0, %s311
      %s313 = smul.u32 2, %s24
      %s314 = smul.u32 2, %s24
      %p315 = scmp.lt.s32.totalorder %s23, 0
      %s316 = scalar_select %p315, %s23, 0
      %p317 = scmp.lt.s32.totalorder %s314, 1
      %s318 = scalar_select %p317, %s314, 1
      %s319 = smul.addr %s316, 96
      %s320 = sadd.s32 %s318, %s319
      %s321 = smul.addr %s320, 8
      %s322 = scalar_lea.vmem %s4, %s321
      %s323 = smul.u32 2, %s24
      %s324 = smul.u32 2, %s24
      %p325 = scmp.lt.s32.totalorder %s23, 0
      %s326 = scalar_select %p325, %s23, 0
      %p327 = scmp.lt.s32.totalorder %s324, 1
      %s328 = scalar_select %p327, %s324, 1
      %s329 = smul.addr %s326, 96
      %s330 = sadd.s32 %s328, %s329
      %s331 = smul.addr %s330, 8
      %s332 = scalar_lea.vmem %s6, %s331
      %s333 = smul.u32 2, %s24
      %p335 = scmp.eq.s32.totalorder %s23, 0
      %p336 = scmp.eq.s32.totalorder %s24, 0
      %p337 = pnand %p335, %p336
      %p338 = pneg %p337
      %v339 = vld [vmem:[%s1] sm:$0xf]
      %v340 = vld [vmem:[%s1 + $0x4] sm:$0xf]
      %v341 = vld [vmem:[%s1 + $0x8] sm:$0xf]
      %v342 = vld [vmem:[%s1 + $0xc] sm:$0xf]
      %v343 = vld [vmem:[%s1 + $0x10] sm:$0xf]
      %v344 = vld [vmem:[%s1 + $0x14] sm:$0xf]
      %v345 = vld [vmem:[%s1 + $0x18] sm:$0xf]
      %v346 = vld [vmem:[%s1 + $0x1c] sm:$0xf]
      %v347 = vld [vmem:[%s1 + $0x20] sm:$0xf]
      %v348 = vld [vmem:[%s1 + $0x24] sm:$0xf]
      %v349 = vld [vmem:[%s1 + $0x28] sm:$0xf]
      %v350 = vld [vmem:[%s1 + $0x2c] sm:$0xf]
      %v351 = vld [vmem:[%s1 + $0x30] sm:$0xf]
      %v352 = vld [vmem:[%s1 + $0x34] sm:$0xf]
      %v353 = vld [vmem:[%s1 + $0x38] sm:$0xf]
      %v354 = vld [vmem:[%s1 + $0x3c] sm:$0xf]
      %v355 = vld [vmem:[%s1 + $0x40] sm:$0xf]
      %v356 = vld [vmem:[%s1 + $0x44] sm:$0xf]
      %v357 = vld [vmem:[%s1 + $0x48] sm:$0xf]
      %v358 = vld [vmem:[%s1 + $0x4c] sm:$0xf]
      %v359 = vld [vmem:[%s1 + $0x50] sm:$0xf]
      %v360 = vld [vmem:[%s1 + $0x54] sm:$0xf]
      %v361 = vld [vmem:[%s1 + $0x58] sm:$0xf]
      %v362 = vld [vmem:[%s1 + $0x5c] sm:$0xf]
      %v363 = vld [vmem:[%s1 + $0x60] sm:$0xf]
      %v364 = vld [vmem:[%s1 + $0x64] sm:$0xf]
      %v365 = vld [vmem:[%s1 + $0x68] sm:$0xf]
      %v366 = vld [vmem:[%s1 + $0x6c] sm:$0xf]
      %v367 = vld [vmem:[%s1 + $0x70] sm:$0xf]
      %v368 = vld [vmem:[%s1 + $0x74] sm:$0xf]
      %v369 = vld [vmem:[%s1 + $0x78] sm:$0xf]
      %v370 = vld [vmem:[%s1 + $0x7c] sm:$0xf]
      %v371 = vld [vmem:[%s1 + $0x80] sm:$0xf]
      %v372 = vld [vmem:[%s1 + $0x84] sm:$0xf]
      %v373 = vld [vmem:[%s1 + $0x88] sm:$0xf]
      %v374 = vld [vmem:[%s1 + $0x8c] sm:$0xf]
      %v375 = vld [vmem:[%s1 + $0x90] sm:$0xf]
      %v376 = vld [vmem:[%s1 + $0x94] sm:$0xf]
      %v377 = vld [vmem:[%s1 + $0x98] sm:$0xf]
      %v378 = vld [vmem:[%s1 + $0x9c] sm:$0xf]
      %v379 = vld [vmem:[%s1 + $0xa0] sm:$0xf]
      %v380 = vld [vmem:[%s1 + $0xa4] sm:$0xf]
      %v381 = vld [vmem:[%s1 + $0xa8] sm:$0xf]
      %v382 = vld [vmem:[%s1 + $0xac] sm:$0xf]
      %v383 = vld [vmem:[%s1 + $0xb0] sm:$0xf]
      %v384 = vld [vmem:[%s1 + $0xb4] sm:$0xf]
      %v385 = vld [vmem:[%s1 + $0xb8] sm:$0xf]
      %v386 = vld [vmem:[%s1 + $0xbc] sm:$0xf]
      %v387 = vld [vmem:[%s312] sm:$0xff]
      %v388 = vld [vmem:[%s312 + $0x8] sm:$0xff]
      %v389 = vld [vmem:[%s312 + $0x10] sm:$0xff]
      %v390 = vld [vmem:[%s312 + $0x18] sm:$0xff]
      %v391 = vld [vmem:[%s312 + $0x20] sm:$0xff]
      %v392 = vld [vmem:[%s312 + $0x28] sm:$0xff]
      %v393 = vld [vmem:[%s312 + $0x30] sm:$0xff]
      %v394 = vld [vmem:[%s312 + $0x38] sm:$0xff]
      %v395 = vld [vmem:[%s312 + $0x40] sm:$0xff]
      %v396 = vld [vmem:[%s312 + $0x48] sm:$0xff]
      %v397 = vld [vmem:[%s312 + $0x50] sm:$0xff]
      %v398 = vld [vmem:[%s312 + $0x58] sm:$0xff]
      %v399 = vld [vmem:[%s312 + $0x60] sm:$0xff]
      %v400 = vld [vmem:[%s312 + $0x68] sm:$0xff]
      %v401 = vld [vmem:[%s312 + $0x70] sm:$0xff]
      %v402 = vld [vmem:[%s312 + $0x78] sm:$0xff]
      %v451 = vunpack.c.l.b16 %v339
      %v452 = vunpack.c.l.b16 %v340
      %v453 = vunpack.c.l.b16 %v341
      %v454 = vunpack.c.l.b16 %v342
      %v455 = vunpack.c.l.b16 %v343
      %v456 = vunpack.c.l.b16 %v344
      %v457 = vunpack.c.l.b16 %v345
      %v458 = vunpack.c.l.b16 %v346
      %v459 = vunpack.c.l.b16 %v347
      %v460 = vunpack.c.l.b16 %v348
      %v461 = vunpack.c.l.b16 %v349
      %v462 = vunpack.c.l.b16 %v350
      %v463 = vunpack.c.l.b16 %v351
      %v464 = vunpack.c.l.b16 %v352
      %v465 = vunpack.c.l.b16 %v353
      %v466 = vunpack.c.l.b16 %v354
      %v467 = vunpack.c.l.b16 %v355
      %v468 = vunpack.c.l.b16 %v356
      %v469 = vunpack.c.l.b16 %v357
      %v470 = vunpack.c.l.b16 %v358
      %v471 = vunpack.c.l.b16 %v359
      %v472 = vunpack.c.l.b16 %v360
      %v473 = vunpack.c.l.b16 %v361
      %v474 = vunpack.c.l.b16 %v362
      %v475 = vunpack.c.l.b16 %v363
      %v476 = vunpack.c.l.b16 %v364
      %v477 = vunpack.c.l.b16 %v365
      %v478 = vunpack.c.l.b16 %v366
      %v479 = vunpack.c.l.b16 %v367
      %v480 = vunpack.c.l.b16 %v368
      %v481 = vunpack.c.l.b16 %v369
      %v482 = vunpack.c.l.b16 %v370
      %v483 = vunpack.c.l.b16 %v371
      %v484 = vunpack.c.l.b16 %v372
      %v485 = vunpack.c.l.b16 %v373
      %v486 = vunpack.c.l.b16 %v374
      %v487 = vunpack.c.l.b16 %v375
      %v488 = vunpack.c.l.b16 %v376
      %v489 = vunpack.c.l.b16 %v377
      %v490 = vunpack.c.l.b16 %v378
      %v491 = vunpack.c.l.b16 %v379
      %v492 = vunpack.c.l.b16 %v380
      %v493 = vunpack.c.l.b16 %v381
      %v494 = vunpack.c.l.b16 %v382
      %v495 = vunpack.c.l.b16 %v383
      %v496 = vunpack.c.l.b16 %v384
      %v497 = vunpack.c.l.b16 %v385
      %v498 = vunpack.c.l.b16 %v386
      %v499 = vpack.c.b16 %v452, %v451
      %v500 = vpack.c.b16 %v454, %v453
      %v501 = vpack.c.b16 %v456, %v455
      %v502 = vpack.c.b16 %v458, %v457
      %v503 = vpack.c.b16 %v460, %v459
      %v504 = vpack.c.b16 %v462, %v461
      %v505 = vpack.c.b16 %v464, %v463
      %v506 = vpack.c.b16 %v466, %v465
      %v507 = vpack.c.b16 %v468, %v467
      %v508 = vpack.c.b16 %v470, %v469
      %v509 = vpack.c.b16 %v472, %v471
      %v510 = vpack.c.b16 %v474, %v473
      %v511 = vpack.c.b16 %v476, %v475
      %v512 = vpack.c.b16 %v478, %v477
      %v513 = vpack.c.b16 %v480, %v479
      %v514 = vpack.c.b16 %v482, %v481
      %v515 = vpack.c.b16 %v484, %v483
      %v516 = vpack.c.b16 %v486, %v485
      %v517 = vpack.c.b16 %v488, %v487
      %v518 = vpack.c.b16 %v490, %v489
      %v519 = vpack.c.b16 %v492, %v491
      %v520 = vpack.c.b16 %v494, %v493
      %v521 = vpack.c.b16 %v496, %v495
      %v522 = vpack.c.b16 %v498, %v497
      %v563 = vunpack.c.l.b16 %v387
      %v564 = vunpack.c.h.b16 %v387
      %v565 = vunpack.c.l.b16 %v388
      %v566 = vunpack.c.h.b16 %v388
      %v567 = vunpack.c.l.b16 %v389
      %v568 = vunpack.c.h.b16 %v389
      %v569 = vunpack.c.l.b16 %v390
      %v570 = vunpack.c.h.b16 %v390
      %v571 = vunpack.c.l.b16 %v391
      %v572 = vunpack.c.h.b16 %v391
      %v573 = vunpack.c.l.b16 %v392
      %v574 = vunpack.c.h.b16 %v392
      %v575 = vunpack.c.l.b16 %v393
      %v576 = vunpack.c.h.b16 %v393
      %v577 = vunpack.c.l.b16 %v394
      %v578 = vunpack.c.h.b16 %v394
      %v579 = vunpack.c.l.b16 %v395
      %v580 = vunpack.c.h.b16 %v395
      %v581 = vunpack.c.l.b16 %v396
      %v582 = vunpack.c.h.b16 %v396
      %v583 = vunpack.c.l.b16 %v397
      %v584 = vunpack.c.h.b16 %v397
      %v585 = vunpack.c.l.b16 %v398
      %v586 = vunpack.c.h.b16 %v398
      %v587 = vunpack.c.l.b16 %v399
      %v588 = vunpack.c.h.b16 %v399
      %v589 = vunpack.c.l.b16 %v400
      %v590 = vunpack.c.h.b16 %v400
      %v591 = vunpack.c.l.b16 %v401
      %v592 = vunpack.c.h.b16 %v401
      %v593 = vunpack.c.l.b16 %v402
      %v594 = vunpack.c.h.b16 %v402
      %v595 = vpack.c.b16 %v565, %v563
      %v596 = vpack.c.b16 %v566, %v564
      %v597 = vpack.c.b16 %v569, %v567
      %v598 = vpack.c.b16 %v570, %v568
      %v599 = vpack.c.b16 %v573, %v571
      %v600 = vpack.c.b16 %v574, %v572
      %v601 = vpack.c.b16 %v577, %v575
      %v602 = vpack.c.b16 %v578, %v576
      %v603 = vpack.c.b16 %v581, %v579
      %v604 = vpack.c.b16 %v582, %v580
      %v605 = vpack.c.b16 %v585, %v583
      %v606 = vpack.c.b16 %v586, %v584
      %v607 = vpack.c.b16 %v589, %v587
      %v608 = vpack.c.b16 %v590, %v588
      %v609 = vpack.c.b16 %v593, %v591
      %v610 = vpack.c.b16 %v594, %v592
      %627 = vmatprep.subr.bf16.mxu0 %v596
      %628 = vmatpush1.bf16.msra.mxu0 %v595
      %629 = vmatprep.subr.bf16.mxu0 %v598
      %630 = vmatpush1.bf16.msra.mxu0 %v597
      %631 = vmatprep.subr.bf16.mxu0 %v600
      %632 = vmatpush1.bf16.msra.mxu0 %v599
      %633 = vmatprep.subr.bf16.mxu0 %v602
      %634 = vmatpush1.bf16.msra.mxu0 %v601
      %635 = vmatprep.subr.bf16.mxu0 %v604
      %636 = vmatpush1.bf16.msra.mxu0 %v603
      %637 = vmatprep.subr.bf16.mxu0 %v606
      %638 = vmatpush1.bf16.msra.mxu0 %v605
      %639 = vmatprep.subr.bf16.mxu0 %v608
      %640 = vmatpush1.bf16.msra.mxu0 %v607
      %641 = vmatprep.subr.bf16.mxu0 %v610
      %642 = vmatpush1.bf16.msra.mxu0 %v609
      %643 = vmatprep.subr.bf16.mxu0 0
      %644 = vmatpush1.bf16.msra.mxu0 0
      %645 = vmatprep.subr.bf16.mxu0 0
      %646 = vmatpush1.bf16.msra.mxu0 0
      %647 = vmatprep.subr.bf16.mxu0 0
      %648 = vmatpush1.bf16.msra.mxu0 0
      %649 = vmatprep.subr.bf16.mxu0 0
      %650 = vmatpush1.bf16.msra.mxu0 0
      %651 = vmatprep.subr.bf16.mxu0 0
      %652 = vmatpush1.bf16.msra.mxu0 0
      %653 = vmatprep.subr.bf16.mxu0 0
      %654 = vmatpush1.bf16.msra.mxu0 0
      %655 = vmatprep.subr.bf16.mxu0 0
      %656 = vmatpush1.bf16.msra.mxu0 0
      %657 = vmatprep.subr.bf16.mxu0 0
      %658 = vmatpush1.bf16.msra.mxu0 0
      %659 = vmatprep.mubr.bf16.mxu0 0
      %660 = vmatmul.mubr.bf16.gmra.mrb[0].mxu0 %v499
      %v661 = vpop.f32.mrb[0].mxu0
      %v662 = vadd.f32 0.0, %v661
      %v663 = vpop.f32.mrb[0].mxu0
      %v664 = vadd.f32 0.0, %v663
      %v665 = vpop.f32.mrb[0].mxu0
      %v666 = vadd.f32 0.0, %v665
      %v667 = vpop.f32.mrb[0].mxu0
      %v668 = vadd.f32 0.0, %v667
      %669 = vmatprep.mubr.bf16.mxu0 0
      %670 = vmatmul.mubr.bf16.gmra.mrb[0].mxu0 %v500
      %v671 = vpop.f32.mrb[0].mxu0
      %v672 = vadd.f32 0.0, %v671
      %v673 = vpop.f32.mrb[0].mxu0
      %v674 = vadd.f32 0.0, %v673
      %v675 = vpop.f32.mrb[0].mxu0
      %v676 = vadd.f32 0.0, %v675
      %v677 = vpop.f32.mrb[0].mxu0
      %v678 = vadd.f32 0.0, %v677
      %679 = vmatprep.mubr.bf16.mxu0 0
      %680 = vmatmul.mubr.bf16.gmra.mrb[0].mxu0 %v501
      %v681 = vpop.f32.mrb[0].mxu0
      %v682 = vadd.f32 0.0, %v681
      %v683 = vpop.f32.mrb[0].mxu0
      %v684 = vadd.f32 0.0, %v683
      %v685 = vpop.f32.mrb[0].mxu0
      %v686 = vadd.f32 0.0, %v685
      %v687 = vpop.f32.mrb[0].mxu0
      %v688 = vadd.f32 0.0, %v687
      %689 = vmatprep.mubr.bf16.mxu0 0
      %690 = vmatmul.mubr.bf16.gmra.mrb[0].mxu0 %v502
      %v691 = vpop.f32.mrb[0].mxu0
      %v692 = vadd.f32 0.0, %v691
      %v693 = vpop.f32.mrb[0].mxu0
      %v694 = vadd.f32 0.0, %v693
      %v695 = vpop.f32.mrb[0].mxu0
      %v696 = vadd.f32 0.0, %v695
      %v697 = vpop.f32.mrb[0].mxu0
      %v698 = vadd.f32 0.0, %v697
      %699 = vmatprep.mubr.bf16.mxu0 0
      %700 = vmatmul.mubr.bf16.gmra.mrb[0].mxu0 %v503
      %v701 = vpop.f32.mrb[0].mxu0
      %v702 = vadd.f32 0.0, %v701
      %v703 = vpop.f32.mrb[0].mxu0
      %v704 = vadd.f32 0.0, %v703
      %v705 = vpop.f32.mrb[0].mxu0
      %v706 = vadd.f32 0.0, %v705
      %v707 = vpop.f32.mrb[0].mxu0
      %v708 = vadd.f32 0.0, %v707
      %709 = vmatprep.mubr.bf16.mxu0 0
      %710 = vmatmul.mubr.bf16.gmra.mrb[0].mxu0 %v504
      %v711 = vpop.f32.mrb[0].mxu0
      %v712 = vadd.f32 0.0, %v711
      %v713 = vpop.f32.mrb[0].mxu0
      %v714 = vadd.f32 0.0, %v713
      %v715 = vpop.f32.mrb[0].mxu0
      %v716 = vadd.f32 0.0, %v715
      %v717 = vpop.f32.mrb[0].mxu0
      %v718 = vadd.f32 0.0, %v717
      %719 = vmatprep.mubr.bf16.mxu0 0
      %720 = vmatmul.mubr.bf16.gmra.mrb[0].mxu0 %v505
      %v721 = vpop.f32.mrb[0].mxu0
      %v722 = vadd.f32 0.0, %v721
      %v723 = vpop.f32.mrb[0].mxu0
      %v724 = vadd.f32 0.0, %v723
      %v725 = vpop.f32.mrb[0].mxu0
      %v726 = vadd.f32 0.0, %v725
      %v727 = vpop.f32.mrb[0].mxu0
      %v728 = vadd.f32 0.0, %v727
      %729 = vmatprep.mubr.bf16.mxu0 0
      %730 = vmatmul.mubr.bf16.gmra.mrb[0].mxu0 %v506
      %v731 = vpop.f32.mrb[0].mxu0
      %v732 = vadd.f32 0.0, %v731
      %v733 = vpop.f32.mrb[0].mxu0
      %v734 = vadd.f32 0.0, %v733
      %v735 = vpop.f32.mrb[0].mxu0
      %v736 = vadd.f32 0.0, %v735
      %v737 = vpop.f32.mrb[0].mxu0
      %v738 = vadd.f32 0.0, %v737
      %739 = vmatprep.mubr.bf16.mxu0 0
      %740 = vmatmul.mubr.bf16.gmra.mrb[0].mxu0 %v507
      %v741 = vpop.f32.mrb[0].mxu0
      %v742 = vadd.f32 0.0, %v741
      %v743 = vpop.f32.mrb[0].mxu0
      %v744 = vadd.f32 0.0, %v743
      %v745 = vpop.f32.mrb[0].mxu0
      %v746 = vadd.f32 0.0, %v745
      %v747 = vpop.f32.mrb[0].mxu0
      %v748 = vadd.f32 0.0, %v747
      %749 = vmatprep.mubr.bf16.mxu0 0
      %750 = vmatmul.mubr.bf16.gmra.mrb[0].mxu0 %v508
      %v751 = vpop.f32.mrb[0].mxu0
      %v752 = vadd.f32 0.0, %v751
      %v753 = vpop.f32.mrb[0].mxu0
      %v754 = vadd.f32 0.0, %v753
      %v755 = vpop.f32.mrb[0].mxu0
      %v756 = vadd.f32 0.0, %v755
      %v757 = vpop.f32.mrb[0].mxu0
      %v758 = vadd.f32 0.0, %v757
      %759 = vmatprep.mubr.bf16.mxu0 0
      %760 = vmatmul.mubr.bf16.gmra.mrb[0].mxu0 %v509
      %v761 = vpop.f32.mrb[0].mxu0
      %v762 = vadd.f32 0.0, %v761
      %v763 = vpop.f32.mrb[0].mxu0
      %v764 = vadd.f32 0.0, %v763
      %v765 = vpop.f32.mrb[0].mxu0
      %v766 = vadd.f32 0.0, %v765
      %v767 = vpop.f32.mrb[0].mxu0
      %v768 = vadd.f32 0.0, %v767
      %769 = vmatprep.mubr.bf16.mxu0 0
      %770 = vmatmul.mubr.bf16.gmra.mrb[0].mxu0 %v510
      %v771 = vpop.f32.mrb[0].mxu0
      %v772 = vadd.f32 0.0, %v771
      %v773 = vpop.f32.mrb[0].mxu0
      %v774 = vadd.f32 0.0, %v773
      %v775 = vpop.f32.mrb[0].mxu0
      %v776 = vadd.f32 0.0, %v775
      %v777 = vpop.f32.mrb[0].mxu0
      %v778 = vadd.f32 0.0, %v777
      %779 = vmatprep.mubr.bf16.mxu0 0
      %780 = vmatmul.mubr.bf16.gmra.mrb[0].mxu0 %v511
      %v781 = vpop.f32.mrb[0].mxu0
      %v782 = vadd.f32 0.0, %v781
      %v783 = vpop.f32.mrb[0].mxu0
      %v784 = vadd.f32 0.0, %v783
      %v785 = vpop.f32.mrb[0].mxu0
      %v786 = vadd.f32 0.0, %v785
      %v787 = vpop.f32.mrb[0].mxu0
      %v788 = vadd.f32 0.0, %v787
      %789 = vmatprep.mubr.bf16.mxu0 0
      %790 = vmatmul.mubr.bf16.gmra.mrb[0].mxu0 %v512
      %v791 = vpop.f32.mrb[0].mxu0
      %v792 = vadd.f32 0.0, %v791
      %v793 = vpop.f32.mrb[0].mxu0
      %v794 = vadd.f32 0.0, %v793
      %v795 = vpop.f32.mrb[0].mxu0
      %v796 = vadd.f32 0.0, %v795
      %v797 = vpop.f32.mrb[0].mxu0
      %v798 = vadd.f32 0.0, %v797
      %799 = vmatprep.mubr.bf16.mxu0 0
      %800 = vmatmul.mubr.bf16.gmra.mrb[0].mxu0 %v513
      %v801 = vpop.f32.mrb[0].mxu0
      %v802 = vadd.f32 0.0, %v801
      %v803 = vpop.f32.mrb[0].mxu0
      %v804 = vadd.f32 0.0, %v803
      %v805 = vpop.f32.mrb[0].mxu0
      %v806 = vadd.f32 0.0, %v805
      %v807 = vpop.f32.mrb[0].mxu0
      %v808 = vadd.f32 0.0, %v807
      %809 = vmatprep.mubr.bf16.mxu0 0
      %810 = vmatmul.mubr.bf16.gmra.mrb[0].mxu0 %v514
      %v811 = vpop.f32.mrb[0].mxu0
      %v812 = vadd.f32 0.0, %v811
      %v813 = vpop.f32.mrb[0].mxu0
      %v814 = vadd.f32 0.0, %v813
      %v815 = vpop.f32.mrb[0].mxu0
      %v816 = vadd.f32 0.0, %v815
      %v817 = vpop.f32.mrb[0].mxu0
      %v818 = vadd.f32 0.0, %v817
      %819 = vmatprep.mubr.bf16.mxu0 0
      %820 = vmatmul.mubr.bf16.gmra.mrb[0].mxu0 %v515
      %v821 = vpop.f32.mrb[0].mxu0
      %v822 = vadd.f32 0.0, %v821
      %v823 = vpop.f32.mrb[0].mxu0
      %v824 = vadd.f32 0.0, %v823
      %v825 = vpop.f32.mrb[0].mxu0
      %v826 = vadd.f32 0.0, %v825
      %v827 = vpop.f32.mrb[0].mxu0
      %v828 = vadd.f32 0.0, %v827
      %829 = vmatprep.mubr.bf16.mxu0 0
      %830 = vmatmul.mubr.bf16.gmra.mrb[0].mxu0 %v516
      %v831 = vpop.f32.mrb[0].mxu0
      %v832 = vadd.f32 0.0, %v831
      %v833 = vpop.f32.mrb[0].mxu0
      %v834 = vadd.f32 0.0, %v833
      %v835 = vpop.f32.mrb[0].mxu0
      %v836 = vadd.f32 0.0, %v835
      %v837 = vpop.f32.mrb[0].mxu0
      %v838 = vadd.f32 0.0, %v837
      %839 = vmatprep.mubr.bf16.mxu0 0
      %840 = vmatmul.mubr.bf16.gmra.mrb[0].mxu0 %v517
      %v841 = vpop.f32.mrb[0].mxu0
      %v842 = vadd.f32 0.0, %v841
      %v843 = vpop.f32.mrb[0].mxu0
      %v844 = vadd.f32 0.0, %v843
      %v845 = vpop.f32.mrb[0].mxu0
      %v846 = vadd.f32 0.0, %v845
      %v847 = vpop.f32.mrb[0].mxu0
      %v848 = vadd.f32 0.0, %v847
      %849 = vmatprep.mubr.bf16.mxu0 0
      %850 = vmatmul.mubr.bf16.gmra.mrb[0].mxu0 %v518
      %v851 = vpop.f32.mrb[0].mxu0
      %v852 = vadd.f32 0.0, %v851
      %v853 = vpop.f32.mrb[0].mxu0
      %v854 = vadd.f32 0.0, %v853
      %v855 = vpop.f32.mrb[0].mxu0
      %v856 = vadd.f32 0.0, %v855
      %v857 = vpop.f32.mrb[0].mxu0
      %v858 = vadd.f32 0.0, %v857
      %859 = vmatprep.mubr.bf16.mxu0 0
      %860 = vmatmul.mubr.bf16.gmra.mrb[0].mxu0 %v519
      %v861 = vpop.f32.mrb[0].mxu0
      %v862 = vadd.f32 0.0, %v861
      %v863 = vpop.f32.mrb[0].mxu0
      %v864 = vadd.f32 0.0, %v863
      %v865 = vpop.f32.mrb[0].mxu0
      %v866 = vadd.f32 0.0, %v865
      %v867 = vpop.f32.mrb[0].mxu0
      %v868 = vadd.f32 0.0, %v867
      %869 = vmatprep.mubr.bf16.mxu0 0
      %870 = vmatmul.mubr.bf16.gmra.mrb[0].mxu0 %v520
      %v871 = vpop.f32.mrb[0].mxu0
      %v872 = vadd.f32 0.0, %v871
      %v873 = vpop.f32.mrb[0].mxu0
      %v874 = vadd.f32 0.0, %v873
      %v875 = vpop.f32.mrb[0].mxu0
      %v876 = vadd.f32 0.0, %v875
      %v877 = vpop.f32.mrb[0].mxu0
      %v878 = vadd.f32 0.0, %v877
      %879 = vmatprep.mubr.bf16.mxu0 0
      %880 = vmatmul.mubr.bf16.gmra.mrb[0].mxu0 %v521
      %v881 = vpop.f32.mrb[0].mxu0
      %v882 = vadd.f32 0.0, %v881
      %v883 = vpop.f32.mrb[0].mxu0
      %v884 = vadd.f32 0.0, %v883
      %v885 = vpop.f32.mrb[0].mxu0
      %v886 = vadd.f32 0.0, %v885
      %v887 = vpop.f32.mrb[0].mxu0
      %v888 = vadd.f32 0.0, %v887
      %889 = vmatprep.mubr.bf16.mxu0 0
      %890 = vmatmul.mubr.bf16.gmra.mrb[0].mxu0 %v522
      %v891 = vpop.f32.mrb[0].mxu0
      %v892 = vadd.f32 0.0, %v891
      %v893 = vpop.f32.mrb[0].mxu0
      %v894 = vadd.f32 0.0, %v893
      %v895 = vpop.f32.mrb[0].mxu0
      %v896 = vadd.f32 0.0, %v895
      %v897 = vpop.f32.mrb[0].mxu0
      %v898 = vadd.f32 0.0, %v897
      %899 = vdwg.mxu0
      %p900 = scmp.eq.s32.totalorder %s22, 0
      %p901 = pnand %p900, %p338
      %p902 = pneg %p901
      // Predicated region
      $region45: #{fused_forward.1} parent=43 // pred_check
        _
      $region46: #{fused_forward.1} parent=43 // pred_check_branch
        %904 = sbr.rel (%p901) target = $region48
      $region47: #{fused_forward.1} parent=43 // pred_region
        %vm905 = vcmask 7168
        %906 = vst.msk [vmem:[#allocation2] sm:$0xff] %vm905, 0.0
        %907 = vst.msk [vmem:[#allocation2 + $0x8] sm:$0xff] %vm905, 0.0
        %908 = vst.msk [vmem:[#allocation2 + $0x10] sm:$0xff] %vm905, 0.0
        %909 = vst.msk [vmem:[#allocation2 + $0x18] sm:$0xff] %vm905, 0.0
        %910 = vst.msk [vmem:[#allocation2 + $0x20] sm:$0xff] %vm905, 0.0
        %911 = vst.msk [vmem:[#allocation2 + $0x28] sm:$0xff] %vm905, 0.0
        %912 = vst.msk [vmem:[#allocation2 + $0x30] sm:$0xff] %vm905, 0.0
        %913 = vst.msk [vmem:[#allocation2 + $0x38] sm:$0xff] %vm905, 0.0
        %914 = vst.msk [vmem:[#allocation2 + $0x40] sm:$0xff] %vm905, 0.0
        %915 = vst.msk [vmem:[#allocation2 + $0x48] sm:$0xff] %vm905, 0.0
        %916 = vst.msk [vmem:[#allocation2 + $0x50] sm:$0xff] %vm905, 0.0
        %917 = vst.msk [vmem:[#allocation2 + $0x58] sm:$0xff] %vm905, 0.0
        %918 = vst.msk [vmem:[#allocation2 + $0x60] sm:$0xff] %vm905, 0.0
        %919 = vst.msk [vmem:[#allocation2 + $0x68] sm:$0xff] %vm905, 0.0
        %920 = vst.msk [vmem:[#allocation2 + $0x70] sm:$0xff] %vm905, 0.0
        %921 = vst.msk [vmem:[#allocation2 + $0x78] sm:$0xff] %vm905, 0.0
        %922 = vst.msk [vmem:[#allocation2 + $0x80] sm:$0xff] %vm905, 0.0
        %923 = vst.msk [vmem:[#allocation2 + $0x88] sm:$0xff] %vm905, 0.0
        %924 = vst.msk [vmem:[#allocation2 + $0x90] sm:$0xff] %vm905, 0.0
        %925 = vst.msk [vmem:[#allocation2 + $0x98] sm:$0xff] %vm905, 0.0
        %926 = vst.msk [vmem:[#allocation2 + $0xa0] sm:$0xff] %vm905, 0.0
        %927 = vst.msk [vmem:[#allocation2 + $0xa8] sm:$0xff] %vm905, 0.0
        %928 = vst.msk [vmem:[#allocation2 + $0xb0] sm:$0xff] %vm905, 0.0
        %929 = vst.msk [vmem:[#allocation2 + $0xb8] sm:$0xff] %vm905, 0.0
        %930 = vst.msk [vmem:[#allocation2 + $0xc0] sm:$0xff] %vm905, 0.0
        %931 = vst.msk [vmem:[#allocation2 + $0xc8] sm:$0xff] %vm905, 0.0
        %932 = vst.msk [vmem:[#allocation2 + $0xd0] sm:$0xff] %vm905, 0.0
        %933 = vst.msk [vmem:[#allocation2 + $0xd8] sm:$0xff] %vm905, 0.0
        %934 = vst.msk [vmem:[#allocation2 + $0xe0] sm:$0xff] %vm905, 0.0
        %935 = vst.msk [vmem:[#allocation2 + $0xe8] sm:$0xff] %vm905, 0.0
        %936 = vst.msk [vmem:[#allocation2 + $0xf0] sm:$0xff] %vm905, 0.0
        %937 = vst.msk [vmem:[#allocation2 + $0xf8] sm:$0xff] %vm905, 0.0
        %938 = vst.msk [vmem:[#allocation2 + $0x100] sm:$0xff] %vm905, 0.0
        %939 = vst.msk [vmem:[#allocation2 + $0x108] sm:$0xff] %vm905, 0.0
        %940 = vst.msk [vmem:[#allocation2 + $0x110] sm:$0xff] %vm905, 0.0
        %941 = vst.msk [vmem:[#allocation2 + $0x118] sm:$0xff] %vm905, 0.0
        %942 = vst.msk [vmem:[#allocation2 + $0x120] sm:$0xff] %vm905, 0.0
        %943 = vst.msk [vmem:[#allocation2 + $0x128] sm:$0xff] %vm905, 0.0
        %944 = vst.msk [vmem:[#allocation2 + $0x130] sm:$0xff] %vm905, 0.0
        %945 = vst.msk [vmem:[#allocation2 + $0x138] sm:$0xff] %vm905, 0.0
        %946 = vst.msk [vmem:[#allocation2 + $0x140] sm:$0xff] %vm905, 0.0
        %947 = vst.msk [vmem:[#allocation2 + $0x148] sm:$0xff] %vm905, 0.0
        %948 = vst.msk [vmem:[#allocation2 + $0x150] sm:$0xff] %vm905, 0.0
        %949 = vst.msk [vmem:[#allocation2 + $0x158] sm:$0xff] %vm905, 0.0
        %950 = vst.msk [vmem:[#allocation2 + $0x160] sm:$0xff] %vm905, 0.0
        %951 = vst.msk [vmem:[#allocation2 + $0x168] sm:$0xff] %vm905, 0.0
        %952 = vst.msk [vmem:[#allocation2 + $0x170] sm:$0xff] %vm905, 0.0
        %953 = vst.msk [vmem:[#allocation2 + $0x178] sm:$0xff] %vm905, 0.0
        %954 = vst.msk [vmem:[#allocation3] sm:$0xff] %vm905, 0.0
        %955 = vst.msk [vmem:[#allocation3 + $0x8] sm:$0xff] %vm905, 0.0
        %956 = vst.msk [vmem:[#allocation3 + $0x10] sm:$0xff] %vm905, 0.0
        %957 = vst.msk [vmem:[#allocation3 + $0x18] sm:$0xff] %vm905, 0.0
        %958 = vst.msk [vmem:[#allocation3 + $0x20] sm:$0xff] %vm905, 0.0
        %959 = vst.msk [vmem:[#allocation3 + $0x28] sm:$0xff] %vm905, 0.0
        %960 = vst.msk [vmem:[#allocation3 + $0x30] sm:$0xff] %vm905, 0.0
        %961 = vst.msk [vmem:[#allocation3 + $0x38] sm:$0xff] %vm905, 0.0
        %962 = vst.msk [vmem:[#allocation3 + $0x40] sm:$0xff] %vm905, 0.0
        %963 = vst.msk [vmem:[#allocation3 + $0x48] sm:$0xff] %vm905, 0.0
        %964 = vst.msk [vmem:[#allocation3 + $0x50] sm:$0xff] %vm905, 0.0
        %965 = vst.msk [vmem:[#allocation3 + $0x58] sm:$0xff] %vm905, 0.0
        %966 = vst.msk [vmem:[#allocation3 + $0x60] sm:$0xff] %vm905, 0.0
        %967 = vst.msk [vmem:[#allocation3 + $0x68] sm:$0xff] %vm905, 0.0
        %968 = vst.msk [vmem:[#allocation3 + $0x70] sm:$0xff] %vm905, 0.0
        %969 = vst.msk [vmem:[#allocation3 + $0x78] sm:$0xff] %vm905, 0.0
        %970 = vst.msk [vmem:[#allocation3 + $0x80] sm:$0xff] %vm905, 0.0
        %971 = vst.msk [vmem:[#allocation3 + $0x88] sm:$0xff] %vm905, 0.0
        %972 = vst.msk [vmem:[#allocation3 + $0x90] sm:$0xff] %vm905, 0.0
        %973 = vst.msk [vmem:[#allocation3 + $0x98] sm:$0xff] %vm905, 0.0
        %974 = vst.msk [vmem:[#allocation3 + $0xa0] sm:$0xff] %vm905, 0.0
        %975 = vst.msk [vmem:[#allocation3 + $0xa8] sm:$0xff] %vm905, 0.0
        %976 = vst.msk [vmem:[#allocation3 + $0xb0] sm:$0xff] %vm905, 0.0
        %977 = vst.msk [vmem:[#allocation3 + $0xb8] sm:$0xff] %vm905, 0.0
        %978 = vst.msk [vmem:[#allocation3 + $0xc0] sm:$0xff] %vm905, 0.0
        %979 = vst.msk [vmem:[#allocation3 + $0xc8] sm:$0xff] %vm905, 0.0
        %980 = vst.msk [vmem:[#allocation3 + $0xd0] sm:$0xff] %vm905, 0.0
        %981 = vst.msk [vmem:[#allocation3 + $0xd8] sm:$0xff] %vm905, 0.0
        %982 = vst.msk [vmem:[#allocation3 + $0xe0] sm:$0xff] %vm905, 0.0
        %983 = vst.msk [vmem:[#allocation3 + $0xe8] sm:$0xff] %vm905, 0.0
        %984 = vst.msk [vmem:[#allocation3 + $0xf0] sm:$0xff] %vm905, 0.0
        %985 = vst.msk [vmem:[#allocation3 + $0xf8] sm:$0xff] %vm905, 0.0
        %986 = vst.msk [vmem:[#allocation3 + $0x100] sm:$0xff] %vm905, 0.0
        %987 = vst.msk [vmem:[#allocation3 + $0x108] sm:$0xff] %vm905, 0.0
        %988 = vst.msk [vmem:[#allocation3 + $0x110] sm:$0xff] %vm905, 0.0
        %989 = vst.msk [vmem:[#allocation3 + $0x118] sm:$0xff] %vm905, 0.0
        %990 = vst.msk [vmem:[#allocation3 + $0x120] sm:$0xff] %vm905, 0.0
        %991 = vst.msk [vmem:[#allocation3 + $0x128] sm:$0xff] %vm905, 0.0
        %992 = vst.msk [vmem:[#allocation3 + $0x130] sm:$0xff] %vm905, 0.0
        %993 = vst.msk [vmem:[#allocation3 + $0x138] sm:$0xff] %vm905, 0.0
        %994 = vst.msk [vmem:[#allocation3 + $0x140] sm:$0xff] %vm905, 0.0
        %995 = vst.msk [vmem:[#allocation3 + $0x148] sm:$0xff] %vm905, 0.0
        %996 = vst.msk [vmem:[#allocation3 + $0x150] sm:$0xff] %vm905, 0.0
        %997 = vst.msk [vmem:[#allocation3 + $0x158] sm:$0xff] %vm905, 0.0
        %998 = vst.msk [vmem:[#allocation3 + $0x160] sm:$0xff] %vm905, 0.0
        %999 = vst.msk [vmem:[#allocation3 + $0x168] sm:$0xff] %vm905, 0.0
        %1000 = vst.msk [vmem:[#allocation3 + $0x170] sm:$0xff] %vm905, 0.0
        %1001 = vst.msk [vmem:[#allocation3 + $0x178] sm:$0xff] %vm905, 0.0
      $region48: #{fused_forward.1} parent=43 // pred_fallthru
        _
      // Predicated region
      $region49: #{fused_forward.1} parent=43 // pred_check
        %p1002 = pneg %p900
      $region50: #{fused_forward.1} parent=43 // pred_check_branch
        %1004 = sbr.rel (%p1002) target = $region52
      $region51: #{fused_forward.1} parent=43 // pred_region
        %v1005 = vld [vmem:[#allocation2] sm:$0xff]
        %v1006 = vld [vmem:[#allocation2 + $0x8] sm:$0xff]
        %v1007 = vld [vmem:[#allocation2 + $0x10] sm:$0xff]
        %v1008 = vld [vmem:[#allocation2 + $0x18] sm:$0xff]
        %v1009 = vld [vmem:[#allocation2 + $0x20] sm:$0xff]
        %v1010 = vld [vmem:[#allocation2 + $0x28] sm:$0xff]
        %v1011 = vld [vmem:[#allocation2 + $0x30] sm:$0xff]
        %v1012 = vld [vmem:[#allocation2 + $0x38] sm:$0xff]
        %v1013 = vld [vmem:[#allocation2 + $0x40] sm:$0xff]
        %v1014 = vld [vmem:[#allocation2 + $0x48] sm:$0xff]
        %v1015 = vld [vmem:[#allocation2 + $0x50] sm:$0xff]
        %v1016 = vld [vmem:[#allocation2 + $0x58] sm:$0xff]
        %v1017 = vld [vmem:[#allocation2 + $0x60] sm:$0xff]
        %v1018 = vld [vmem:[#allocation2 + $0x68] sm:$0xff]
        %v1019 = vld [vmem:[#allocation2 + $0x70] sm:$0xff]
        %v1020 = vld [vmem:[#allocation2 + $0x78] sm:$0xff]
        %v1021 = vld [vmem:[#allocation2 + $0x80] sm:$0xff]
        %v1022 = vld [vmem:[#allocation2 + $0x88] sm:$0xff]
        %v1023 = vld [vmem:[#allocation2 + $0x90] sm:$0xff]
        %v1024 = vld [vmem:[#allocation2 + $0x98] sm:$0xff]
        %v1025 = vld [vmem:[#allocation2 + $0xa0] sm:$0xff]
        %v1026 = vld [vmem:[#allocation2 + $0xa8] sm:$0xff]
        %v1027 = vld [vmem:[#allocation2 + $0xb0] sm:$0xff]
        %v1028 = vld [vmem:[#allocation2 + $0xb8] sm:$0xff]
        %v1029 = vld [vmem:[#allocation2 + $0xc0] sm:$0xff]
        %v1030 = vld [vmem:[#allocation2 + $0xc8] sm:$0xff]
        %v1031 = vld [vmem:[#allocation2 + $0xd0] sm:$0xff]
        %v1032 = vld [vmem:[#allocation2 + $0xd8] sm:$0xff]
        %v1033 = vld [vmem:[#allocation2 + $0xe0] sm:$0xff]
        %v1034 = vld [vmem:[#allocation2 + $0xe8] sm:$0xff]
        %v1035 = vld [vmem:[#allocation2 + $0xf0] sm:$0xff]
        %v1036 = vld [vmem:[#allocation2 + $0xf8] sm:$0xff]
        %v1037 = vld [vmem:[#allocation2 + $0x100] sm:$0xff]
        %v1038 = vld [vmem:[#allocation2 + $0x108] sm:$0xff]
        %v1039 = vld [vmem:[#allocation2 + $0x110] sm:$0xff]
        %v1040 = vld [vmem:[#allocation2 + $0x118] sm:$0xff]
        %v1041 = vld [vmem:[#allocation2 + $0x120] sm:$0xff]
        %v1042 = vld [vmem:[#allocation2 + $0x128] sm:$0xff]
        %v1043 = vld [vmem:[#allocation2 + $0x130] sm:$0xff]
        %v1044 = vld [vmem:[#allocation2 + $0x138] sm:$0xff]
        %v1045 = vld [vmem:[#allocation2 + $0x140] sm:$0xff]
        %v1046 = vld [vmem:[#allocation2 + $0x148] sm:$0xff]
        %v1047 = vld [vmem:[#allocation2 + $0x150] sm:$0xff]
        %v1048 = vld [vmem:[#allocation2 + $0x158] sm:$0xff]
        %v1049 = vld [vmem:[#allocation2 + $0x160] sm:$0xff]
        %v1050 = vld [vmem:[#allocation2 + $0x168] sm:$0xff]
        %v1051 = vld [vmem:[#allocation2 + $0x170] sm:$0xff]
        %v1052 = vld [vmem:[#allocation2 + $0x178] sm:$0xff]
        %v1053 = vadd.f32 %v662, %v664
        %1054 = vadd.xlane.f32.xlu0 %v1053
        %v1055 = vpop.xlane.xlu0 %1054
        %v1056 = vadd.f32 %v666, %v668
        %1057 = vadd.xlane.f32.xlu0 %v1056
        %v1058 = vpop.xlane.xlu0 %1057
        %v1059 = vadd.f32 %v672, %v674
        %1060 = vadd.xlane.f32.xlu0 %v1059
        %v1061 = vpop.xlane.xlu0 %1060
        %v1062 = vadd.f32 %v676, %v678
        %1063 = vadd.xlane.f32.xlu0 %v1062
        %v1064 = vpop.xlane.xlu0 %1063
        %v1065 = vadd.f32 %v682, %v684
        %1066 = vadd.xlane.f32.xlu0 %v1065
        %v1067 = vpop.xlane.xlu0 %1066
        %v1068 = vadd.f32 %v686, %v688
        %1069 = vadd.xlane.f32.xlu0 %v1068
        %v1070 = vpop.xlane.xlu0 %1069
        %v1071 = vadd.f32 %v692, %v694
        %1072 = vadd.xlane.f32.xlu0 %v1071
        %v1073 = vpop.xlane.xlu0 %1072
        %v1074 = vadd.f32 %v696, %v698
        %1075 = vadd.xlane.f32.xlu0 %v1074
        %v1076 = vpop.xlane.xlu0 %1075
        %v1077 = vadd.f32 %v702, %v704
        %1078 = vadd.xlane.f32.xlu0 %v1077
        %v1079 = vpop.xlane.xlu0 %1078
        %v1080 = vadd.f32 %v706, %v708
        %1081 = vadd.xlane.f32.xlu0 %v1080
        %v1082 = vpop.xlane.xlu0 %1081
        %v1083 = vadd.f32 %v712, %v714
        %1084 = vadd.xlane.f32.xlu0 %v1083
        %v1085 = vpop.xlane.xlu0 %1084
        %v1086 = vadd.f32 %v716, %v718
        %1087 = vadd.xlane.f32.xlu0 %v1086
        %v1088 = vpop.xlane.xlu0 %1087
        %v1089 = vadd.f32 %v722, %v724
        %1090 = vadd.xlane.f32.xlu0 %v1089
        %v1091 = vpop.xlane.xlu0 %1090
        %v1092 = vadd.f32 %v726, %v728
        %1093 = vadd.xlane.f32.xlu0 %v1092
        %v1094 = vpop.xlane.xlu0 %1093
        %v1095 = vadd.f32 %v732, %v734
        %1096 = vadd.xlane.f32.xlu0 %v1095
        %v1097 = vpop.xlane.xlu0 %1096
        %v1098 = vadd.f32 %v736, %v738
        %1099 = vadd.xlane.f32.xlu0 %v1098
        %v1100 = vpop.xlane.xlu0 %1099
        %v1101 = vadd.f32 %v742, %v744
        %1102 = vadd.xlane.f32.xlu0 %v1101
        %v1103 = vpop.xlane.xlu0 %1102
        %v1104 = vadd.f32 %v746, %v748
        %1105 = vadd.xlane.f32.xlu0 %v1104
        %v1106 = vpop.xlane.xlu0 %1105
        %v1107 = vadd.f32 %v752, %v754
        %1108 = vadd.xlane.f32.xlu0 %v1107
        %v1109 = vpop.xlane.xlu0 %1108
        %v1110 = vadd.f32 %v756, %v758
        %1111 = vadd.xlane.f32.xlu0 %v1110
        %v1112 = vpop.xlane.xlu0 %1111
        %v1113 = vadd.f32 %v762, %v764
        %1114 = vadd.xlane.f32.xlu0 %v1113
        %v1115 = vpop.xlane.xlu0 %1114
        %v1116 = vadd.f32 %v766, %v768
        %1117 = vadd.xlane.f32.xlu0 %v1116
        %v1118 = vpop.xlane.xlu0 %1117
        %v1119 = vadd.f32 %v772, %v774
        %1120 = vadd.xlane.f32.xlu0 %v1119
        %v1121 = vpop.xlane.xlu0 %1120
        %v1122 = vadd.f32 %v776, %v778
        %1123 = vadd.xlane.f32.xlu0 %v1122
        %v1124 = vpop.xlane.xlu0 %1123
        %v1125 = vadd.f32 %v782, %v784
        %1126 = vadd.xlane.f32.xlu0 %v1125
        %v1127 = vpop.xlane.xlu0 %1126
        %v1128 = vadd.f32 %v786, %v788
        %1129 = vadd.xlane.f32.xlu0 %v1128
        %v1130 = vpop.xlane.xlu0 %1129
        %v1131 = vadd.f32 %v792, %v794
        %1132 = vadd.xlane.f32.xlu0 %v1131
        %v1133 = vpop.xlane.xlu0 %1132
        %v1134 = vadd.f32 %v796, %v798
        %1135 = vadd.xlane.f32.xlu0 %v1134
        %v1136 = vpop.xlane.xlu0 %1135
        %v1137 = vadd.f32 %v802, %v804
        %1138 = vadd.xlane.f32.xlu0 %v1137
        %v1139 = vpop.xlane.xlu0 %1138
        %v1140 = vadd.f32 %v806, %v808
        %1141 = vadd.xlane.f32.xlu0 %v1140
        %v1142 = vpop.xlane.xlu0 %1141
        %v1143 = vadd.f32 %v812, %v814
        %1144 = vadd.xlane.f32.xlu0 %v1143
        %v1145 = vpop.xlane.xlu0 %1144
        %v1146 = vadd.f32 %v816, %v818
        %1147 = vadd.xlane.f32.xlu0 %v1146
        %v1148 = vpop.xlane.xlu0 %1147
        %v1149 = vadd.f32 %v822, %v824
        %1150 = vadd.xlane.f32.xlu0 %v1149
        %v1151 = vpop.xlane.xlu0 %1150
        %v1152 = vadd.f32 %v826, %v828
        %1153 = vadd.xlane.f32.xlu0 %v1152
        %v1154 = vpop.xlane.xlu0 %1153
        %v1155 = vadd.f32 %v832, %v834
        %1156 = vadd.xlane.f32.xlu0 %v1155
        %v1157 = vpop.xlane.xlu0 %1156
        %v1158 = vadd.f32 %v836, %v838
        %1159 = vadd.xlane.f32.xlu0 %v1158
        %v1160 = vpop.xlane.xlu0 %1159
        %v1161 = vadd.f32 %v842, %v844
        %1162 = vadd.xlane.f32.xlu0 %v1161
        %v1163 = vpop.xlane.xlu0 %1162
        %v1164 = vadd.f32 %v846, %v848
        %1165 = vadd.xlane.f32.xlu0 %v1164
        %v1166 = vpop.xlane.xlu0 %1165
        %v1167 = vadd.f32 %v852, %v854
        %1168 = vadd.xlane.f32.xlu0 %v1167
        %v1169 = vpop.xlane.xlu0 %1168
        %v1170 = vadd.f32 %v856, %v858
        %1171 = vadd.xlane.f32.xlu0 %v1170
        %v1172 = vpop.xlane.xlu0 %1171
        %v1173 = vadd.f32 %v862, %v864
        %1174 = vadd.xlane.f32.xlu0 %v1173
        %v1175 = vpop.xlane.xlu0 %1174
        %v1176 = vadd.f32 %v866, %v868
        %1177 = vadd.xlane.f32.xlu0 %v1176
        %v1178 = vpop.xlane.xlu0 %1177
        %v1179 = vadd.f32 %v872, %v874
        %1180 = vadd.xlane.f32.xlu0 %v1179
        %v1181 = vpop.xlane.xlu0 %1180
        %v1182 = vadd.f32 %v876, %v878
        %1183 = vadd.xlane.f32.xlu0 %v1182
        %v1184 = vpop.xlane.xlu0 %1183
        %v1185 = vadd.f32 %v882, %v884
        %1186 = vadd.xlane.f32.xlu0 %v1185
        %v1187 = vpop.xlane.xlu0 %1186
        %v1188 = vadd.f32 %v886, %v888
        %1189 = vadd.xlane.f32.xlu0 %v1188
        %v1190 = vpop.xlane.xlu0 %1189
        %v1191 = vadd.f32 %v892, %v894
        %1192 = vadd.xlane.f32.xlu0 %v1191
        %v1193 = vpop.xlane.xlu0 %1192
        %v1194 = vadd.f32 %v896, %v898
        %1195 = vadd.xlane.f32.xlu0 %v1194
        %v1196 = vpop.xlane.xlu0 %1195
        %v1197 = vadd.f32 %v1005, %v1055
        %v1198 = vadd.f32 %v1006, %v1058
        %v1199 = vadd.f32 %v1007, %v1061
        %v1200 = vadd.f32 %v1008, %v1064
        %v1201 = vadd.f32 %v1009, %v1067
        %v1202 = vadd.f32 %v1010, %v1070
        %v1203 = vadd.f32 %v1011, %v1073
        %v1204 = vadd.f32 %v1012, %v1076
        %v1205 = vadd.f32 %v1013, %v1079
        %v1206 = vadd.f32 %v1014, %v1082
        %v1207 = vadd.f32 %v1015, %v1085
        %v1208 = vadd.f32 %v1016, %v1088
        %v1209 = vadd.f32 %v1017, %v1091
        %v1210 = vadd.f32 %v1018, %v1094
        %v1211 = vadd.f32 %v1019, %v1097
        %v1212 = vadd.f32 %v1020, %v1100
        %v1213 = vadd.f32 %v1021, %v1103
        %v1214 = vadd.f32 %v1022, %v1106
        %v1215 = vadd.f32 %v1023, %v1109
        %v1216 = vadd.f32 %v1024, %v1112
        %v1217 = vadd.f32 %v1025, %v1115
        %v1218 = vadd.f32 %v1026, %v1118
        %v1219 = vadd.f32 %v1027, %v1121
        %v1220 = vadd.f32 %v1028, %v1124
        %v1221 = vadd.f32 %v1029, %v1127
        %v1222 = vadd.f32 %v1030, %v1130
        %v1223 = vadd.f32 %v1031, %v1133
        %v1224 = vadd.f32 %v1032, %v1136
        %v1225 = vadd.f32 %v1033, %v1139
        %v1226 = vadd.f32 %v1034, %v1142
        %v1227 = vadd.f32 %v1035, %v1145
        %v1228 = vadd.f32 %v1036, %v1148
        %v1229 = vadd.f32 %v1037, %v1151
        %v1230 = vadd.f32 %v1038, %v1154
        %v1231 = vadd.f32 %v1039, %v1157
        %v1232 = vadd.f32 %v1040, %v1160
        %v1233 = vadd.f32 %v1041, %v1163
        %v1234 = vadd.f32 %v1042, %v1166
        %v1235 = vadd.f32 %v1043, %v1169
        %v1236 = vadd.f32 %v1044, %v1172
        %v1237 = vadd.f32 %v1045, %v1175
        %v1238 = vadd.f32 %v1046, %v1178
        %v1239 = vadd.f32 %v1047, %v1181
        %v1240 = vadd.f32 %v1048, %v1184
        %v1241 = vadd.f32 %v1049, %v1187
        %v1242 = vadd.f32 %v1050, %v1190
        %v1243 = vadd.f32 %v1051, %v1193
        %v1244 = vadd.f32 %v1052, %v1196
        %vm1245 = vcmask 7168
        %1246 = vst.msk [vmem:[#allocation2] sm:$0xff] %vm1245, %v1197
        %1247 = vst.msk [vmem:[#allocation2 + $0x8] sm:$0xff] %vm1245, %v1198
        %1248 = vst.msk [vmem:[#allocation2 + $0x10] sm:$0xff] %vm1245, %v1199
        %1249 = vst.msk [vmem:[#allocation2 + $0x18] sm:$0xff] %vm1245, %v1200
        %1250 = vst.msk [vmem:[#allocation2 + $0x20] sm:$0xff] %vm1245, %v1201
        %1251 = vst.msk [vmem:[#allocation2 + $0x28] sm:$0xff] %vm1245, %v1202
        %1252 = vst.msk [vmem:[#allocation2 + $0x30] sm:$0xff] %vm1245, %v1203
        %1253 = vst.msk [vmem:[#allocation2 + $0x38] sm:$0xff] %vm1245, %v1204
        %1254 = vst.msk [vmem:[#allocation2 + $0x40] sm:$0xff] %vm1245, %v1205
        %1255 = vst.msk [vmem:[#allocation2 + $0x48] sm:$0xff] %vm1245, %v1206
        %1256 = vst.msk [vmem:[#allocation2 + $0x50] sm:$0xff] %vm1245, %v1207
        %1257 = vst.msk [vmem:[#allocation2 + $0x58] sm:$0xff] %vm1245, %v1208
        %1258 = vst.msk [vmem:[#allocation2 + $0x60] sm:$0xff] %vm1245, %v1209
        %1259 = vst.msk [vmem:[#allocation2 + $0x68] sm:$0xff] %vm1245, %v1210
        %1260 = vst.msk [vmem:[#allocation2 + $0x70] sm:$0xff] %vm1245, %v1211
        %1261 = vst.msk [vmem:[#allocation2 + $0x78] sm:$0xff] %vm1245, %v1212
        %1262 = vst.msk [vmem:[#allocation2 + $0x80] sm:$0xff] %vm1245, %v1213
        %1263 = vst.msk [vmem:[#allocation2 + $0x88] sm:$0xff] %vm1245, %v1214
        %1264 = vst.msk [vmem:[#allocation2 + $0x90] sm:$0xff] %vm1245, %v1215
        %1265 = vst.msk [vmem:[#allocation2 + $0x98] sm:$0xff] %vm1245, %v1216
        %1266 = vst.msk [vmem:[#allocation2 + $0xa0] sm:$0xff] %vm1245, %v1217
        %1267 = vst.msk [vmem:[#allocation2 + $0xa8] sm:$0xff] %vm1245, %v1218
        %1268 = vst.msk [vmem:[#allocation2 + $0xb0] sm:$0xff] %vm1245, %v1219
        %1269 = vst.msk [vmem:[#allocation2 + $0xb8] sm:$0xff] %vm1245, %v1220
        %1270 = vst.msk [vmem:[#allocation2 + $0xc0] sm:$0xff] %vm1245, %v1221
        %1271 = vst.msk [vmem:[#allocation2 + $0xc8] sm:$0xff] %vm1245, %v1222
        %1272 = vst.msk [vmem:[#allocation2 + $0xd0] sm:$0xff] %vm1245, %v1223
        %1273 = vst.msk [vmem:[#allocation2 + $0xd8] sm:$0xff] %vm1245, %v1224
        %1274 = vst.msk [vmem:[#allocation2 + $0xe0] sm:$0xff] %vm1245, %v1225
        %1275 = vst.msk [vmem:[#allocation2 + $0xe8] sm:$0xff] %vm1245, %v1226
        %1276 = vst.msk [vmem:[#allocation2 + $0xf0] sm:$0xff] %vm1245, %v1227
        %1277 = vst.msk [vmem:[#allocation2 + $0xf8] sm:$0xff] %vm1245, %v1228
        %1278 = vst.msk [vmem:[#allocation2 + $0x100] sm:$0xff] %vm1245, %v1229
        %1279 = vst.msk [vmem:[#allocation2 + $0x108] sm:$0xff] %vm1245, %v1230
        %1280 = vst.msk [vmem:[#allocation2 + $0x110] sm:$0xff] %vm1245, %v1231
        %1281 = vst.msk [vmem:[#allocation2 + $0x118] sm:$0xff] %vm1245, %v1232
        %1282 = vst.msk [vmem:[#allocation2 + $0x120] sm:$0xff] %vm1245, %v1233
        %1283 = vst.msk [vmem:[#allocation2 + $0x128] sm:$0xff] %vm1245, %v1234
        %1284 = vst.msk [vmem:[#allocation2 + $0x130] sm:$0xff] %vm1245, %v1235
        %1285 = vst.msk [vmem:[#allocation2 + $0x138] sm:$0xff] %vm1245, %v1236
        %1286 = vst.msk [vmem:[#allocation2 + $0x140] sm:$0xff] %vm1245, %v1237
        %1287 = vst.msk [vmem:[#allocation2 + $0x148] sm:$0xff] %vm1245, %v1238
        %1288 = vst.msk [vmem:[#allocation2 + $0x150] sm:$0xff] %vm1245, %v1239
        %1289 = vst.msk [vmem:[#allocation2 + $0x158] sm:$0xff] %vm1245, %v1240
        %1290 = vst.msk [vmem:[#allocation2 + $0x160] sm:$0xff] %vm1245, %v1241
        %1291 = vst.msk [vmem:[#allocation2 + $0x168] sm:$0xff] %vm1245, %v1242
        %1292 = vst.msk [vmem:[#allocation2 + $0x170] sm:$0xff] %vm1245, %v1243
        %1293 = vst.msk [vmem:[#allocation2 + $0x178] sm:$0xff] %vm1245, %v1244
        %v1294 = vld [vmem:[#allocation3] sm:$0xff]
        %v1295 = vld [vmem:[#allocation3 + $0x8] sm:$0xff]
        %v1296 = vld [vmem:[#allocation3 + $0x10] sm:$0xff]
        %v1297 = vld [vmem:[#allocation3 + $0x18] sm:$0xff]
        %v1298 = vld [vmem:[#allocation3 + $0x20] sm:$0xff]
        %v1299 = vld [vmem:[#allocation3 + $0x28] sm:$0xff]
        %v1300 = vld [vmem:[#allocation3 + $0x30] sm:$0xff]
        %v1301 = vld [vmem:[#allocation3 + $0x38] sm:$0xff]
        %v1302 = vld [vmem:[#allocation3 + $0x40] sm:$0xff]
        %v1303 = vld [vmem:[#allocation3 + $0x48] sm:$0xff]
        %v1304 = vld [vmem:[#allocation3 + $0x50] sm:$0xff]
        %v1305 = vld [vmem:[#allocation3 + $0x58] sm:$0xff]
        %v1306 = vld [vmem:[#allocation3 + $0x60] sm:$0xff]
        %v1307 = vld [vmem:[#allocation3 + $0x68] sm:$0xff]
        %v1308 = vld [vmem:[#allocation3 + $0x70] sm:$0xff]
        %v1309 = vld [vmem:[#allocation3 + $0x78] sm:$0xff]
        %v1310 = vld [vmem:[#allocation3 + $0x80] sm:$0xff]
        %v1311 = vld [vmem:[#allocation3 + $0x88] sm:$0xff]
        %v1312 = vld [vmem:[#allocation3 + $0x90] sm:$0xff]
        %v1313 = vld [vmem:[#allocation3 + $0x98] sm:$0xff]
        %v1314 = vld [vmem:[#allocation3 + $0xa0] sm:$0xff]
        %v1315 = vld [vmem:[#allocation3 + $0xa8] sm:$0xff]
        %v1316 = vld [vmem:[#allocation3 + $0xb0] sm:$0xff]
        %v1317 = vld [vmem:[#allocation3 + $0xb8] sm:$0xff]
        %v1318 = vld [vmem:[#allocation3 + $0xc0] sm:$0xff]
        %v1319 = vld [vmem:[#allocation3 + $0xc8] sm:$0xff]
        %v1320 = vld [vmem:[#allocation3 + $0xd0] sm:$0xff]
        %v1321 = vld [vmem:[#allocation3 + $0xd8] sm:$0xff]
        %v1322 = vld [vmem:[#allocation3 + $0xe0] sm:$0xff]
        %v1323 = vld [vmem:[#allocation3 + $0xe8] sm:$0xff]
        %v1324 = vld [vmem:[#allocation3 + $0xf0] sm:$0xff]
        %v1325 = vld [vmem:[#allocation3 + $0xf8] sm:$0xff]
        %v1326 = vld [vmem:[#allocation3 + $0x100] sm:$0xff]
        %v1327 = vld [vmem:[#allocation3 + $0x108] sm:$0xff]
        %v1328 = vld [vmem:[#allocation3 + $0x110] sm:$0xff]
        %v1329 = vld [vmem:[#allocation3 + $0x118] sm:$0xff]
        %v1330 = vld [vmem:[#allocation3 + $0x120] sm:$0xff]
        %v1331 = vld [vmem:[#allocation3 + $0x128] sm:$0xff]
        %v1332 = vld [vmem:[#allocation3 + $0x130] sm:$0xff]
        %v1333 = vld [vmem:[#allocation3 + $0x138] sm:$0xff]
        %v1334 = vld [vmem:[#allocation3 + $0x140] sm:$0xff]
        %v1335 = vld [vmem:[#allocation3 + $0x148] sm:$0xff]
        %v1336 = vld [vmem:[#allocation3 + $0x150] sm:$0xff]
        %v1337 = vld [vmem:[#allocation3 + $0x158] sm:$0xff]
        %v1338 = vld [vmem:[#allocation3 + $0x160] sm:$0xff]
        %v1339 = vld [vmem:[#allocation3 + $0x168] sm:$0xff]
        %v1340 = vld [vmem:[#allocation3 + $0x170] sm:$0xff]
        %v1341 = vld [vmem:[#allocation3 + $0x178] sm:$0xff]
        %v1342 = vmul.f32 %v662, %v662
        %v1343 = vmul.f32 %v664, %v664
        %v1344 = vmul.f32 %v666, %v666
        %v1345 = vmul.f32 %v668, %v668
        %v1346 = vmul.f32 %v672, %v672
        %v1347 = vmul.f32 %v674, %v674
        %v1348 = vmul.f32 %v676, %v676
        %v1349 = vmul.f32 %v678, %v678
        %v1350 = vmul.f32 %v682, %v682
        %v1351 = vmul.f32 %v684, %v684
        %v1352 = vmul.f32 %v686, %v686
        %v1353 = vmul.f32 %v688, %v688
        %v1354 = vmul.f32 %v692, %v692
        %v1355 = vmul.f32 %v694, %v694
        %v1356 = vmul.f32 %v696, %v696
        %v1357 = vmul.f32 %v698, %v698
        %v1358 = vmul.f32 %v702, %v702
        %v1359 = vmul.f32 %v704, %v704
        %v1360 = vmul.f32 %v706, %v706
        %v1361 = vmul.f32 %v708, %v708
        %v1362 = vmul.f32 %v712, %v712
        %v1363 = vmul.f32 %v714, %v714
        %v1364 = vmul.f32 %v716, %v716
        %v1365 = vmul.f32 %v718, %v718
        %v1366 = vmul.f32 %v722, %v722
        %v1367 = vmul.f32 %v724, %v724
        %v1368 = vmul.f32 %v726, %v726
        %v1369 = vmul.f32 %v728, %v728
        %v1370 = vmul.f32 %v732, %v732
        %v1371 = vmul.f32 %v734, %v734
        %v1372 = vmul.f32 %v736, %v736
        %v1373 = vmul.f32 %v738, %v738
        %v1374 = vmul.f32 %v742, %v742
        %v1375 = vmul.f32 %v744, %v744
        %v1376 = vmul.f32 %v746, %v746
        %v1377 = vmul.f32 %v748, %v748
        %v1378 = vmul.f32 %v752, %v752
        %v1379 = vmul.f32 %v754, %v754
        %v1380 = vmul.f32 %v756, %v756
        %v1381 = vmul.f32 %v758, %v758
        %v1382 = vmul.f32 %v762, %v762
        %v1383 = vmul.f32 %v764, %v764
        %v1384 = vmul.f32 %v766, %v766
        %v1385 = vmul.f32 %v768, %v768
        %v1386 = vmul.f32 %v772, %v772
        %v1387 = vmul.f32 %v774, %v774
        %v1388 = vmul.f32 %v776, %v776
        %v1389 = vmul.f32 %v778, %v778
        %v1390 = vmul.f32 %v782, %v782
        %v1391 = vmul.f32 %v784, %v784
        %v1392 = vmul.f32 %v786, %v786
        %v1393 = vmul.f32 %v788, %v788
        %v1394 = vmul.f32 %v792, %v792
        %v1395 = vmul.f32 %v794, %v794
        %v1396 = vmul.f32 %v796, %v796
        %v1397 = vmul.f32 %v798, %v798
        %v1398 = vmul.f32 %v802, %v802
        %v1399 = vmul.f32 %v804, %v804
        %v1400 = vmul.f32 %v806, %v806
        %v1401 = vmul.f32 %v808, %v808
        %v1402 = vmul.f32 %v812, %v812
        %v1403 = vmul.f32 %v814, %v814
        %v1404 = vmul.f32 %v816, %v816
        %v1405 = vmul.f32 %v818, %v818
        %v1406 = vmul.f32 %v822, %v822
        %v1407 = vmul.f32 %v824, %v824
        %v1408 = vmul.f32 %v826, %v826
        %v1409 = vmul.f32 %v828, %v828
        %v1410 = vmul.f32 %v832, %v832
        %v1411 = vmul.f32 %v834, %v834
        %v1412 = vmul.f32 %v836, %v836
        %v1413 = vmul.f32 %v838, %v838
        %v1414 = vmul.f32 %v842, %v842
        %v1415 = vmul.f32 %v844, %v844
        %v1416 = vmul.f32 %v846, %v846
        %v1417 = vmul.f32 %v848, %v848
        %v1418 = vmul.f32 %v852, %v852
        %v1419 = vmul.f32 %v854, %v854
        %v1420 = vmul.f32 %v856, %v856
        %v1421 = vmul.f32 %v858, %v858
        %v1422 = vmul.f32 %v862, %v862
        %v1423 = vmul.f32 %v864, %v864
        %v1424 = vmul.f32 %v866, %v866
        %v1425 = vmul.f32 %v868, %v868
        %v1426 = vmul.f32 %v872, %v872
        %v1427 = vmul.f32 %v874, %v874
        %v1428 = vmul.f32 %v876, %v876
        %v1429 = vmul.f32 %v878, %v878
        %v1430 = vmul.f32 %v882, %v882
        %v1431 = vmul.f32 %v884, %v884
        %v1432 = vmul.f32 %v886, %v886
        %v1433 = vmul.f32 %v888, %v888
        %v1434 = vmul.f32 %v892, %v892
        %v1435 = vmul.f32 %v894, %v894
        %v1436 = vmul.f32 %v896, %v896
        %v1437 = vmul.f32 %v898, %v898
        %v1438 = vadd.f32 %v1342, %v1343
        %1439 = vadd.xlane.f32.xlu0 %v1438
        %v1440 = vpop.xlane.xlu0 %1439
        %v1441 = vadd.f32 %v1344, %v1345
        %1442 = vadd.xlane.f32.xlu0 %v1441
        %v1443 = vpop.xlane.xlu0 %1442
        %v1444 = vadd.f32 %v1346, %v1347
        %1445 = vadd.xlane.f32.xlu0 %v1444
        %v1446 = vpop.xlane.xlu0 %1445
        %v1447 = vadd.f32 %v1348, %v1349
        %1448 = vadd.xlane.f32.xlu0 %v1447
        %v1449 = vpop.xlane.xlu0 %1448
        %v1450 = vadd.f32 %v1350, %v1351
        %1451 = vadd.xlane.f32.xlu0 %v1450
        %v1452 = vpop.xlane.xlu0 %1451
        %v1453 = vadd.f32 %v1352, %v1353
        %1454 = vadd.xlane.f32.xlu0 %v1453
        %v1455 = vpop.xlane.xlu0 %1454
        %v1456 = vadd.f32 %v1354, %v1355
        %1457 = vadd.xlane.f32.xlu0 %v1456
        %v1458 = vpop.xlane.xlu0 %1457
        %v1459 = vadd.f32 %v1356, %v1357
        %1460 = vadd.xlane.f32.xlu0 %v1459
        %v1461 = vpop.xlane.xlu0 %1460
        %v1462 = vadd.f32 %v1358, %v1359
        %1463 = vadd.xlane.f32.xlu0 %v1462
        %v1464 = vpop.xlane.xlu0 %1463
        %v1465 = vadd.f32 %v1360, %v1361
        %1466 = vadd.xlane.f32.xlu0 %v1465
        %v1467 = vpop.xlane.xlu0 %1466
        %v1468 = vadd.f32 %v1362, %v1363
        %1469 = vadd.xlane.f32.xlu0 %v1468
        %v1470 = vpop.xlane.xlu0 %1469
        %v1471 = vadd.f32 %v1364, %v1365
        %1472 = vadd.xlane.f32.xlu0 %v1471
        %v1473 = vpop.xlane.xlu0 %1472
        %v1474 = vadd.f32 %v1366, %v1367
        %1475 = vadd.xlane.f32.xlu0 %v1474
        %v1476 = vpop.xlane.xlu0 %1475
        %v1477 = vadd.f32 %v1368, %v1369
        %1478 = vadd.xlane.f32.xlu0 %v1477
        %v1479 = vpop.xlane.xlu0 %1478
        %v1480 = vadd.f32 %v1370, %v1371
        %1481 = vadd.xlane.f32.xlu0 %v1480
        %v1482 = vpop.xlane.xlu0 %1481
        %v1483 = vadd.f32 %v1372, %v1373
        %1484 = vadd.xlane.f32.xlu0 %v1483
        %v1485 = vpop.xlane.xlu0 %1484
        %v1486 = vadd.f32 %v1374, %v1375
        %1487 = vadd.xlane.f32.xlu0 %v1486
        %v1488 = vpop.xlane.xlu0 %1487
        %v1489 = vadd.f32 %v1376, %v1377
        %1490 = vadd.xlane.f32.xlu0 %v1489
        %v1491 = vpop.xlane.xlu0 %1490
        %v1492 = vadd.f32 %v1378, %v1379
        %1493 = vadd.xlane.f32.xlu0 %v1492
        %v1494 = vpop.xlane.xlu0 %1493
        %v1495 = vadd.f32 %v1380, %v1381
        %1496 = vadd.xlane.f32.xlu0 %v1495
        %v1497 = vpop.xlane.xlu0 %1496
        %v1498 = vadd.f32 %v1382, %v1383
        %1499 = vadd.xlane.f32.xlu0 %v1498
        %v1500 = vpop.xlane.xlu0 %1499
        %v1501 = vadd.f32 %v1384, %v1385
        %1502 = vadd.xlane.f32.xlu0 %v1501
        %v1503 = vpop.xlane.xlu0 %1502
        %v1504 = vadd.f32 %v1386, %v1387
        %1505 = vadd.xlane.f32.xlu0 %v1504
        %v1506 = vpop.xlane.xlu0 %1505
        %v1507 = vadd.f32 %v1388, %v1389
        %1508 = vadd.xlane.f32.xlu0 %v1507
        %v1509 = vpop.xlane.xlu0 %1508
        %v1510 = vadd.f32 %v1390, %v1391
        %1511 = vadd.xlane.f32.xlu0 %v1510
        %v1512 = vpop.xlane.xlu0 %1511
        %v1513 = vadd.f32 %v1392, %v1393
        %1514 = vadd.xlane.f32.xlu0 %v1513
        %v1515 = vpop.xlane.xlu0 %1514
        %v1516 = vadd.f32 %v1394, %v1395
        %1517 = vadd.xlane.f32.xlu0 %v1516
        %v1518 = vpop.xlane.xlu0 %1517
        %v1519 = vadd.f32 %v1396, %v1397
        %1520 = vadd.xlane.f32.xlu0 %v1519
        %v1521 = vpop.xlane.xlu0 %1520
        %v1522 = vadd.f32 %v1398, %v1399
        %1523 = vadd.xlane.f32.xlu0 %v1522
        %v1524 = vpop.xlane.xlu0 %1523
        %v1525 = vadd.f32 %v1400, %v1401
        %1526 = vadd.xlane.f32.xlu0 %v1525
        %v1527 = vpop.xlane.xlu0 %1526
        %v1528 = vadd.f32 %v1402, %v1403
        %1529 = vadd.xlane.f32.xlu0 %v1528
        %v1530 = vpop.xlane.xlu0 %1529
        %v1531 = vadd.f32 %v1404, %v1405
        %1532 = vadd.xlane.f32.xlu0 %v1531
        %v1533 = vpop.xlane.xlu0 %1532
        %v1534 = vadd.f32 %v1406, %v1407
        %1535 = vadd.xlane.f32.xlu0 %v1534
        %v1536 = vpop.xlane.xlu0 %1535
        %v1537 = vadd.f32 %v1408, %v1409
        %1538 = vadd.xlane.f32.xlu0 %v1537
        %v1539 = vpop.xlane.xlu0 %1538
        %v1540 = vadd.f32 %v1410, %v1411
        %1541 = vadd.xlane.f32.xlu0 %v1540
        %v1542 = vpop.xlane.xlu0 %1541
        %v1543 = vadd.f32 %v1412, %v1413
        %1544 = vadd.xlane.f32.xlu0 %v1543
        %v1545 = vpop.xlane.xlu0 %1544
        %v1546 = vadd.f32 %v1414, %v1415
        %1547 = vadd.xlane.f32.xlu0 %v1546
        %v1548 = vpop.xlane.xlu0 %1547
        %v1549 = vadd.f32 %v1416, %v1417
        %1550 = vadd.xlane.f32.xlu0 %v1549
        %v1551 = vpop.xlane.xlu0 %1550
        %v1552 = vadd.f32 %v1418, %v1419
        %1553 = vadd.xlane.f32.xlu0 %v1552
        %v1554 = vpop.xlane.xlu0 %1553
        %v1555 = vadd.f32 %v1420, %v1421
        %1556 = vadd.xlane.f32.xlu0 %v1555
        %v1557 = vpop.xlane.xlu0 %1556
        %v1558 = vadd.f32 %v1422, %v1423
        %1559 = vadd.xlane.f32.xlu0 %v1558
        %v1560 = vpop.xlane.xlu0 %1559
        %v1561 = vadd.f32 %v1424, %v1425
        %1562 = vadd.xlane.f32.xlu0 %v1561
        %v1563 = vpop.xlane.xlu0 %1562
        %v1564 = vadd.f32 %v1426, %v1427
        %1565 = vadd.xlane.f32.xlu0 %v1564
        %v1566 = vpop.xlane.xlu0 %1565
        %v1567 = vadd.f32 %v1428, %v1429
        %1568 = vadd.xlane.f32.xlu0 %v1567
        %v1569 = vpop.xlane.xlu0 %1568
        %v1570 = vadd.f32 %v1430, %v1431
        %1571 = vadd.xlane.f32.xlu0 %v1570
        %v1572 = vpop.xlane.xlu0 %1571
        %v1573 = vadd.f32 %v1432, %v1433
        %1574 = vadd.xlane.f32.xlu0 %v1573
        %v1575 = vpop.xlane.xlu0 %1574
        %v1576 = vadd.f32 %v1434, %v1435
        %1577 = vadd.xlane.f32.xlu0 %v1576
        %v1578 = vpop.xlane.xlu0 %1577
        %v1579 = vadd.f32 %v1436, %v1437
        %1580 = vadd.xlane.f32.xlu0 %v1579
        %v1581 = vpop.xlane.xlu0 %1580
        %v1582 = vadd.f32 %v1294, %v1440
        %v1583 = vadd.f32 %v1295, %v1443
        %v1584 = vadd.f32 %v1296, %v1446
        %v1585 = vadd.f32 %v1297, %v1449
        %v1586 = vadd.f32 %v1298, %v1452
        %v1587 = vadd.f32 %v1299, %v1455
        %v1588 = vadd.f32 %v1300, %v1458
        %v1589 = vadd.f32 %v1301, %v1461
        %v1590 = vadd.f32 %v1302, %v1464
        %v1591 = vadd.f32 %v1303, %v1467
        %v1592 = vadd.f32 %v1304, %v1470
        %v1593 = vadd.f32 %v1305, %v1473
        %v1594 = vadd.f32 %v1306, %v1476
        %v1595 = vadd.f32 %v1307, %v1479
        %v1596 = vadd.f32 %v1308, %v1482
        %v1597 = vadd.f32 %v1309, %v1485
        %v1598 = vadd.f32 %v1310, %v1488
        %v1599 = vadd.f32 %v1311, %v1491
        %v1600 = vadd.f32 %v1312, %v1494
        %v1601 = vadd.f32 %v1313, %v1497
        %v1602 = vadd.f32 %v1314, %v1500
        %v1603 = vadd.f32 %v1315, %v1503
        %v1604 = vadd.f32 %v1316, %v1506
        %v1605 = vadd.f32 %v1317, %v1509
        %v1606 = vadd.f32 %v1318, %v1512
        %v1607 = vadd.f32 %v1319, %v1515
        %v1608 = vadd.f32 %v1320, %v1518
        %v1609 = vadd.f32 %v1321, %v1521
        %v1610 = vadd.f32 %v1322, %v1524
        %v1611 = vadd.f32 %v1323, %v1527
        %v1612 = vadd.f32 %v1324, %v1530
        %v1613 = vadd.f32 %v1325, %v1533
        %v1614 = vadd.f32 %v1326, %v1536
        %v1615 = vadd.f32 %v1327, %v1539
        %v1616 = vadd.f32 %v1328, %v1542
        %v1617 = vadd.f32 %v1329, %v1545
        %v1618 = vadd.f32 %v1330, %v1548
        %v1619 = vadd.f32 %v1331, %v1551
        %v1620 = vadd.f32 %v1332, %v1554
        %v1621 = vadd.f32 %v1333, %v1557
        %v1622 = vadd.f32 %v1334, %v1560
        %v1623 = vadd.f32 %v1335, %v1563
        %v1624 = vadd.f32 %v1336, %v1566
        %v1625 = vadd.f32 %v1337, %v1569
        %v1626 = vadd.f32 %v1338, %v1572
        %v1627 = vadd.f32 %v1339, %v1575
        %v1628 = vadd.f32 %v1340, %v1578
        %v1629 = vadd.f32 %v1341, %v1581
        %1630 = vst.msk [vmem:[#allocation3] sm:$0xff] %vm1245, %v1582
        %1631 = vst.msk [vmem:[#allocation3 + $0x8] sm:$0xff] %vm1245, %v1583
        %1632 = vst.msk [vmem:[#allocation3 + $0x10] sm:$0xff] %vm1245, %v1584
        %1633 = vst.msk [vmem:[#allocation3 + $0x18] sm:$0xff] %vm1245, %v1585
        %1634 = vst.msk [vmem:[#allocation3 + $0x20] sm:$0xff] %vm1245, %v1586
        %1635 = vst.msk [vmem:[#allocation3 + $0x28] sm:$0xff] %vm1245, %v1587
        %1636 = vst.msk [vmem:[#allocation3 + $0x30] sm:$0xff] %vm1245, %v1588
        %1637 = vst.msk [vmem:[#allocation3 + $0x38] sm:$0xff] %vm1245, %v1589
        %1638 = vst.msk [vmem:[#allocation3 + $0x40] sm:$0xff] %vm1245, %v1590
        %1639 = vst.msk [vmem:[#allocation3 + $0x48] sm:$0xff] %vm1245, %v1591
        %1640 = vst.msk [vmem:[#allocation3 + $0x50] sm:$0xff] %vm1245, %v1592
        %1641 = vst.msk [vmem:[#allocation3 + $0x58] sm:$0xff] %vm1245, %v1593
        %1642 = vst.msk [vmem:[#allocation3 + $0x60] sm:$0xff] %vm1245, %v1594
        %1643 = vst.msk [vmem:[#allocation3 + $0x68] sm:$0xff] %vm1245, %v1595
        %1644 = vst.msk [vmem:[#allocation3 + $0x70] sm:$0xff] %vm1245, %v1596
        %1645 = vst.msk [vmem:[#allocation3 + $0x78] sm:$0xff] %vm1245, %v1597
        %1646 = vst.msk [vmem:[#allocation3 + $0x80] sm:$0xff] %vm1245, %v1598
        %1647 = vst.msk [vmem:[#allocation3 + $0x88] sm:$0xff] %vm1245, %v1599
        %1648 = vst.msk [vmem:[#allocation3 + $0x90] sm:$0xff] %vm1245, %v1600
        %1649 = vst.msk [vmem:[#allocation3 + $0x98] sm:$0xff] %vm1245, %v1601
        %1650 = vst.msk [vmem:[#allocation3 + $0xa0] sm:$0xff] %vm1245, %v1602
        %1651 = vst.msk [vmem:[#allocation3 + $0xa8] sm:$0xff] %vm1245, %v1603
        %1652 = vst.msk [vmem:[#allocation3 + $0xb0] sm:$0xff] %vm1245, %v1604
        %1653 = vst.msk [vmem:[#allocation3 + $0xb8] sm:$0xff] %vm1245, %v1605
        %1654 = vst.msk [vmem:[#allocation3 + $0xc0] sm:$0xff] %vm1245, %v1606
        %1655 = vst.msk [vmem:[#allocation3 + $0xc8] sm:$0xff] %vm1245, %v1607
        %1656 = vst.msk [vmem:[#allocation3 + $0xd0] sm:$0xff] %vm1245, %v1608
        %1657 = vst.msk [vmem:[#allocation3 + $0xd8] sm:$0xff] %vm1245, %v1609
        %1658 = vst.msk [vmem:[#allocation3 + $0xe0] sm:$0xff] %vm1245, %v1610
        %1659 = vst.msk [vmem:[#allocation3 + $0xe8] sm:$0xff] %vm1245, %v1611
        %1660 = vst.msk [vmem:[#allocation3 + $0xf0] sm:$0xff] %vm1245, %v1612
        %1661 = vst.msk [vmem:[#allocation3 + $0xf8] sm:$0xff] %vm1245, %v1613
        %1662 = vst.msk [vmem:[#allocation3 + $0x100] sm:$0xff] %vm1245, %v1614
        %1663 = vst.msk [vmem:[#allocation3 + $0x108] sm:$0xff] %vm1245, %v1615
        %1664 = vst.msk [vmem:[#allocation3 + $0x110] sm:$0xff] %vm1245, %v1616
        %1665 = vst.msk [vmem:[#allocation3 + $0x118] sm:$0xff] %vm1245, %v1617
        %1666 = vst.msk [vmem:[#allocation3 + $0x120] sm:$0xff] %vm1245, %v1618
        %1667 = vst.msk [vmem:[#allocation3 + $0x128] sm:$0xff] %vm1245, %v1619
        %1668 = vst.msk [vmem:[#allocation3 + $0x130] sm:$0xff] %vm1245, %v1620
        %1669 = vst.msk [vmem:[#allocation3 + $0x138] sm:$0xff] %vm1245, %v1621
        %1670 = vst.msk [vmem:[#allocation3 + $0x140] sm:$0xff] %vm1245, %v1622
        %1671 = vst.msk [vmem:[#allocation3 + $0x148] sm:$0xff] %vm1245, %v1623
        %1672 = vst.msk [vmem:[#allocation3 + $0x150] sm:$0xff] %vm1245, %v1624
        %1673 = vst.msk [vmem:[#allocation3 + $0x158] sm:$0xff] %vm1245, %v1625
        %1674 = vst.msk [vmem:[#allocation3 + $0x160] sm:$0xff] %vm1245, %v1626
        %1675 = vst.msk [vmem:[#allocation3 + $0x168] sm:$0xff] %vm1245, %v1627
        %1676 = vst.msk [vmem:[#allocation3 + $0x170] sm:$0xff] %vm1245, %v1628
        %1677 = vst.msk [vmem:[#allocation3 + $0x178] sm:$0xff] %vm1245, %v1629
        %1678 = vst [vmem:[%s332] sm:$0xff] 0.0
        %1679 = vst [vmem:[%s332 + $0x8] sm:$0xff] 0.0
        %1680 = vst [vmem:[%s332 + $0x10] sm:$0xff] 0.0
        %1681 = vst [vmem:[%s332 + $0x18] sm:$0xff] 0.0
        %1682 = vst [vmem:[%s332 + $0x20] sm:$0xff] 0.0
        %1683 = vst [vmem:[%s332 + $0x28] sm:$0xff] 0.0
        %1684 = vst [vmem:[%s332 + $0x30] sm:$0xff] 0.0
        %1685 = vst [vmem:[%s332 + $0x38] sm:$0xff] 0.0
        %1686 = vst [vmem:[%s332 + $0x40] sm:$0xff] 0.0
        %1687 = vst [vmem:[%s332 + $0x48] sm:$0xff] 0.0
        %1688 = vst [vmem:[%s332 + $0x50] sm:$0xff] 0.0
        %1689 = vst [vmem:[%s332 + $0x58] sm:$0xff] 0.0
        %1690 = vst [vmem:[%s332 + $0x60] sm:$0xff] 0.0
        %1691 = vst [vmem:[%s332 + $0x68] sm:$0xff] 0.0
        %1692 = vst [vmem:[%s332 + $0x70] sm:$0xff] 0.0
        %1693 = vst [vmem:[%s332 + $0x78] sm:$0xff] 0.0
        %1694 = vst [vmem:[%s332 + $0x80] sm:$0xff] 0.0
        %1695 = vst [vmem:[%s332 + $0x88] sm:$0xff] 0.0
        %1696 = vst [vmem:[%s332 + $0x90] sm:$0xff] 0.0
        %1697 = vst [vmem:[%s332 + $0x98] sm:$0xff] 0.0
        %1698 = vst [vmem:[%s332 + $0xa0] sm:$0xff] 0.0
        %1699 = vst [vmem:[%s332 + $0xa8] sm:$0xff] 0.0
        %1700 = vst [vmem:[%s332 + $0xb0] sm:$0xff] 0.0
        %1701 = vst [vmem:[%s332 + $0xb8] sm:$0xff] 0.0
        %1702 = vst [vmem:[%s332 + $0xc0] sm:$0xff] 0.0
        %1703 = vst [vmem:[%s332 + $0xc8] sm:$0xff] 0.0
        %1704 = vst [vmem:[%s332 + $0xd0] sm:$0xff] 0.0
        %1705 = vst [vmem:[%s332 + $0xd8] sm:$0xff] 0.0
        %1706 = vst [vmem:[%s332 + $0xe0] sm:$0xff] 0.0
        %1707 = vst [vmem:[%s332 + $0xe8] sm:$0xff] 0.0
        %1708 = vst [vmem:[%s332 + $0xf0] sm:$0xff] 0.0
        %1709 = vst [vmem:[%s332 + $0xf8] sm:$0xff] 0.0
        %1710 = vst [vmem:[%s332 + $0x100] sm:$0xff] 0.0
        %1711 = vst [vmem:[%s332 + $0x108] sm:$0xff] 0.0
        %1712 = vst [vmem:[%s332 + $0x110] sm:$0xff] 0.0
        %1713 = vst [vmem:[%s332 + $0x118] sm:$0xff] 0.0
        %1714 = vst [vmem:[%s332 + $0x120] sm:$0xff] 0.0
        %1715 = vst [vmem:[%s332 + $0x128] sm:$0xff] 0.0
        %1716 = vst [vmem:[%s332 + $0x130] sm:$0xff] 0.0
        %1717 = vst [vmem:[%s332 + $0x138] sm:$0xff] 0.0
        %1718 = vst [vmem:[%s332 + $0x140] sm:$0xff] 0.0
        %1719 = vst [vmem:[%s332 + $0x148] sm:$0xff] 0.0
        %1720 = vst [vmem:[%s332 + $0x150] sm:$0xff] 0.0
        %1721 = vst [vmem:[%s332 + $0x158] sm:$0xff] 0.0
        %1722 = vst [vmem:[%s332 + $0x160] sm:$0xff] 0.0
        %1723 = vst [vmem:[%s332 + $0x168] sm:$0xff] 0.0
        %1724 = vst [vmem:[%s332 + $0x170] sm:$0xff] 0.0
        %1725 = vst [vmem:[%s332 + $0x178] sm:$0xff] 0.0
        %1726 = vst [vmem:[%s332 + $0x180] sm:$0xff] 0.0
        %1727 = vst [vmem:[%s332 + $0x188] sm:$0xff] 0.0
        %1728 = vst [vmem:[%s332 + $0x190] sm:$0xff] 0.0
        %1729 = vst [vmem:[%s332 + $0x198] sm:$0xff] 0.0
        %1730 = vst [vmem:[%s332 + $0x1a0] sm:$0xff] 0.0
        %1731 = vst [vmem:[%s332 + $0x1a8] sm:$0xff] 0.0
        %1732 = vst [vmem:[%s332 + $0x1b0] sm:$0xff] 0.0
        %1733 = vst [vmem:[%s332 + $0x1b8] sm:$0xff] 0.0
        %1734 = vst [vmem:[%s332 + $0x1c0] sm:$0xff] 0.0
        %1735 = vst [vmem:[%s332 + $0x1c8] sm:$0xff] 0.0
        %1736 = vst [vmem:[%s332 + $0x1d0] sm:$0xff] 0.0
        %1737 = vst [vmem:[%s332 + $0x1d8] sm:$0xff] 0.0
        %1738 = vst [vmem:[%s332 + $0x1e0] sm:$0xff] 0.0
        %1739 = vst [vmem:[%s332 + $0x1e8] sm:$0xff] 0.0
        %1740 = vst [vmem:[%s332 + $0x1f0] sm:$0xff] 0.0
        %1741 = vst [vmem:[%s332 + $0x1f8] sm:$0xff] 0.0
        %1742 = vst [vmem:[%s332 + $0x200] sm:$0xff] 0.0
        %1743 = vst [vmem:[%s332 + $0x208] sm:$0xff] 0.0
        %1744 = vst [vmem:[%s332 + $0x210] sm:$0xff] 0.0
        %1745 = vst [vmem:[%s332 + $0x218] sm:$0xff] 0.0
        %1746 = vst [vmem:[%s332 + $0x220] sm:$0xff] 0.0
        %1747 = vst [vmem:[%s332 + $0x228] sm:$0xff] 0.0
        %1748 = vst [vmem:[%s332 + $0x230] sm:$0xff] 0.0
        %1749 = vst [vmem:[%s332 + $0x238] sm:$0xff] 0.0
        %1750 = vst [vmem:[%s332 + $0x240] sm:$0xff] 0.0
        %1751 = vst [vmem:[%s332 + $0x248] sm:$0xff] 0.0
        %1752 = vst [vmem:[%s332 + $0x250] sm:$0xff] 0.0
        %1753 = vst [vmem:[%s332 + $0x258] sm:$0xff] 0.0
        %1754 = vst [vmem:[%s332 + $0x260] sm:$0xff] 0.0
        %1755 = vst [vmem:[%s332 + $0x268] sm:$0xff] 0.0
        %1756 = vst [vmem:[%s332 + $0x270] sm:$0xff] 0.0
        %1757 = vst [vmem:[%s332 + $0x278] sm:$0xff] 0.0
        %1758 = vst [vmem:[%s332 + $0x280] sm:$0xff] 0.0
        %1759 = vst [vmem:[%s332 + $0x288] sm:$0xff] 0.0
        %1760 = vst [vmem:[%s332 + $0x290] sm:$0xff] 0.0
        %1761 = vst [vmem:[%s332 + $0x298] sm:$0xff] 0.0
        %1762 = vst [vmem:[%s332 + $0x2a0] sm:$0xff] 0.0
        %1763 = vst [vmem:[%s332 + $0x2a8] sm:$0xff] 0.0
        %1764 = vst [vmem:[%s332 + $0x2b0] sm:$0xff] 0.0
        %1765 = vst [vmem:[%s332 + $0x2b8] sm:$0xff] 0.0
        %1766 = vst [vmem:[%s332 + $0x2c0] sm:$0xff] 0.0
        %1767 = vst [vmem:[%s332 + $0x2c8] sm:$0xff] 0.0
        %1768 = vst [vmem:[%s332 + $0x2d0] sm:$0xff] 0.0
        %1769 = vst [vmem:[%s332 + $0x2d8] sm:$0xff] 0.0
        %1770 = vst [vmem:[%s332 + $0x2e0] sm:$0xff] 0.0
        %1771 = vst [vmem:[%s332 + $0x2e8] sm:$0xff] 0.0
        %1772 = vst [vmem:[%s332 + $0x2f0] sm:$0xff] 0.0
        %1773 = vst [vmem:[%s332 + $0x2f8] sm:$0xff] 0.0
      $region52: #{fused_forward.1} parent=43 // pred_fallthru
        _
      %p1774 = scmp.eq.s32.totalorder %s22, 1
      // Predicated region
      $region53: #{fused_forward.1} parent=43 // pred_check
        %p1775 = pneg %p1774
      $region54: #{fused_forward.1} parent=43 // pred_check_branch
        %1777 = sbr.rel (%p1775) target = $region56
      $region55: #{fused_forward.1} parent=43 // pred_region
        %v1778 = vld [vmem:[#allocation2] sm:$0xff]
        %v1779 = vld [vmem:[#allocation2 + $0x8] sm:$0xff]
        %v1780 = vld [vmem:[#allocation2 + $0x10] sm:$0xff]
        %v1781 = vld [vmem:[#allocation2 + $0x18] sm:$0xff]
        %v1782 = vld [vmem:[#allocation2 + $0x20] sm:$0xff]
        %v1783 = vld [vmem:[#allocation2 + $0x28] sm:$0xff]
        %v1784 = vld [vmem:[#allocation2 + $0x30] sm:$0xff]
        %v1785 = vld [vmem:[#allocation2 + $0x38] sm:$0xff]
        %v1786 = vld [vmem:[#allocation2 + $0x40] sm:$0xff]
        %v1787 = vld [vmem:[#allocation2 + $0x48] sm:$0xff]
        %v1788 = vld [vmem:[#allocation2 + $0x50] sm:$0xff]
        %v1789 = vld [vmem:[#allocation2 + $0x58] sm:$0xff]
        %v1790 = vld [vmem:[#allocation2 + $0x60] sm:$0xff]
        %v1791 = vld [vmem:[#allocation2 + $0x68] sm:$0xff]
        %v1792 = vld [vmem:[#allocation2 + $0x70] sm:$0xff]
        %v1793 = vld [vmem:[#allocation2 + $0x78] sm:$0xff]
        %v1794 = vld [vmem:[#allocation2 + $0x80] sm:$0xff]
        %v1795 = vld [vmem:[#allocation2 + $0x88] sm:$0xff]
        %v1796 = vld [vmem:[#allocation2 + $0x90] sm:$0xff]
        %v1797 = vld [vmem:[#allocation2 + $0x98] sm:$0xff]
        %v1798 = vld [vmem:[#allocation2 + $0xa0] sm:$0xff]
        %v1799 = vld [vmem:[#allocation2 + $0xa8] sm:$0xff]
        %v1800 = vld [vmem:[#allocation2 + $0xb0] sm:$0xff]
        %v1801 = vld [vmem:[#allocation2 + $0xb8] sm:$0xff]
        %v1802 = vld [vmem:[#allocation2 + $0xc0] sm:$0xff]
        %v1803 = vld [vmem:[#allocation2 + $0xc8] sm:$0xff]
        %v1804 = vld [vmem:[#allocation2 + $0xd0] sm:$0xff]
        %v1805 = vld [vmem:[#allocation2 + $0xd8] sm:$0xff]
        %v1806 = vld [vmem:[#allocation2 + $0xe0] sm:$0xff]
        %v1807 = vld [vmem:[#allocation2 + $0xe8] sm:$0xff]
        %v1808 = vld [vmem:[#allocation2 + $0xf0] sm:$0xff]
        %v1809 = vld [vmem:[#allocation2 + $0xf8] sm:$0xff]
        %v1810 = vld [vmem:[#allocation2 + $0x100] sm:$0xff]
        %v1811 = vld [vmem:[#allocation2 + $0x108] sm:$0xff]
        %v1812 = vld [vmem:[#allocation2 + $0x110] sm:$0xff]
        %v1813 = vld [vmem:[#allocation2 + $0x118] sm:$0xff]
        %v1814 = vld [vmem:[#allocation2 + $0x120] sm:$0xff]
        %v1815 = vld [vmem:[#allocation2 + $0x128] sm:$0xff]
        %v1816 = vld [vmem:[#allocation2 + $0x130] sm:$0xff]
        %v1817 = vld [vmem:[#allocation2 + $0x138] sm:$0xff]
        %v1818 = vld [vmem:[#allocation2 + $0x140] sm:$0xff]
        %v1819 = vld [vmem:[#allocation2 + $0x148] sm:$0xff]
        %v1820 = vld [vmem:[#allocation2 + $0x150] sm:$0xff]
        %v1821 = vld [vmem:[#allocation2 + $0x158] sm:$0xff]
        %v1822 = vld [vmem:[#allocation2 + $0x160] sm:$0xff]
        %v1823 = vld [vmem:[#allocation2 + $0x168] sm:$0xff]
        %v1824 = vld [vmem:[#allocation2 + $0x170] sm:$0xff]
        %v1825 = vld [vmem:[#allocation2 + $0x178] sm:$0xff]
        %v1826 = vmul.f32 %v1778, 0.0051020407
        %v1827 = vmul.f32 %v1779, 0.0051020407
        %v1828 = vmul.f32 %v1780, 0.0051020407
        %v1829 = vmul.f32 %v1781, 0.0051020407
        %v1830 = vmul.f32 %v1782, 0.0051020407
        %v1831 = vmul.f32 %v1783, 0.0051020407
        %v1832 = vmul.f32 %v1784, 0.0051020407
        %v1833 = vmul.f32 %v1785, 0.0051020407
        %v1834 = vmul.f32 %v1786, 0.0051020407
        %v1835 = vmul.f32 %v1787, 0.0051020407
        %v1836 = vmul.f32 %v1788, 0.0051020407
        %v1837 = vmul.f32 %v1789, 0.0051020407
        %v1838 = vmul.f32 %v1790, 0.0051020407
        %v1839 = vmul.f32 %v1791, 0.0051020407
        %v1840 = vmul.f32 %v1792, 0.0051020407
        %v1841 = vmul.f32 %v1793, 0.0051020407
        %v1842 = vmul.f32 %v1794, 0.0051020407
        %v1843 = vmul.f32 %v1795, 0.0051020407
        %v1844 = vmul.f32 %v1796, 0.0051020407
        %v1845 = vmul.f32 %v1797, 0.0051020407
        %v1846 = vmul.f32 %v1798, 0.0051020407
        %v1847 = vmul.f32 %v1799, 0.0051020407
        %v1848 = vmul.f32 %v1800, 0.0051020407
        %v1849 = vmul.f32 %v1801, 0.0051020407
        %v1850 = vmul.f32 %v1802, 0.0051020407
        %v1851 = vmul.f32 %v1803, 0.0051020407
        %v1852 = vmul.f32 %v1804, 0.0051020407
        %v1853 = vmul.f32 %v1805, 0.0051020407
        %v1854 = vmul.f32 %v1806, 0.0051020407
        %v1855 = vmul.f32 %v1807, 0.0051020407
        %v1856 = vmul.f32 %v1808, 0.0051020407
        %v1857 = vmul.f32 %v1809, 0.0051020407
        %v1858 = vmul.f32 %v1810, 0.0051020407
        %v1859 = vmul.f32 %v1811, 0.0051020407
        %v1860 = vmul.f32 %v1812, 0.0051020407
        %v1861 = vmul.f32 %v1813, 0.0051020407
        %v1862 = vmul.f32 %v1814, 0.0051020407
        %v1863 = vmul.f32 %v1815, 0.0051020407
        %v1864 = vmul.f32 %v1816, 0.0051020407
        %v1865 = vmul.f32 %v1817, 0.0051020407
        %v1866 = vmul.f32 %v1818, 0.0051020407
        %v1867 = vmul.f32 %v1819, 0.0051020407
        %v1868 = vmul.f32 %v1820, 0.0051020407
        %v1869 = vmul.f32 %v1821, 0.0051020407
        %v1870 = vmul.f32 %v1822, 0.0051020407
        %v1871 = vmul.f32 %v1823, 0.0051020407
        %v1872 = vmul.f32 %v1824, 0.0051020407
        %v1873 = vmul.f32 %v1825, 0.0051020407
        %v1874 = vld [vmem:[#allocation3] sm:$0xff]
        %v1875 = vld [vmem:[#allocation3 + $0x8] sm:$0xff]
        %v1876 = vld [vmem:[#allocation3 + $0x10] sm:$0xff]
        %v1877 = vld [vmem:[#allocation3 + $0x18] sm:$0xff]
        %v1878 = vld [vmem:[#allocation3 + $0x20] sm:$0xff]
        %v1879 = vld [vmem:[#allocation3 + $0x28] sm:$0xff]
        %v1880 = vld [vmem:[#allocation3 + $0x30] sm:$0xff]
        %v1881 = vld [vmem:[#allocation3 + $0x38] sm:$0xff]
        %v1882 = vld [vmem:[#allocation3 + $0x40] sm:$0xff]
        %v1883 = vld [vmem:[#allocation3 + $0x48] sm:$0xff]
        %v1884 = vld [vmem:[#allocation3 + $0x50] sm:$0xff]
        %v1885 = vld [vmem:[#allocation3 + $0x58] sm:$0xff]
        %v1886 = vld [vmem:[#allocation3 + $0x60] sm:$0xff]
        %v1887 = vld [vmem:[#allocation3 + $0x68] sm:$0xff]
        %v1888 = vld [vmem:[#allocation3 + $0x70] sm:$0xff]
        %v1889 = vld [vmem:[#allocation3 + $0x78] sm:$0xff]
        %v1890 = vld [vmem:[#allocation3 + $0x80] sm:$0xff]
        %v1891 = vld [vmem:[#allocation3 + $0x88] sm:$0xff]
        %v1892 = vld [vmem:[#allocation3 + $0x90] sm:$0xff]
        %v1893 = vld [vmem:[#allocation3 + $0x98] sm:$0xff]
        %v1894 = vld [vmem:[#allocation3 + $0xa0] sm:$0xff]
        %v1895 = vld [vmem:[#allocation3 + $0xa8] sm:$0xff]
        %v1896 = vld [vmem:[#allocation3 + $0xb0] sm:$0xff]
        %v1897 = vld [vmem:[#allocation3 + $0xb8] sm:$0xff]
        %v1898 = vld [vmem:[#allocation3 + $0xc0] sm:$0xff]
        %v1899 = vld [vmem:[#allocation3 + $0xc8] sm:$0xff]
        %v1900 = vld [vmem:[#allocation3 + $0xd0] sm:$0xff]
        %v1901 = vld [vmem:[#allocation3 + $0xd8] sm:$0xff]
        %v1902 = vld [vmem:[#allocation3 + $0xe0] sm:$0xff]
        %v1903 = vld [vmem:[#allocation3 + $0xe8] sm:$0xff]
        %v1904 = vld [vmem:[#allocation3 + $0xf0] sm:$0xff]
        %v1905 = vld [vmem:[#allocation3 + $0xf8] sm:$0xff]
        %v1906 = vld [vmem:[#allocation3 + $0x100] sm:$0xff]
        %v1907 = vld [vmem:[#allocation3 + $0x108] sm:$0xff]
        %v1908 = vld [vmem:[#allocation3 + $0x110] sm:$0xff]
        %v1909 = vld [vmem:[#allocation3 + $0x118] sm:$0xff]
        %v1910 = vld [vmem:[#allocation3 + $0x120] sm:$0xff]
        %v1911 = vld [vmem:[#allocation3 + $0x128] sm:$0xff]
        %v1912 = vld [vmem:[#allocation3 + $0x130] sm:$0xff]
        %v1913 = vld [vmem:[#allocation3 + $0x138] sm:$0xff]
        %v1914 = vld [vmem:[#allocation3 + $0x140] sm:$0xff]
        %v1915 = vld [vmem:[#allocation3 + $0x148] sm:$0xff]
        %v1916 = vld [vmem:[#allocation3 + $0x150] sm:$0xff]
        %v1917 = vld [vmem:[#allocation3 + $0x158] sm:$0xff]
        %v1918 = vld [vmem:[#allocation3 + $0x160] sm:$0xff]
        %v1919 = vld [vmem:[#allocation3 + $0x168] sm:$0xff]
        %v1920 = vld [vmem:[#allocation3 + $0x170] sm:$0xff]
        %v1921 = vld [vmem:[#allocation3 + $0x178] sm:$0xff]
        %v1922 = vmul.f32 %v1874, 0.0051020407
        %v1923 = vmul.f32 %v1875, 0.0051020407
        %v1924 = vmul.f32 %v1876, 0.0051020407
        %v1925 = vmul.f32 %v1877, 0.0051020407
        %v1926 = vmul.f32 %v1878, 0.0051020407
        %v1927 = vmul.f32 %v1879, 0.0051020407
        %v1928 = vmul.f32 %v1880, 0.0051020407
        %v1929 = vmul.f32 %v1881, 0.0051020407
        %v1930 = vmul.f32 %v1882, 0.0051020407
        %v1931 = vmul.f32 %v1883, 0.0051020407
        %v1932 = vmul.f32 %v1884, 0.0051020407
        %v1933 = vmul.f32 %v1885, 0.0051020407
        %v1934 = vmul.f32 %v1886, 0.0051020407
        %v1935 = vmul.f32 %v1887, 0.0051020407
        %v1936 = vmul.f32 %v1888, 0.0051020407
        %v1937 = vmul.f32 %v1889, 0.0051020407
        %v1938 = vmul.f32 %v1890, 0.0051020407
        %v1939 = vmul.f32 %v1891, 0.0051020407
        %v1940 = vmul.f32 %v1892, 0.0051020407
        %v1941 = vmul.f32 %v1893, 0.0051020407
        %v1942 = vmul.f32 %v1894, 0.0051020407
        %v1943 = vmul.f32 %v1895, 0.0051020407
        %v1944 = vmul.f32 %v1896, 0.0051020407
        %v1945 = vmul.f32 %v1897, 0.0051020407
        %v1946 = vmul.f32 %v1898, 0.0051020407
        %v1947 = vmul.f32 %v1899, 0.0051020407
        %v1948 = vmul.f32 %v1900, 0.0051020407
        %v1949 = vmul.f32 %v1901, 0.0051020407
        %v1950 = vmul.f32 %v1902, 0.0051020407
        %v1951 = vmul.f32 %v1903, 0.0051020407
        %v1952 = vmul.f32 %v1904, 0.0051020407
        %v1953 = vmul.f32 %v1905, 0.0051020407
        %v1954 = vmul.f32 %v1906, 0.0051020407
        %v1955 = vmul.f32 %v1907, 0.0051020407
        %v1956 = vmul.f32 %v1908, 0.0051020407
        %v1957 = vmul.f32 %v1909, 0.0051020407
        %v1958 = vmul.f32 %v1910, 0.0051020407
        %v1959 = vmul.f32 %v1911, 0.0051020407
        %v1960 = vmul.f32 %v1912, 0.0051020407
        %v1961 = vmul.f32 %v1913, 0.0051020407
        %v1962 = vmul.f32 %v1914, 0.0051020407
        %v1963 = vmul.f32 %v1915, 0.0051020407
        %v1964 = vmul.f32 %v1916, 0.0051020407
        %v1965 = vmul.f32 %v1917, 0.0051020407
        %v1966 = vmul.f32 %v1918, 0.0051020407
        %v1967 = vmul.f32 %v1919, 0.0051020407
        %v1968 = vmul.f32 %v1920, 0.0051020407
        %v1969 = vmul.f32 %v1921, 0.0051020407
        %v1970 = vmul.f32 %v1826, %v1826
        %v1971 = vmul.f32 %v1827, %v1827
        %v1972 = vmul.f32 %v1828, %v1828
        %v1973 = vmul.f32 %v1829, %v1829
        %v1974 = vmul.f32 %v1830, %v1830
        %v1975 = vmul.f32 %v1831, %v1831
        %v1976 = vmul.f32 %v1832, %v1832
        %v1977 = vmul.f32 %v1833, %v1833
        %v1978 = vmul.f32 %v1834, %v1834
        %v1979 = vmul.f32 %v1835, %v1835
        %v1980 = vmul.f32 %v1836, %v1836
        %v1981 = vmul.f32 %v1837, %v1837
        %v1982 = vmul.f32 %v1838, %v1838
        %v1983 = vmul.f32 %v1839, %v1839
        %v1984 = vmul.f32 %v1840, %v1840
        %v1985 = vmul.f32 %v1841, %v1841
        %v1986 = vmul.f32 %v1842, %v1842
        %v1987 = vmul.f32 %v1843, %v1843
        %v1988 = vmul.f32 %v1844, %v1844
        %v1989 = vmul.f32 %v1845, %v1845
        %v1990 = vmul.f32 %v1846, %v1846
        %v1991 = vmul.f32 %v1847, %v1847
        %v1992 = vmul.f32 %v1848, %v1848
        %v1993 = vmul.f32 %v1849, %v1849
        %v1994 = vmul.f32 %v1850, %v1850
        %v1995 = vmul.f32 %v1851, %v1851
        %v1996 = vmul.f32 %v1852, %v1852
        %v1997 = vmul.f32 %v1853, %v1853
        %v1998 = vmul.f32 %v1854, %v1854
        %v1999 = vmul.f32 %v1855, %v1855
        %v2000 = vmul.f32 %v1856, %v1856
        %v2001 = vmul.f32 %v1857, %v1857
        %v2002 = vmul.f32 %v1858, %v1858
        %v2003 = vmul.f32 %v1859, %v1859
        %v2004 = vmul.f32 %v1860, %v1860
        %v2005 = vmul.f32 %v1861, %v1861
        %v2006 = vmul.f32 %v1862, %v1862
        %v2007 = vmul.f32 %v1863, %v1863
        %v2008 = vmul.f32 %v1864, %v1864
        %v2009 = vmul.f32 %v1865, %v1865
        %v2010 = vmul.f32 %v1866, %v1866
        %v2011 = vmul.f32 %v1867, %v1867
        %v2012 = vmul.f32 %v1868, %v1868
        %v2013 = vmul.f32 %v1869, %v1869
        %v2014 = vmul.f32 %v1870, %v1870
        %v2015 = vmul.f32 %v1871, %v1871
        %v2016 = vmul.f32 %v1872, %v1872
        %v2017 = vmul.f32 %v1873, %v1873
        %v2018 = vsub.f32 %v1922, %v1970
        %v2019 = vsub.f32 %v1923, %v1971
        %v2020 = vsub.f32 %v1924, %v1972
        %v2021 = vsub.f32 %v1925, %v1973
        %v2022 = vsub.f32 %v1926, %v1974
        %v2023 = vsub.f32 %v1927, %v1975
        %v2024 = vsub.f32 %v1928, %v1976
        %v2025 = vsub.f32 %v1929, %v1977
        %v2026 = vsub.f32 %v1930, %v1978
        %v2027 = vsub.f32 %v1931, %v1979
        %v2028 = vsub.f32 %v1932, %v1980
        %v2029 = vsub.f32 %v1933, %v1981
        %v2030 = vsub.f32 %v1934, %v1982
        %v2031 = vsub.f32 %v1935, %v1983
        %v2032 = vsub.f32 %v1936, %v1984
        %v2033 = vsub.f32 %v1937, %v1985
        %v2034 = vsub.f32 %v1938, %v1986
        %v2035 = vsub.f32 %v1939, %v1987
        %v2036 = vsub.f32 %v1940, %v1988
        %v2037 = vsub.f32 %v1941, %v1989
        %v2038 = vsub.f32 %v1942, %v1990
        %v2039 = vsub.f32 %v1943, %v1991
        %v2040 = vsub.f32 %v1944, %v1992
        %v2041 = vsub.f32 %v1945, %v1993
        %v2042 = vsub.f32 %v1946, %v1994
        %v2043 = vsub.f32 %v1947, %v1995
        %v2044 = vsub.f32 %v1948, %v1996
        %v2045 = vsub.f32 %v1949, %v1997
        %v2046 = vsub.f32 %v1950, %v1998
        %v2047 = vsub.f32 %v1951, %v1999
        %v2048 = vsub.f32 %v1952, %v2000
        %v2049 = vsub.f32 %v1953, %v2001
        %v2050 = vsub.f32 %v1954, %v2002
        %v2051 = vsub.f32 %v1955, %v2003
        %v2052 = vsub.f32 %v1956, %v2004
        %v2053 = vsub.f32 %v1957, %v2005
        %v2054 = vsub.f32 %v1958, %v2006
        %v2055 = vsub.f32 %v1959, %v2007
        %v2056 = vsub.f32 %v1960, %v2008
        %v2057 = vsub.f32 %v1961, %v2009
        %v2058 = vsub.f32 %v1962, %v2010
        %v2059 = vsub.f32 %v1963, %v2011
        %v2060 = vsub.f32 %v1964, %v2012
        %v2061 = vsub.f32 %v1965, %v2013
        %v2062 = vsub.f32 %v1966, %v2014
        %v2063 = vsub.f32 %v1967, %v2015
        %v2064 = vsub.f32 %v1968, %v2016
        %v2065 = vsub.f32 %v1969, %v2017
        %v2066 = vadd.f32 %v2018, 1e-05
        %v2067 = vadd.f32 %v2019, 1e-05
        %v2068 = vadd.f32 %v2020, 1e-05
        %v2069 = vadd.f32 %v2021, 1e-05
        %v2070 = vadd.f32 %v2022, 1e-05
        %v2071 = vadd.f32 %v2023, 1e-05
        %v2072 = vadd.f32 %v2024, 1e-05
        %v2073 = vadd.f32 %v2025, 1e-05
        %v2074 = vadd.f32 %v2026, 1e-05
        %v2075 = vadd.f32 %v2027, 1e-05
        %v2076 = vadd.f32 %v2028, 1e-05
        %v2077 = vadd.f32 %v2029, 1e-05
        %v2078 = vadd.f32 %v2030, 1e-05
        %v2079 = vadd.f32 %v2031, 1e-05
        %v2080 = vadd.f32 %v2032, 1e-05
        %v2081 = vadd.f32 %v2033, 1e-05
        %v2082 = vadd.f32 %v2034, 1e-05
        %v2083 = vadd.f32 %v2035, 1e-05
        %v2084 = vadd.f32 %v2036, 1e-05
        %v2085 = vadd.f32 %v2037, 1e-05
        %v2086 = vadd.f32 %v2038, 1e-05
        %v2087 = vadd.f32 %v2039, 1e-05
        %v2088 = vadd.f32 %v2040, 1e-05
        %v2089 = vadd.f32 %v2041, 1e-05
        %v2090 = vadd.f32 %v2042, 1e-05
        %v2091 = vadd.f32 %v2043, 1e-05
        %v2092 = vadd.f32 %v2044, 1e-05
        %v2093 = vadd.f32 %v2045, 1e-05
        %v2094 = vadd.f32 %v2046, 1e-05
        %v2095 = vadd.f32 %v2047, 1e-05
        %v2096 = vadd.f32 %v2048, 1e-05
        %v2097 = vadd.f32 %v2049, 1e-05
        %v2098 = vadd.f32 %v2050, 1e-05
        %v2099 = vadd.f32 %v2051, 1e-05
        %v2100 = vadd.f32 %v2052, 1e-05
        %v2101 = vadd.f32 %v2053, 1e-05
        %v2102 = vadd.f32 %v2054, 1e-05
        %v2103 = vadd.f32 %v2055, 1e-05
        %v2104 = vadd.f32 %v2056, 1e-05
        %v2105 = vadd.f32 %v2057, 1e-05
        %v2106 = vadd.f32 %v2058, 1e-05
        %v2107 = vadd.f32 %v2059, 1e-05
        %v2108 = vadd.f32 %v2060, 1e-05
        %v2109 = vadd.f32 %v2061, 1e-05
        %v2110 = vadd.f32 %v2062, 1e-05
        %v2111 = vadd.f32 %v2063, 1e-05
        %v2112 = vadd.f32 %v2064, 1e-05
        %v2113 = vadd.f32 %v2065, 1e-05
        %v2114 = vrsqrt.pop %v2066
        %v2115 = vrsqrt.pop %v2067
        %v2116 = vrsqrt.pop %v2068
        %v2117 = vrsqrt.pop %v2069
        %v2118 = vrsqrt.pop %v2070
        %v2119 = vrsqrt.pop %v2071
        %v2120 = vrsqrt.pop %v2072
        %v2121 = vrsqrt.pop %v2073
        %v2122 = vrsqrt.pop %v2074
        %v2123 = vrsqrt.pop %v2075
        %v2124 = vrsqrt.pop %v2076
        %v2125 = vrsqrt.pop %v2077
        %v2126 = vrsqrt.pop %v2078
        %v2127 = vrsqrt.pop %v2079
        %v2128 = vrsqrt.pop %v2080
        %v2129 = vrsqrt.pop %v2081
        %v2130 = vrsqrt.pop %v2082
        %v2131 = vrsqrt.pop %v2083
        %v2132 = vrsqrt.pop %v2084
        %v2133 = vrsqrt.pop %v2085
        %v2134 = vrsqrt.pop %v2086
        %v2135 = vrsqrt.pop %v2087
        %v2136 = vrsqrt.pop %v2088
        %v2137 = vrsqrt.pop %v2089
        %v2138 = vrsqrt.pop %v2090
        %v2139 = vrsqrt.pop %v2091
        %v2140 = vrsqrt.pop %v2092
        %v2141 = vrsqrt.pop %v2093
        %v2142 = vrsqrt.pop %v2094
        %v2143 = vrsqrt.pop %v2095
        %v2144 = vrsqrt.pop %v2096
        %v2145 = vrsqrt.pop %v2097
        %v2146 = vrsqrt.pop %v2098
        %v2147 = vrsqrt.pop %v2099
        %v2148 = vrsqrt.pop %v2100
        %v2149 = vrsqrt.pop %v2101
        %v2150 = vrsqrt.pop %v2102
        %v2151 = vrsqrt.pop %v2103
        %v2152 = vrsqrt.pop %v2104
        %v2153 = vrsqrt.pop %v2105
        %v2154 = vrsqrt.pop %v2106
        %v2155 = vrsqrt.pop %v2107
        %v2156 = vrsqrt.pop %v2108
        %v2157 = vrsqrt.pop %v2109
        %v2158 = vrsqrt.pop %v2110
        %v2159 = vrsqrt.pop %v2111
        %v2160 = vrsqrt.pop %v2112
        %v2161 = vrsqrt.pop %v2113
        %v2162 = vld [vmem:[%s2] sm:$0xff]
        %v2163 = vld [vmem:[%s2 + $0x8] sm:$0xff]
        %v2164 = vld [vmem:[%s2 + $0x10] sm:$0xff]
        %v2165 = vld [vmem:[%s2 + $0x18] sm:$0xff]
        %v2166 = vld [vmem:[%s2 + $0x20] sm:$0xff]
        %v2167 = vld [vmem:[%s2 + $0x28] sm:$0xff]
        %v2168 = vld [vmem:[%s2 + $0x30] sm:$0xff]
        %v2169 = vld [vmem:[%s2 + $0x38] sm:$0xff]
        %v2170 = vld [vmem:[%s2 + $0x40] sm:$0xff]
        %v2171 = vld [vmem:[%s2 + $0x48] sm:$0xff]
        %v2172 = vld [vmem:[%s2 + $0x50] sm:$0xff]
        %v2173 = vld [vmem:[%s2 + $0x58] sm:$0xff]
        %v2174 = vld [vmem:[%s2 + $0x60] sm:$0xff]
        %v2175 = vld [vmem:[%s2 + $0x68] sm:$0xff]
        %v2176 = vld [vmem:[%s2 + $0x70] sm:$0xff]
        %v2177 = vld [vmem:[%s2 + $0x78] sm:$0xff]
        %v2178 = vld [vmem:[%s2 + $0x80] sm:$0xff]
        %v2179 = vld [vmem:[%s2 + $0x88] sm:$0xff]
        %v2180 = vld [vmem:[%s2 + $0x90] sm:$0xff]
        %v2181 = vld [vmem:[%s2 + $0x98] sm:$0xff]
        %v2182 = vld [vmem:[%s2 + $0xa0] sm:$0xff]
        %v2183 = vld [vmem:[%s2 + $0xa8] sm:$0xff]
        %v2184 = vld [vmem:[%s2 + $0xb0] sm:$0xff]
        %v2185 = vld [vmem:[%s2 + $0xb8] sm:$0xff]
        %v2186 = vld [vmem:[%s2 + $0xc0] sm:$0xff]
        %v2187 = vld [vmem:[%s2 + $0xc8] sm:$0xff]
        %v2188 = vld [vmem:[%s2 + $0xd0] sm:$0xff]
        %v2189 = vld [vmem:[%s2 + $0xd8] sm:$0xff]
        %v2190 = vld [vmem:[%s2 + $0xe0] sm:$0xff]
        %v2191 = vld [vmem:[%s2 + $0xe8] sm:$0xff]
        %v2192 = vld [vmem:[%s2 + $0xf0] sm:$0xff]
        %v2193 = vld [vmem:[%s2 + $0xf8] sm:$0xff]
        %v2194 = vld [vmem:[%s2 + $0x100] sm:$0xff]
        %v2195 = vld [vmem:[%s2 + $0x108] sm:$0xff]
        %v2196 = vld [vmem:[%s2 + $0x110] sm:$0xff]
        %v2197 = vld [vmem:[%s2 + $0x118] sm:$0xff]
        %v2198 = vld [vmem:[%s2 + $0x120] sm:$0xff]
        %v2199 = vld [vmem:[%s2 + $0x128] sm:$0xff]
        %v2200 = vld [vmem:[%s2 + $0x130] sm:$0xff]
        %v2201 = vld [vmem:[%s2 + $0x138] sm:$0xff]
        %v2202 = vld [vmem:[%s2 + $0x140] sm:$0xff]
        %v2203 = vld [vmem:[%s2 + $0x148] sm:$0xff]
        %v2204 = vld [vmem:[%s2 + $0x150] sm:$0xff]
        %v2205 = vld [vmem:[%s2 + $0x158] sm:$0xff]
        %v2206 = vld [vmem:[%s2 + $0x160] sm:$0xff]
        %v2207 = vld [vmem:[%s2 + $0x168] sm:$0xff]
        %v2208 = vld [vmem:[%s2 + $0x170] sm:$0xff]
        %v2209 = vld [vmem:[%s2 + $0x178] sm:$0xff]
        %v2210 = vmul.f32 %v2162, %v2114
        %v2211 = vmul.f32 %v2163, %v2115
        %v2212 = vmul.f32 %v2164, %v2116
        %v2213 = vmul.f32 %v2165, %v2117
        %v2214 = vmul.f32 %v2166, %v2118
        %v2215 = vmul.f32 %v2167, %v2119
        %v2216 = vmul.f32 %v2168, %v2120
        %v2217 = vmul.f32 %v2169, %v2121
        %v2218 = vmul.f32 %v2170, %v2122
        %v2219 = vmul.f32 %v2171, %v2123
        %v2220 = vmul.f32 %v2172, %v2124
        %v2221 = vmul.f32 %v2173, %v2125
        %v2222 = vmul.f32 %v2174, %v2126
        %v2223 = vmul.f32 %v2175, %v2127
        %v2224 = vmul.f32 %v2176, %v2128
        %v2225 = vmul.f32 %v2177, %v2129
        %v2226 = vmul.f32 %v2178, %v2130
        %v2227 = vmul.f32 %v2179, %v2131
        %v2228 = vmul.f32 %v2180, %v2132
        %v2229 = vmul.f32 %v2181, %v2133
        %v2230 = vmul.f32 %v2182, %v2134
        %v2231 = vmul.f32 %v2183, %v2135
        %v2232 = vmul.f32 %v2184, %v2136
        %v2233 = vmul.f32 %v2185, %v2137
        %v2234 = vmul.f32 %v2186, %v2138
        %v2235 = vmul.f32 %v2187, %v2139
        %v2236 = vmul.f32 %v2188, %v2140
        %v2237 = vmul.f32 %v2189, %v2141
        %v2238 = vmul.f32 %v2190, %v2142
        %v2239 = vmul.f32 %v2191, %v2143
        %v2240 = vmul.f32 %v2192, %v2144
        %v2241 = vmul.f32 %v2193, %v2145
        %v2242 = vmul.f32 %v2194, %v2146
        %v2243 = vmul.f32 %v2195, %v2147
        %v2244 = vmul.f32 %v2196, %v2148
        %v2245 = vmul.f32 %v2197, %v2149
        %v2246 = vmul.f32 %v2198, %v2150
        %v2247 = vmul.f32 %v2199, %v2151
        %v2248 = vmul.f32 %v2200, %v2152
        %v2249 = vmul.f32 %v2201, %v2153
        %v2250 = vmul.f32 %v2202, %v2154
        %v2251 = vmul.f32 %v2203, %v2155
        %v2252 = vmul.f32 %v2204, %v2156
        %v2253 = vmul.f32 %v2205, %v2157
        %v2254 = vmul.f32 %v2206, %v2158
        %v2255 = vmul.f32 %v2207, %v2159
        %v2256 = vmul.f32 %v2208, %v2160
        %v2257 = vmul.f32 %v2209, %v2161
        %v2258 = vld [vmem:[%s3] sm:$0xff]
        %v2259 = vld [vmem:[%s3 + $0x8] sm:$0xff]
        %v2260 = vld [vmem:[%s3 + $0x10] sm:$0xff]
        %v2261 = vld [vmem:[%s3 + $0x18] sm:$0xff]
        %v2262 = vld [vmem:[%s3 + $0x20] sm:$0xff]
        %v2263 = vld [vmem:[%s3 + $0x28] sm:$0xff]
        %v2264 = vld [vmem:[%s3 + $0x30] sm:$0xff]
        %v2265 = vld [vmem:[%s3 + $0x38] sm:$0xff]
        %v2266 = vld [vmem:[%s3 + $0x40] sm:$0xff]
        %v2267 = vld [vmem:[%s3 + $0x48] sm:$0xff]
        %v2268 = vld [vmem:[%s3 + $0x50] sm:$0xff]
        %v2269 = vld [vmem:[%s3 + $0x58] sm:$0xff]
        %v2270 = vld [vmem:[%s3 + $0x60] sm:$0xff]
        %v2271 = vld [vmem:[%s3 + $0x68] sm:$0xff]
        %v2272 = vld [vmem:[%s3 + $0x70] sm:$0xff]
        %v2273 = vld [vmem:[%s3 + $0x78] sm:$0xff]
        %v2274 = vld [vmem:[%s3 + $0x80] sm:$0xff]
        %v2275 = vld [vmem:[%s3 + $0x88] sm:$0xff]
        %v2276 = vld [vmem:[%s3 + $0x90] sm:$0xff]
        %v2277 = vld [vmem:[%s3 + $0x98] sm:$0xff]
        %v2278 = vld [vmem:[%s3 + $0xa0] sm:$0xff]
        %v2279 = vld [vmem:[%s3 + $0xa8] sm:$0xff]
        %v2280 = vld [vmem:[%s3 + $0xb0] sm:$0xff]
        %v2281 = vld [vmem:[%s3 + $0xb8] sm:$0xff]
        %v2282 = vld [vmem:[%s3 + $0xc0] sm:$0xff]
        %v2283 = vld [vmem:[%s3 + $0xc8] sm:$0xff]
        %v2284 = vld [vmem:[%s3 + $0xd0] sm:$0xff]
        %v2285 = vld [vmem:[%s3 + $0xd8] sm:$0xff]
        %v2286 = vld [vmem:[%s3 + $0xe0] sm:$0xff]
        %v2287 = vld [vmem:[%s3 + $0xe8] sm:$0xff]
        %v2288 = vld [vmem:[%s3 + $0xf0] sm:$0xff]
        %v2289 = vld [vmem:[%s3 + $0xf8] sm:$0xff]
        %v2290 = vld [vmem:[%s3 + $0x100] sm:$0xff]
        %v2291 = vld [vmem:[%s3 + $0x108] sm:$0xff]
        %v2292 = vld [vmem:[%s3 + $0x110] sm:$0xff]
        %v2293 = vld [vmem:[%s3 + $0x118] sm:$0xff]
        %v2294 = vld [vmem:[%s3 + $0x120] sm:$0xff]
        %v2295 = vld [vmem:[%s3 + $0x128] sm:$0xff]
        %v2296 = vld [vmem:[%s3 + $0x130] sm:$0xff]
        %v2297 = vld [vmem:[%s3 + $0x138] sm:$0xff]
        %v2298 = vld [vmem:[%s3 + $0x140] sm:$0xff]
        %v2299 = vld [vmem:[%s3 + $0x148] sm:$0xff]
        %v2300 = vld [vmem:[%s3 + $0x150] sm:$0xff]
        %v2301 = vld [vmem:[%s3 + $0x158] sm:$0xff]
        %v2302 = vld [vmem:[%s3 + $0x160] sm:$0xff]
        %v2303 = vld [vmem:[%s3 + $0x168] sm:$0xff]
        %v2304 = vld [vmem:[%s3 + $0x170] sm:$0xff]
        %v2305 = vld [vmem:[%s3 + $0x178] sm:$0xff]
        %v2306 = vmul.f32 %v1826, %v2210
        %v2307 = vmul.f32 %v1827, %v2211
        %v2308 = vmul.f32 %v1828, %v2212
        %v2309 = vmul.f32 %v1829, %v2213
        %v2310 = vmul.f32 %v1830, %v2214
        %v2311 = vmul.f32 %v1831, %v2215
        %v2312 = vmul.f32 %v1832, %v2216
        %v2313 = vmul.f32 %v1833, %v2217
        %v2314 = vmul.f32 %v1834, %v2218
        %v2315 = vmul.f32 %v1835, %v2219
        %v2316 = vmul.f32 %v1836, %v2220
        %v2317 = vmul.f32 %v1837, %v2221
        %v2318 = vmul.f32 %v1838, %v2222
        %v2319 = vmul.f32 %v1839, %v2223
        %v2320 = vmul.f32 %v1840, %v2224
        %v2321 = vmul.f32 %v1841, %v2225
        %v2322 = vmul.f32 %v1842, %v2226
        %v2323 = vmul.f32 %v1843, %v2227
        %v2324 = vmul.f32 %v1844, %v2228
        %v2325 = vmul.f32 %v1845, %v2229
        %v2326 = vmul.f32 %v1846, %v2230
        %v2327 = vmul.f32 %v1847, %v2231
        %v2328 = vmul.f32 %v1848, %v2232
        %v2329 = vmul.f32 %v1849, %v2233
        %v2330 = vmul.f32 %v1850, %v2234
        %v2331 = vmul.f32 %v1851, %v2235
        %v2332 = vmul.f32 %v1852, %v2236
        %v2333 = vmul.f32 %v1853, %v2237
        %v2334 = vmul.f32 %v1854, %v2238
        %v2335 = vmul.f32 %v1855, %v2239
        %v2336 = vmul.f32 %v1856, %v2240
        %v2337 = vmul.f32 %v1857, %v2241
        %v2338 = vmul.f32 %v1858, %v2242
        %v2339 = vmul.f32 %v1859, %v2243
        %v2340 = vmul.f32 %v1860, %v2244
        %v2341 = vmul.f32 %v1861, %v2245
        %v2342 = vmul.f32 %v1862, %v2246
        %v2343 = vmul.f32 %v1863, %v2247
        %v2344 = vmul.f32 %v1864, %v2248
        %v2345 = vmul.f32 %v1865, %v2249
        %v2346 = vmul.f32 %v1866, %v2250
        %v2347 = vmul.f32 %v1867, %v2251
        %v2348 = vmul.f32 %v1868, %v2252
        %v2349 = vmul.f32 %v1869, %v2253
        %v2350 = vmul.f32 %v1870, %v2254
        %v2351 = vmul.f32 %v1871, %v2255
        %v2352 = vmul.f32 %v1872, %v2256
        %v2353 = vmul.f32 %v1873, %v2257
        %v2354 = vsub.f32 %v2258, %v2306
        %v2355 = vsub.f32 %v2259, %v2307
        %v2356 = vsub.f32 %v2260, %v2308
        %v2357 = vsub.f32 %v2261, %v2309
        %v2358 = vsub.f32 %v2262, %v2310
        %v2359 = vsub.f32 %v2263, %v2311
        %v2360 = vsub.f32 %v2264, %v2312
        %v2361 = vsub.f32 %v2265, %v2313
        %v2362 = vsub.f32 %v2266, %v2314
        %v2363 = vsub.f32 %v2267, %v2315
        %v2364 = vsub.f32 %v2268, %v2316
        %v2365 = vsub.f32 %v2269, %v2317
        %v2366 = vsub.f32 %v2270, %v2318
        %v2367 = vsub.f32 %v2271, %v2319
        %v2368 = vsub.f32 %v2272, %v2320
        %v2369 = vsub.f32 %v2273, %v2321
        %v2370 = vsub.f32 %v2274, %v2322
        %v2371 = vsub.f32 %v2275, %v2323
        %v2372 = vsub.f32 %v2276, %v2324
        %v2373 = vsub.f32 %v2277, %v2325
        %v2374 = vsub.f32 %v2278, %v2326
        %v2375 = vsub.f32 %v2279, %v2327
        %v2376 = vsub.f32 %v2280, %v2328
        %v2377 = vsub.f32 %v2281, %v2329
        %v2378 = vsub.f32 %v2282, %v2330
        %v2379 = vsub.f32 %v2283, %v2331
        %v2380 = vsub.f32 %v2284, %v2332
        %v2381 = vsub.f32 %v2285, %v2333
        %v2382 = vsub.f32 %v2286, %v2334
        %v2383 = vsub.f32 %v2287, %v2335
        %v2384 = vsub.f32 %v2288, %v2336
        %v2385 = vsub.f32 %v2289, %v2337
        %v2386 = vsub.f32 %v2290, %v2338
        %v2387 = vsub.f32 %v2291, %v2339
        %v2388 = vsub.f32 %v2292, %v2340
        %v2389 = vsub.f32 %v2293, %v2341
        %v2390 = vsub.f32 %v2294, %v2342
        %v2391 = vsub.f32 %v2295, %v2343
        %v2392 = vsub.f32 %v2296, %v2344
        %v2393 = vsub.f32 %v2297, %v2345
        %v2394 = vsub.f32 %v2298, %v2346
        %v2395 = vsub.f32 %v2299, %v2347
        %v2396 = vsub.f32 %v2300, %v2348
        %v2397 = vsub.f32 %v2301, %v2349
        %v2398 = vsub.f32 %v2302, %v2350
        %v2399 = vsub.f32 %v2303, %v2351
        %v2400 = vsub.f32 %v2304, %v2352
        %v2401 = vsub.f32 %v2305, %v2353
        %2403 = vset.pattern.permute.xlu0 0
        %2404 = vperm.xlu0 %2403, %v2210
        %v2405 = vpop.permute.xlu0 %2404
        %2408 = vset.pattern.permute.xlu0 0
        %2409 = vperm.xlu0 %2408, %v2211
        %v2410 = vpop.permute.xlu0 %2409
        %2413 = vset.pattern.permute.xlu0 0
        %2414 = vperm.xlu0 %2413, %v2212
        %v2415 = vpop.permute.xlu0 %2414
        %2418 = vset.pattern.permute.xlu0 0
        %2419 = vperm.xlu0 %2418, %v2213
        %v2420 = vpop.permute.xlu0 %2419
        %2423 = vset.pattern.permute.xlu0 0
        %2424 = vperm.xlu0 %2423, %v2214
        %v2425 = vpop.permute.xlu0 %2424
        %2428 = vset.pattern.permute.xlu0 0
        %2429 = vperm.xlu0 %2428, %v2215
        %v2430 = vpop.permute.xlu0 %2429
        %2433 = vset.pattern.permute.xlu0 0
        %2434 = vperm.xlu0 %2433, %v2216
        %v2435 = vpop.permute.xlu0 %2434
        %2438 = vset.pattern.permute.xlu0 0
        %2439 = vperm.xlu0 %2438, %v2217
        %v2440 = vpop.permute.xlu0 %2439
        %2443 = vset.pattern.permute.xlu0 0
        %2444 = vperm.xlu0 %2443, %v2218
        %v2445 = vpop.permute.xlu0 %2444
        %2448 = vset.pattern.permute.xlu0 0
        %2449 = vperm.xlu0 %2448, %v2219
        %v2450 = vpop.permute.xlu0 %2449
        %2453 = vset.pattern.permute.xlu0 0
        %2454 = vperm.xlu0 %2453, %v2220
        %v2455 = vpop.permute.xlu0 %2454
        %2458 = vset.pattern.permute.xlu0 0
        %2459 = vperm.xlu0 %2458, %v2221
        %v2460 = vpop.permute.xlu0 %2459
        %2463 = vset.pattern.permute.xlu0 0
        %2464 = vperm.xlu0 %2463, %v2222
        %v2465 = vpop.permute.xlu0 %2464
        %2468 = vset.pattern.permute.xlu0 0
        %2469 = vperm.xlu0 %2468, %v2223
        %v2470 = vpop.permute.xlu0 %2469
        %2473 = vset.pattern.permute.xlu0 0
        %2474 = vperm.xlu0 %2473, %v2224
        %v2475 = vpop.permute.xlu0 %2474
        %2478 = vset.pattern.permute.xlu0 0
        %2479 = vperm.xlu0 %2478, %v2225
        %v2480 = vpop.permute.xlu0 %2479
        %2483 = vset.pattern.permute.xlu0 0
        %2484 = vperm.xlu0 %2483, %v2226
        %v2485 = vpop.permute.xlu0 %2484
        %2488 = vset.pattern.permute.xlu0 0
        %2489 = vperm.xlu0 %2488, %v2227
        %v2490 = vpop.permute.xlu0 %2489
        %2493 = vset.pattern.permute.xlu0 0
        %2494 = vperm.xlu0 %2493, %v2228
        %v2495 = vpop.permute.xlu0 %2494
        %2498 = vset.pattern.permute.xlu0 0
        %2499 = vperm.xlu0 %2498, %v2229
        %v2500 = vpop.permute.xlu0 %2499
        %2503 = vset.pattern.permute.xlu0 0
        %2504 = vperm.xlu0 %2503, %v2230
        %v2505 = vpop.permute.xlu0 %2504
        %2508 = vset.pattern.permute.xlu0 0
        %2509 = vperm.xlu0 %2508, %v2231
        %v2510 = vpop.permute.xlu0 %2509
        %2513 = vset.pattern.permute.xlu0 0
        %2514 = vperm.xlu0 %2513, %v2232
        %v2515 = vpop.permute.xlu0 %2514
        %2518 = vset.pattern.permute.xlu0 0
        %2519 = vperm.xlu0 %2518, %v2233
        %v2520 = vpop.permute.xlu0 %2519
        %2523 = vset.pattern.permute.xlu0 0
        %2524 = vperm.xlu0 %2523, %v2234
        %v2525 = vpop.permute.xlu0 %2524
        %2528 = vset.pattern.permute.xlu0 0
        %2529 = vperm.xlu0 %2528, %v2235
        %v2530 = vpop.permute.xlu0 %2529
        %2533 = vset.pattern.permute.xlu0 0
        %2534 = vperm.xlu0 %2533, %v2236
        %v2535 = vpop.permute.xlu0 %2534
        %2538 = vset.pattern.permute.xlu0 0
        %2539 = vperm.xlu0 %2538, %v2237
        %v2540 = vpop.permute.xlu0 %2539
        %2543 = vset.pattern.permute.xlu0 0
        %2544 = vperm.xlu0 %2543, %v2238
        %v2545 = vpop.permute.xlu0 %2544
        %2548 = vset.pattern.permute.xlu0 0
        %2549 = vperm.xlu0 %2548, %v2239
        %v2550 = vpop.permute.xlu0 %2549
        %2553 = vset.pattern.permute.xlu0 0
        %2554 = vperm.xlu0 %2553, %v2240
        %v2555 = vpop.permute.xlu0 %2554
        %2558 = vset.pattern.permute.xlu0 0
        %2559 = vperm.xlu0 %2558, %v2241
        %v2560 = vpop.permute.xlu0 %2559
        %2563 = vset.pattern.permute.xlu0 0
        %2564 = vperm.xlu0 %2563, %v2242
        %v2565 = vpop.permute.xlu0 %2564
        %2568 = vset.pattern.permute.xlu0 0
        %2569 = vperm.xlu0 %2568, %v2243
        %v2570 = vpop.permute.xlu0 %2569
        %2573 = vset.pattern.permute.xlu0 0
        %2574 = vperm.xlu0 %2573, %v2244
        %v2575 = vpop.permute.xlu0 %2574
        %2578 = vset.pattern.permute.xlu0 0
        %2579 = vperm.xlu0 %2578, %v2245
        %v2580 = vpop.permute.xlu0 %2579
        %2583 = vset.pattern.permute.xlu0 0
        %2584 = vperm.xlu0 %2583, %v2246
        %v2585 = vpop.permute.xlu0 %2584
        %2588 = vset.pattern.permute.xlu0 0
        %2589 = vperm.xlu0 %2588, %v2247
        %v2590 = vpop.permute.xlu0 %2589
        %2593 = vset.pattern.permute.xlu0 0
        %2594 = vperm.xlu0 %2593, %v2248
        %v2595 = vpop.permute.xlu0 %2594
        %2598 = vset.pattern.permute.xlu0 0
        %2599 = vperm.xlu0 %2598, %v2249
        %v2600 = vpop.permute.xlu0 %2599
        %2603 = vset.pattern.permute.xlu0 0
        %2604 = vperm.xlu0 %2603, %v2250
        %v2605 = vpop.permute.xlu0 %2604
        %2608 = vset.pattern.permute.xlu0 0
        %2609 = vperm.xlu0 %2608, %v2251
        %v2610 = vpop.permute.xlu0 %2609
        %2613 = vset.pattern.permute.xlu0 0
        %2614 = vperm.xlu0 %2613, %v2252
        %v2615 = vpop.permute.xlu0 %2614
        %2618 = vset.pattern.permute.xlu0 0
        %2619 = vperm.xlu0 %2618, %v2253
        %v2620 = vpop.permute.xlu0 %2619
        %2623 = vset.pattern.permute.xlu0 0
        %2624 = vperm.xlu0 %2623, %v2254
        %v2625 = vpop.permute.xlu0 %2624
        %2628 = vset.pattern.permute.xlu0 0
        %2629 = vperm.xlu0 %2628, %v2255
        %v2630 = vpop.permute.xlu0 %2629
        %2633 = vset.pattern.permute.xlu0 0
        %2634 = vperm.xlu0 %2633, %v2256
        %v2635 = vpop.permute.xlu0 %2634
        %2638 = vset.pattern.permute.xlu0 0
        %2639 = vperm.xlu0 %2638, %v2257
        %v2640 = vpop.permute.xlu0 %2639
        %v2642 = vmul.f32 %v662, %v2405
        %v2643 = vmul.f32 %v664, %v2405
        %v2644 = vmul.f32 %v666, %v2410
        %v2645 = vmul.f32 %v668, %v2410
        %v2646 = vmul.f32 %v672, %v2415
        %v2647 = vmul.f32 %v674, %v2415
        %v2648 = vmul.f32 %v676, %v2420
        %v2649 = vmul.f32 %v678, %v2420
        %v2650 = vmul.f32 %v682, %v2425
        %v2651 = vmul.f32 %v684, %v2425
        %v2652 = vmul.f32 %v686, %v2430
        %v2653 = vmul.f32 %v688, %v2430
        %v2654 = vmul.f32 %v692, %v2435
        %v2655 = vmul.f32 %v694, %v2435
        %v2656 = vmul.f32 %v696, %v2440
        %v2657 = vmul.f32 %v698, %v2440
        %v2658 = vmul.f32 %v702, %v2445
        %v2659 = vmul.f32 %v704, %v2445
        %v2660 = vmul.f32 %v706, %v2450
        %v2661 = vmul.f32 %v708, %v2450
        %v2662 = vmul.f32 %v712, %v2455
        %v2663 = vmul.f32 %v714, %v2455
        %v2664 = vmul.f32 %v716, %v2460
        %v2665 = vmul.f32 %v718, %v2460
        %v2666 = vmul.f32 %v722, %v2465
        %v2667 = vmul.f32 %v724, %v2465
        %v2668 = vmul.f32 %v726, %v2470
        %v2669 = vmul.f32 %v728, %v2470
        %v2670 = vmul.f32 %v732, %v2475
        %v2671 = vmul.f32 %v734, %v2475
        %v2672 = vmul.f32 %v736, %v2480
        %v2673 = vmul.f32 %v738, %v2480
        %v2674 = vmul.f32 %v742, %v2485
        %v2675 = vmul.f32 %v744, %v2485
        %v2676 = vmul.f32 %v746, %v2490
        %v2677 = vmul.f32 %v748, %v2490
        %v2678 = vmul.f32 %v752, %v2495
        %v2679 = vmul.f32 %v754, %v2495
        %v2680 = vmul.f32 %v756, %v2500
        %v2681 = vmul.f32 %v758, %v2500
        %v2682 = vmul.f32 %v762, %v2505
        %v2683 = vmul.f32 %v764, %v2505
        %v2684 = vmul.f32 %v766, %v2510
        %v2685 = vmul.f32 %v768, %v2510
        %v2686 = vmul.f32 %v772, %v2515
        %v2687 = vmul.f32 %v774, %v2515
        %v2688 = vmul.f32 %v776, %v2520
        %v2689 = vmul.f32 %v778, %v2520
        %v2690 = vmul.f32 %v782, %v2525
        %v2691 = vmul.f32 %v784, %v2525
        %v2692 = vmul.f32 %v786, %v2530
        %v2693 = vmul.f32 %v788, %v2530
        %v2694 = vmul.f32 %v792, %v2535
        %v2695 = vmul.f32 %v794, %v2535
        %v2696 = vmul.f32 %v796, %v2540
        %v2697 = vmul.f32 %v798, %v2540
        %v2698 = vmul.f32 %v802, %v2545
        %v2699 = vmul.f32 %v804, %v2545
        %v2700 = vmul.f32 %v806, %v2550
        %v2701 = vmul.f32 %v808, %v2550
        %v2702 = vmul.f32 %v812, %v2555
        %v2703 = vmul.f32 %v814, %v2555
        %v2704 = vmul.f32 %v816, %v2560
        %v2705 = vmul.f32 %v818, %v2560
        %v2706 = vmul.f32 %v822, %v2565
        %v2707 = vmul.f32 %v824, %v2565
        %v2708 = vmul.f32 %v826, %v2570
        %v2709 = vmul.f32 %v828, %v2570
        %v2710 = vmul.f32 %v832, %v2575
        %v2711 = vmul.f32 %v834, %v2575
        %v2712 = vmul.f32 %v836, %v2580
        %v2713 = vmul.f32 %v838, %v2580
        %v2714 = vmul.f32 %v842, %v2585
        %v2715 = vmul.f32 %v844, %v2585
        %v2716 = vmul.f32 %v846, %v2590
        %v2717 = vmul.f32 %v848, %v2590
        %v2718 = vmul.f32 %v852, %v2595
        %v2719 = vmul.f32 %v854, %v2595
        %v2720 = vmul.f32 %v856, %v2600
        %v2721 = vmul.f32 %v858, %v2600
        %v2722 = vmul.f32 %v862, %v2605
        %v2723 = vmul.f32 %v864, %v2605
        %v2724 = vmul.f32 %v866, %v2610
        %v2725 = vmul.f32 %v868, %v2610
        %v2726 = vmul.f32 %v872, %v2615
        %v2727 = vmul.f32 %v874, %v2615
        %v2728 = vmul.f32 %v876, %v2620
        %v2729 = vmul.f32 %v878, %v2620
        %v2730 = vmul.f32 %v882, %v2625
        %v2731 = vmul.f32 %v884, %v2625
        %v2732 = vmul.f32 %v886, %v2630
        %v2733 = vmul.f32 %v888, %v2630
        %v2734 = vmul.f32 %v892, %v2635
        %v2735 = vmul.f32 %v894, %v2635
        %v2736 = vmul.f32 %v896, %v2640
        %v2737 = vmul.f32 %v898, %v2640
        %2739 = vset.pattern.permute.xlu0 0
        %2740 = vperm.xlu0 %2739, %v2354
        %v2741 = vpop.permute.xlu0 %2740
        %2744 = vset.pattern.permute.xlu0 0
        %2745 = vperm.xlu0 %2744, %v2355
        %v2746 = vpop.permute.xlu0 %2745
        %2749 = vset.pattern.permute.xlu0 0
        %2750 = vperm.xlu0 %2749, %v2356
        %v2751 = vpop.permute.xlu0 %2750
        %2754 = vset.pattern.permute.xlu0 0
        %2755 = vperm.xlu0 %2754, %v2357
        %v2756 = vpop.permute.xlu0 %2755
        %2759 = vset.pattern.permute.xlu0 0
        %2760 = vperm.xlu0 %2759, %v2358
        %v2761 = vpop.permute.xlu0 %2760
        %2764 = vset.pattern.permute.xlu0 0
        %2765 = vperm.xlu0 %2764, %v2359
        %v2766 = vpop.permute.xlu0 %2765
        %2769 = vset.pattern.permute.xlu0 0
        %2770 = vperm.xlu0 %2769, %v2360
        %v2771 = vpop.permute.xlu0 %2770
        %2774 = vset.pattern.permute.xlu0 0
        %2775 = vperm.xlu0 %2774, %v2361
        %v2776 = vpop.permute.xlu0 %2775
        %2779 = vset.pattern.permute.xlu0 0
        %2780 = vperm.xlu0 %2779, %v2362
        %v2781 = vpop.permute.xlu0 %2780
        %2784 = vset.pattern.permute.xlu0 0
        %2785 = vperm.xlu0 %2784, %v2363
        %v2786 = vpop.permute.xlu0 %2785
        %2789 = vset.pattern.permute.xlu0 0
        %2790 = vperm.xlu0 %2789, %v2364
        %v2791 = vpop.permute.xlu0 %2790
        %2794 = vset.pattern.permute.xlu0 0
        %2795 = vperm.xlu0 %2794, %v2365
        %v2796 = vpop.permute.xlu0 %2795
        %2799 = vset.pattern.permute.xlu0 0
        %2800 = vperm.xlu0 %2799, %v2366
        %v2801 = vpop.permute.xlu0 %2800
        %2804 = vset.pattern.permute.xlu0 0
        %2805 = vperm.xlu0 %2804, %v2367
        %v2806 = vpop.permute.xlu0 %2805
        %2809 = vset.pattern.permute.xlu0 0
        %2810 = vperm.xlu0 %2809, %v2368
        %v2811 = vpop.permute.xlu0 %2810
        %2814 = vset.pattern.permute.xlu0 0
        %2815 = vperm.xlu0 %2814, %v2369
        %v2816 = vpop.permute.xlu0 %2815
        %2819 = vset.pattern.permute.xlu0 0
        %2820 = vperm.xlu0 %2819, %v2370
        %v2821 = vpop.permute.xlu0 %2820
        %2824 = vset.pattern.permute.xlu0 0
        %2825 = vperm.xlu0 %2824, %v2371
        %v2826 = vpop.permute.xlu0 %2825
        %2829 = vset.pattern.permute.xlu0 0
        %2830 = vperm.xlu0 %2829, %v2372
        %v2831 = vpop.permute.xlu0 %2830
        %2834 = vset.pattern.permute.xlu0 0
        %2835 = vperm.xlu0 %2834, %v2373
        %v2836 = vpop.permute.xlu0 %2835
        %2839 = vset.pattern.permute.xlu0 0
        %2840 = vperm.xlu0 %2839, %v2374
        %v2841 = vpop.permute.xlu0 %2840
        %2844 = vset.pattern.permute.xlu0 0
        %2845 = vperm.xlu0 %2844, %v2375
        %v2846 = vpop.permute.xlu0 %2845
        %2849 = vset.pattern.permute.xlu0 0
        %2850 = vperm.xlu0 %2849, %v2376
        %v2851 = vpop.permute.xlu0 %2850
        %2854 = vset.pattern.permute.xlu0 0
        %2855 = vperm.xlu0 %2854, %v2377
        %v2856 = vpop.permute.xlu0 %2855
        %2859 = vset.pattern.permute.xlu0 0
        %2860 = vperm.xlu0 %2859, %v2378
        %v2861 = vpop.permute.xlu0 %2860
        %2864 = vset.pattern.permute.xlu0 0
        %2865 = vperm.xlu0 %2864, %v2379
        %v2866 = vpop.permute.xlu0 %2865
        %2869 = vset.pattern.permute.xlu0 0
        %2870 = vperm.xlu0 %2869, %v2380
        %v2871 = vpop.permute.xlu0 %2870
        %2874 = vset.pattern.permute.xlu0 0
        %2875 = vperm.xlu0 %2874, %v2381
        %v2876 = vpop.permute.xlu0 %2875
        %2879 = vset.pattern.permute.xlu0 0
        %2880 = vperm.xlu0 %2879, %v2382
        %v2881 = vpop.permute.xlu0 %2880
        %2884 = vset.pattern.permute.xlu0 0
        %2885 = vperm.xlu0 %2884, %v2383
        %v2886 = vpop.permute.xlu0 %2885
        %2889 = vset.pattern.permute.xlu0 0
        %2890 = vperm.xlu0 %2889, %v2384
        %v2891 = vpop.permute.xlu0 %2890
        %2894 = vset.pattern.permute.xlu0 0
        %2895 = vperm.xlu0 %2894, %v2385
        %v2896 = vpop.permute.xlu0 %2895
        %2899 = vset.pattern.permute.xlu0 0
        %2900 = vperm.xlu0 %2899, %v2386
        %v2901 = vpop.permute.xlu0 %2900
        %2904 = vset.pattern.permute.xlu0 0
        %2905 = vperm.xlu0 %2904, %v2387
        %v2906 = vpop.permute.xlu0 %2905
        %2909 = vset.pattern.permute.xlu0 0
        %2910 = vperm.xlu0 %2909, %v2388
        %v2911 = vpop.permute.xlu0 %2910
        %2914 = vset.pattern.permute.xlu0 0
        %2915 = vperm.xlu0 %2914, %v2389
        %v2916 = vpop.permute.xlu0 %2915
        %2919 = vset.pattern.permute.xlu0 0
        %2920 = vperm.xlu0 %2919, %v2390
        %v2921 = vpop.permute.xlu0 %2920
        %2924 = vset.pattern.permute.xlu0 0
        %2925 = vperm.xlu0 %2924, %v2391
        %v2926 = vpop.permute.xlu0 %2925
        %2929 = vset.pattern.permute.xlu0 0
        %2930 = vperm.xlu0 %2929, %v2392
        %v2931 = vpop.permute.xlu0 %2930
        %2934 = vset.pattern.permute.xlu0 0
        %2935 = vperm.xlu0 %2934, %v2393
        %v2936 = vpop.permute.xlu0 %2935
        %2939 = vset.pattern.permute.xlu0 0
        %2940 = vperm.xlu0 %2939, %v2394
        %v2941 = vpop.permute.xlu0 %2940
        %2944 = vset.pattern.permute.xlu0 0
        %2945 = vperm.xlu0 %2944, %v2395
        %v2946 = vpop.permute.xlu0 %2945
        %2949 = vset.pattern.permute.xlu0 0
        %2950 = vperm.xlu0 %2949, %v2396
        %v2951 = vpop.permute.xlu0 %2950
        %2954 = vset.pattern.permute.xlu0 0
        %2955 = vperm.xlu0 %2954, %v2397
        %v2956 = vpop.permute.xlu0 %2955
        %2959 = vset.pattern.permute.xlu0 0
        %2960 = vperm.xlu0 %2959, %v2398
        %v2961 = vpop.permute.xlu0 %2960
        %2964 = vset.pattern.permute.xlu0 0
        %2965 = vperm.xlu0 %2964, %v2399
        %v2966 = vpop.permute.xlu0 %2965
        %2969 = vset.pattern.permute.xlu0 0
        %2970 = vperm.xlu0 %2969, %v2400
        %v2971 = vpop.permute.xlu0 %2970
        %2974 = vset.pattern.permute.xlu0 0
        %2975 = vperm.xlu0 %2974, %v2401
        %v2976 = vpop.permute.xlu0 %2975
        %v2978 = vadd.f32 %v2642, %v2741
        %v2979 = vadd.f32 %v2643, %v2741
        %v2980 = vadd.f32 %v2644, %v2746
        %v2981 = vadd.f32 %v2645, %v2746
        %v2982 = vadd.f32 %v2646, %v2751
        %v2983 = vadd.f32 %v2647, %v2751
        %v2984 = vadd.f32 %v2648, %v2756
        %v2985 = vadd.f32 %v2649, %v2756
        %v2986 = vadd.f32 %v2650, %v2761
        %v2987 = vadd.f32 %v2651, %v2761
        %v2988 = vadd.f32 %v2652, %v2766
        %v2989 = vadd.f32 %v2653, %v2766
        %v2990 = vadd.f32 %v2654, %v2771
        %v2991 = vadd.f32 %v2655, %v2771
        %v2992 = vadd.f32 %v2656, %v2776
        %v2993 = vadd.f32 %v2657, %v2776
        %v2994 = vadd.f32 %v2658, %v2781
        %v2995 = vadd.f32 %v2659, %v2781
        %v2996 = vadd.f32 %v2660, %v2786
        %v2997 = vadd.f32 %v2661, %v2786
        %v2998 = vadd.f32 %v2662, %v2791
        %v2999 = vadd.f32 %v2663, %v2791
        %v3000 = vadd.f32 %v2664, %v2796
        %v3001 = vadd.f32 %v2665, %v2796
        %v3002 = vadd.f32 %v2666, %v2801
        %v3003 = vadd.f32 %v2667, %v2801
        %v3004 = vadd.f32 %v2668, %v2806
        %v3005 = vadd.f32 %v2669, %v2806
        %v3006 = vadd.f32 %v2670, %v2811
        %v3007 = vadd.f32 %v2671, %v2811
        %v3008 = vadd.f32 %v2672, %v2816
        %v3009 = vadd.f32 %v2673, %v2816
        %v3010 = vadd.f32 %v2674, %v2821
        %v3011 = vadd.f32 %v2675, %v2821
        %v3012 = vadd.f32 %v2676, %v2826
        %v3013 = vadd.f32 %v2677, %v2826
        %v3014 = vadd.f32 %v2678, %v2831
        %v3015 = vadd.f32 %v2679, %v2831
        %v3016 = vadd.f32 %v2680, %v2836
        %v3017 = vadd.f32 %v2681, %v2836
        %v3018 = vadd.f32 %v2682, %v2841
        %v3019 = vadd.f32 %v2683, %v2841
        %v3020 = vadd.f32 %v2684, %v2846
        %v3021 = vadd.f32 %v2685, %v2846
        %v3022 = vadd.f32 %v2686, %v2851
        %v3023 = vadd.f32 %v2687, %v2851
        %v3024 = vadd.f32 %v2688, %v2856
        %v3025 = vadd.f32 %v2689, %v2856
        %v3026 = vadd.f32 %v2690, %v2861
        %v3027 = vadd.f32 %v2691, %v2861
        %v3028 = vadd.f32 %v2692, %v2866
        %v3029 = vadd.f32 %v2693, %v2866
        %v3030 = vadd.f32 %v2694, %v2871
        %v3031 = vadd.f32 %v2695, %v2871
        %v3032 = vadd.f32 %v2696, %v2876
        %v3033 = vadd.f32 %v2697, %v2876
        %v3034 = vadd.f32 %v2698, %v2881
        %v3035 = vadd.f32 %v2699, %v2881
        %v3036 = vadd.f32 %v2700, %v2886
        %v3037 = vadd.f32 %v2701, %v2886
        %v3038 = vadd.f32 %v2702, %v2891
        %v3039 = vadd.f32 %v2703, %v2891
        %v3040 = vadd.f32 %v2704, %v2896
        %v3041 = vadd.f32 %v2705, %v2896
        %v3042 = vadd.f32 %v2706, %v2901
        %v3043 = vadd.f32 %v2707, %v2901
        %v3044 = vadd.f32 %v2708, %v2906
        %v3045 = vadd.f32 %v2709, %v2906
        %v3046 = vadd.f32 %v2710, %v2911
        %v3047 = vadd.f32 %v2711, %v2911
        %v3048 = vadd.f32 %v2712, %v2916
        %v3049 = vadd.f32 %v2713, %v2916
        %v3050 = vadd.f32 %v2714, %v2921
        %v3051 = vadd.f32 %v2715, %v2921
        %v3052 = vadd.f32 %v2716, %v2926
        %v3053 = vadd.f32 %v2717, %v2926
        %v3054 = vadd.f32 %v2718, %v2931
        %v3055 = vadd.f32 %v2719, %v2931
        %v3056 = vadd.f32 %v2720, %v2936
        %v3057 = vadd.f32 %v2721, %v2936
        %v3058 = vadd.f32 %v2722, %v2941
        %v3059 = vadd.f32 %v2723, %v2941
        %v3060 = vadd.f32 %v2724, %v2946
        %v3061 = vadd.f32 %v2725, %v2946
        %v3062 = vadd.f32 %v2726, %v2951
        %v3063 = vadd.f32 %v2727, %v2951
        %v3064 = vadd.f32 %v2728, %v2956
        %v3065 = vadd.f32 %v2729, %v2956
        %v3066 = vadd.f32 %v2730, %v2961
        %v3067 = vadd.f32 %v2731, %v2961
        %v3068 = vadd.f32 %v2732, %v2966
        %v3069 = vadd.f32 %v2733, %v2966
        %v3070 = vadd.f32 %v2734, %v2971
        %v3071 = vadd.f32 %v2735, %v2971
        %v3072 = vadd.f32 %v2736, %v2976
        %v3073 = vadd.f32 %v2737, %v2976
        %v3074 = vld [vmem:[%s322] sm:$0xff]
        %v3075 = vld [vmem:[%s322 + $0x8] sm:$0xff]
        %v3076 = vld [vmem:[%s322 + $0x10] sm:$0xff]
        %v3077 = vld [vmem:[%s322 + $0x18] sm:$0xff]
        %v3078 = vld [vmem:[%s322 + $0x20] sm:$0xff]
        %v3079 = vld [vmem:[%s322 + $0x28] sm:$0xff]
        %v3080 = vld [vmem:[%s322 + $0x30] sm:$0xff]
        %v3081 = vld [vmem:[%s322 + $0x38] sm:$0xff]
        %v3082 = vld [vmem:[%s322 + $0x40] sm:$0xff]
        %v3083 = vld [vmem:[%s322 + $0x48] sm:$0xff]
        %v3084 = vld [vmem:[%s322 + $0x50] sm:$0xff]
        %v3085 = vld [vmem:[%s322 + $0x58] sm:$0xff]
        %v3086 = vld [vmem:[%s322 + $0x60] sm:$0xff]
        %v3087 = vld [vmem:[%s322 + $0x68] sm:$0xff]
        %v3088 = vld [vmem:[%s322 + $0x70] sm:$0xff]
        %v3089 = vld [vmem:[%s322 + $0x78] sm:$0xff]
        %v3090 = vld [vmem:[%s322 + $0x80] sm:$0xff]
        %v3091 = vld [vmem:[%s322 + $0x88] sm:$0xff]
        %v3092 = vld [vmem:[%s322 + $0x90] sm:$0xff]
        %v3093 = vld [vmem:[%s322 + $0x98] sm:$0xff]
        %v3094 = vld [vmem:[%s322 + $0xa0] sm:$0xff]
        %v3095 = vld [vmem:[%s322 + $0xa8] sm:$0xff]
        %v3096 = vld [vmem:[%s322 + $0xb0] sm:$0xff]
        %v3097 = vld [vmem:[%s322 + $0xb8] sm:$0xff]
        %v3098 = vld [vmem:[%s322 + $0xc0] sm:$0xff]
        %v3099 = vld [vmem:[%s322 + $0xc8] sm:$0xff]
        %v3100 = vld [vmem:[%s322 + $0xd0] sm:$0xff]
        %v3101 = vld [vmem:[%s322 + $0xd8] sm:$0xff]
        %v3102 = vld [vmem:[%s322 + $0xe0] sm:$0xff]
        %v3103 = vld [vmem:[%s322 + $0xe8] sm:$0xff]
        %v3104 = vld [vmem:[%s322 + $0xf0] sm:$0xff]
        %v3105 = vld [vmem:[%s322 + $0xf8] sm:$0xff]
        %v3106 = vld [vmem:[%s322 + $0x100] sm:$0xff]
        %v3107 = vld [vmem:[%s322 + $0x108] sm:$0xff]
        %v3108 = vld [vmem:[%s322 + $0x110] sm:$0xff]
        %v3109 = vld [vmem:[%s322 + $0x118] sm:$0xff]
        %v3110 = vld [vmem:[%s322 + $0x120] sm:$0xff]
        %v3111 = vld [vmem:[%s322 + $0x128] sm:$0xff]
        %v3112 = vld [vmem:[%s322 + $0x130] sm:$0xff]
        %v3113 = vld [vmem:[%s322 + $0x138] sm:$0xff]
        %v3114 = vld [vmem:[%s322 + $0x140] sm:$0xff]
        %v3115 = vld [vmem:[%s322 + $0x148] sm:$0xff]
        %v3116 = vld [vmem:[%s322 + $0x150] sm:$0xff]
        %v3117 = vld [vmem:[%s322 + $0x158] sm:$0xff]
        %v3118 = vld [vmem:[%s322 + $0x160] sm:$0xff]
        %v3119 = vld [vmem:[%s322 + $0x168] sm:$0xff]
        %v3120 = vld [vmem:[%s322 + $0x170] sm:$0xff]
        %v3121 = vld [vmem:[%s322 + $0x178] sm:$0xff]
        %v3122 = vld [vmem:[%s322 + $0x180] sm:$0xff]
        %v3123 = vld [vmem:[%s322 + $0x188] sm:$0xff]
        %v3124 = vld [vmem:[%s322 + $0x190] sm:$0xff]
        %v3125 = vld [vmem:[%s322 + $0x198] sm:$0xff]
        %v3126 = vld [vmem:[%s322 + $0x1a0] sm:$0xff]
        %v3127 = vld [vmem:[%s322 + $0x1a8] sm:$0xff]
        %v3128 = vld [vmem:[%s322 + $0x1b0] sm:$0xff]
        %v3129 = vld [vmem:[%s322 + $0x1b8] sm:$0xff]
        %v3130 = vld [vmem:[%s322 + $0x1c0] sm:$0xff]
        %v3131 = vld [vmem:[%s322 + $0x1c8] sm:$0xff]
        %v3132 = vld [vmem:[%s322 + $0x1d0] sm:$0xff]
        %v3133 = vld [vmem:[%s322 + $0x1d8] sm:$0xff]
        %v3134 = vld [vmem:[%s322 + $0x1e0] sm:$0xff]
        %v3135 = vld [vmem:[%s322 + $0x1e8] sm:$0xff]
        %v3136 = vld [vmem:[%s322 + $0x1f0] sm:$0xff]
        %v3137 = vld [vmem:[%s322 + $0x1f8] sm:$0xff]
        %v3138 = vld [vmem:[%s322 + $0x200] sm:$0xff]
        %v3139 = vld [vmem:[%s322 + $0x208] sm:$0xff]
        %v3140 = vld [vmem:[%s322 + $0x210] sm:$0xff]
        %v3141 = vld [vmem:[%s322 + $0x218] sm:$0xff]
        %v3142 = vld [vmem:[%s322 + $0x220] sm:$0xff]
        %v3143 = vld [vmem:[%s322 + $0x228] sm:$0xff]
        %v3144 = vld [vmem:[%s322 + $0x230] sm:$0xff]
        %v3145 = vld [vmem:[%s322 + $0x238] sm:$0xff]
        %v3146 = vld [vmem:[%s322 + $0x240] sm:$0xff]
        %v3147 = vld [vmem:[%s322 + $0x248] sm:$0xff]
        %v3148 = vld [vmem:[%s322 + $0x250] sm:$0xff]
        %v3149 = vld [vmem:[%s322 + $0x258] sm:$0xff]
        %v3150 = vld [vmem:[%s322 + $0x260] sm:$0xff]
        %v3151 = vld [vmem:[%s322 + $0x268] sm:$0xff]
        %v3152 = vld [vmem:[%s322 + $0x270] sm:$0xff]
        %v3153 = vld [vmem:[%s322 + $0x278] sm:$0xff]
        %v3154 = vld [vmem:[%s322 + $0x280] sm:$0xff]
        %v3155 = vld [vmem:[%s322 + $0x288] sm:$0xff]
        %v3156 = vld [vmem:[%s322 + $0x290] sm:$0xff]
        %v3157 = vld [vmem:[%s322 + $0x298] sm:$0xff]
        %v3158 = vld [vmem:[%s322 + $0x2a0] sm:$0xff]
        %v3159 = vld [vmem:[%s322 + $0x2a8] sm:$0xff]
        %v3160 = vld [vmem:[%s322 + $0x2b0] sm:$0xff]
        %v3161 = vld [vmem:[%s322 + $0x2b8] sm:$0xff]
        %v3162 = vld [vmem:[%s322 + $0x2c0] sm:$0xff]
        %v3163 = vld [vmem:[%s322 + $0x2c8] sm:$0xff]
        %v3164 = vld [vmem:[%s322 + $0x2d0] sm:$0xff]
        %v3165 = vld [vmem:[%s322 + $0x2d8] sm:$0xff]
        %v3166 = vld [vmem:[%s322 + $0x2e0] sm:$0xff]
        %v3167 = vld [vmem:[%s322 + $0x2e8] sm:$0xff]
        %v3168 = vld [vmem:[%s322 + $0x2f0] sm:$0xff]
        %v3169 = vld [vmem:[%s322 + $0x2f8] sm:$0xff]
        %v3170 = vadd.f32 %v2978, %v3074
        %v3171 = vadd.f32 %v2979, %v3075
        %v3172 = vadd.f32 %v2980, %v3076
        %v3173 = vadd.f32 %v2981, %v3077
        %v3174 = vadd.f32 %v2982, %v3078
        %v3175 = vadd.f32 %v2983, %v3079
        %v3176 = vadd.f32 %v2984, %v3080
        %v3177 = vadd.f32 %v2985, %v3081
        %v3178 = vadd.f32 %v2986, %v3082
        %v3179 = vadd.f32 %v2987, %v3083
        %v3180 = vadd.f32 %v2988, %v3084
        %v3181 = vadd.f32 %v2989, %v3085
        %v3182 = vadd.f32 %v2990, %v3086
        %v3183 = vadd.f32 %v2991, %v3087
        %v3184 = vadd.f32 %v2992, %v3088
        %v3185 = vadd.f32 %v2993, %v3089
        %v3186 = vadd.f32 %v2994, %v3090
        %v3187 = vadd.f32 %v2995, %v3091
        %v3188 = vadd.f32 %v2996, %v3092
        %v3189 = vadd.f32 %v2997, %v3093
        %v3190 = vadd.f32 %v2998, %v3094
        %v3191 = vadd.f32 %v2999, %v3095
        %v3192 = vadd.f32 %v3000, %v3096
        %v3193 = vadd.f32 %v3001, %v3097
        %v3194 = vadd.f32 %v3002, %v3098
        %v3195 = vadd.f32 %v3003, %v3099
        %v3196 = vadd.f32 %v3004, %v3100
        %v3197 = vadd.f32 %v3005, %v3101
        %v3198 = vadd.f32 %v3006, %v3102
        %v3199 = vadd.f32 %v3007, %v3103
        %v3200 = vadd.f32 %v3008, %v3104
        %v3201 = vadd.f32 %v3009, %v3105
        %v3202 = vadd.f32 %v3010, %v3106
        %v3203 = vadd.f32 %v3011, %v3107
        %v3204 = vadd.f32 %v3012, %v3108
        %v3205 = vadd.f32 %v3013, %v3109
        %v3206 = vadd.f32 %v3014, %v3110
        %v3207 = vadd.f32 %v3015, %v3111
        %v3208 = vadd.f32 %v3016, %v3112
        %v3209 = vadd.f32 %v3017, %v3113
        %v3210 = vadd.f32 %v3018, %v3114
        %v3211 = vadd.f32 %v3019, %v3115
        %v3212 = vadd.f32 %v3020, %v3116
        %v3213 = vadd.f32 %v3021, %v3117
        %v3214 = vadd.f32 %v3022, %v3118
        %v3215 = vadd.f32 %v3023, %v3119
        %v3216 = vadd.f32 %v3024, %v3120
        %v3217 = vadd.f32 %v3025, %v3121
        %v3218 = vadd.f32 %v3026, %v3122
        %v3219 = vadd.f32 %v3027, %v3123
        %v3220 = vadd.f32 %v3028, %v3124
        %v3221 = vadd.f32 %v3029, %v3125
        %v3222 = vadd.f32 %v3030, %v3126
        %v3223 = vadd.f32 %v3031, %v3127
        %v3224 = vadd.f32 %v3032, %v3128
        %v3225 = vadd.f32 %v3033, %v3129
        %v3226 = vadd.f32 %v3034, %v3130
        %v3227 = vadd.f32 %v3035, %v3131
        %v3228 = vadd.f32 %v3036, %v3132
        %v3229 = vadd.f32 %v3037, %v3133
        %v3230 = vadd.f32 %v3038, %v3134
        %v3231 = vadd.f32 %v3039, %v3135
        %v3232 = vadd.f32 %v3040, %v3136
        %v3233 = vadd.f32 %v3041, %v3137
        %v3234 = vadd.f32 %v3042, %v3138
        %v3235 = vadd.f32 %v3043, %v3139
        %v3236 = vadd.f32 %v3044, %v3140
        %v3237 = vadd.f32 %v3045, %v3141
        %v3238 = vadd.f32 %v3046, %v3142
        %v3239 = vadd.f32 %v3047, %v3143
        %v3240 = vadd.f32 %v3048, %v3144
        %v3241 = vadd.f32 %v3049, %v3145
        %v3242 = vadd.f32 %v3050, %v3146
        %v3243 = vadd.f32 %v3051, %v3147
        %v3244 = vadd.f32 %v3052, %v3148
        %v3245 = vadd.f32 %v3053, %v3149
        %v3246 = vadd.f32 %v3054, %v3150
        %v3247 = vadd.f32 %v3055, %v3151
        %v3248 = vadd.f32 %v3056, %v3152
        %v3249 = vadd.f32 %v3057, %v3153
        %v3250 = vadd.f32 %v3058, %v3154
        %v3251 = vadd.f32 %v3059, %v3155
        %v3252 = vadd.f32 %v3060, %v3156
        %v3253 = vadd.f32 %v3061, %v3157
        %v3254 = vadd.f32 %v3062, %v3158
        %v3255 = vadd.f32 %v3063, %v3159
        %v3256 = vadd.f32 %v3064, %v3160
        %v3257 = vadd.f32 %v3065, %v3161
        %v3258 = vadd.f32 %v3066, %v3162
        %v3259 = vadd.f32 %v3067, %v3163
        %v3260 = vadd.f32 %v3068, %v3164
        %v3261 = vadd.f32 %v3069, %v3165
        %v3262 = vadd.f32 %v3070, %v3166
        %v3263 = vadd.f32 %v3071, %v3167
        %v3264 = vadd.f32 %v3072, %v3168
        %v3265 = vadd.f32 %v3073, %v3169
        %v3266 = vmax.f32 %v3170, 0.0
        %v3267 = vmax.f32 %v3171, 0.0
        %v3268 = vmax.f32 %v3172, 0.0
        %v3269 = vmax.f32 %v3173, 0.0
        %v3270 = vmax.f32 %v3174, 0.0
        %v3271 = vmax.f32 %v3175, 0.0
        %v3272 = vmax.f32 %v3176, 0.0
        %v3273 = vmax.f32 %v3177, 0.0
        %v3274 = vmax.f32 %v3178, 0.0
        %v3275 = vmax.f32 %v3179, 0.0
        %v3276 = vmax.f32 %v3180, 0.0
        %v3277 = vmax.f32 %v3181, 0.0
        %v3278 = vmax.f32 %v3182, 0.0
        %v3279 = vmax.f32 %v3183, 0.0
        %v3280 = vmax.f32 %v3184, 0.0
        %v3281 = vmax.f32 %v3185, 0.0
        %v3282 = vmax.f32 %v3186, 0.0
        %v3283 = vmax.f32 %v3187, 0.0
        %v3284 = vmax.f32 %v3188, 0.0
        %v3285 = vmax.f32 %v3189, 0.0
        %v3286 = vmax.f32 %v3190, 0.0
        %v3287 = vmax.f32 %v3191, 0.0
        %v3288 = vmax.f32 %v3192, 0.0
        %v3289 = vmax.f32 %v3193, 0.0
        %v3290 = vmax.f32 %v3194, 0.0
        %v3291 = vmax.f32 %v3195, 0.0
        %v3292 = vmax.f32 %v3196, 0.0
        %v3293 = vmax.f32 %v3197, 0.0
        %v3294 = vmax.f32 %v3198, 0.0
        %v3295 = vmax.f32 %v3199, 0.0
        %v3296 = vmax.f32 %v3200, 0.0
        %v3297 = vmax.f32 %v3201, 0.0
        %v3298 = vmax.f32 %v3202, 0.0
        %v3299 = vmax.f32 %v3203, 0.0
        %v3300 = vmax.f32 %v3204, 0.0
        %v3301 = vmax.f32 %v3205, 0.0
        %v3302 = vmax.f32 %v3206, 0.0
        %v3303 = vmax.f32 %v3207, 0.0
        %v3304 = vmax.f32 %v3208, 0.0
        %v3305 = vmax.f32 %v3209, 0.0
        %v3306 = vmax.f32 %v3210, 0.0
        %v3307 = vmax.f32 %v3211, 0.0
        %v3308 = vmax.f32 %v3212, 0.0
        %v3309 = vmax.f32 %v3213, 0.0
        %v3310 = vmax.f32 %v3214, 0.0
        %v3311 = vmax.f32 %v3215, 0.0
        %v3312 = vmax.f32 %v3216, 0.0
        %v3313 = vmax.f32 %v3217, 0.0
        %v3314 = vmax.f32 %v3218, 0.0
        %v3315 = vmax.f32 %v3219, 0.0
        %v3316 = vmax.f32 %v3220, 0.0
        %v3317 = vmax.f32 %v3221, 0.0
        %v3318 = vmax.f32 %v3222, 0.0
        %v3319 = vmax.f32 %v3223, 0.0
        %v3320 = vmax.f32 %v3224, 0.0
        %v3321 = vmax.f32 %v3225, 0.0
        %v3322 = vmax.f32 %v3226, 0.0
        %v3323 = vmax.f32 %v3227, 0.0
        %v3324 = vmax.f32 %v3228, 0.0
        %v3325 = vmax.f32 %v3229, 0.0
        %v3326 = vmax.f32 %v3230, 0.0
        %v3327 = vmax.f32 %v3231, 0.0
        %v3328 = vmax.f32 %v3232, 0.0
        %v3329 = vmax.f32 %v3233, 0.0
        %v3330 = vmax.f32 %v3234, 0.0
        %v3331 = vmax.f32 %v3235, 0.0
        %v3332 = vmax.f32 %v3236, 0.0
        %v3333 = vmax.f32 %v3237, 0.0
        %v3334 = vmax.f32 %v3238, 0.0
        %v3335 = vmax.f32 %v3239, 0.0
        %v3336 = vmax.f32 %v3240, 0.0
        %v3337 = vmax.f32 %v3241, 0.0
        %v3338 = vmax.f32 %v3242, 0.0
        %v3339 = vmax.f32 %v3243, 0.0
        %v3340 = vmax.f32 %v3244, 0.0
        %v3341 = vmax.f32 %v3245, 0.0
        %v3342 = vmax.f32 %v3246, 0.0
        %v3343 = vmax.f32 %v3247, 0.0
        %v3344 = vmax.f32 %v3248, 0.0
        %v3345 = vmax.f32 %v3249, 0.0
        %v3346 = vmax.f32 %v3250, 0.0
        %v3347 = vmax.f32 %v3251, 0.0
        %v3348 = vmax.f32 %v3252, 0.0
        %v3349 = vmax.f32 %v3253, 0.0
        %v3350 = vmax.f32 %v3254, 0.0
        %v3351 = vmax.f32 %v3255, 0.0
        %v3352 = vmax.f32 %v3256, 0.0
        %v3353 = vmax.f32 %v3257, 0.0
        %v3354 = vmax.f32 %v3258, 0.0
        %v3355 = vmax.f32 %v3259, 0.0
        %v3356 = vmax.f32 %v3260, 0.0
        %v3357 = vmax.f32 %v3261, 0.0
        %v3358 = vmax.f32 %v3262, 0.0
        %v3359 = vmax.f32 %v3263, 0.0
        %v3360 = vmax.f32 %v3264, 0.0
        %v3361 = vmax.f32 %v3265, 0.0
        %v3362 = vld [vmem:[%s5] sm:$0xff]
        %v3363 = vld [vmem:[%s5 + $0x8] sm:$0xf]
        %v3364 = vld [vmem:[%s5 + $0xc] sm:$0xff]
        %v3365 = vld [vmem:[%s5 + $0x14] sm:$0xf]
        %v3366 = vld [vmem:[%s5 + $0x18] sm:$0xff]
        %v3367 = vld [vmem:[%s5 + $0x20] sm:$0xf]
        %v3368 = vld [vmem:[%s5 + $0x24] sm:$0xff]
        %v3369 = vld [vmem:[%s5 + $0x2c] sm:$0xf]
        %v3370 = vld [vmem:[%s5 + $0x30] sm:$0xff]
        %v3371 = vld [vmem:[%s5 + $0x38] sm:$0xf]
        %v3372 = vld [vmem:[%s5 + $0x3c] sm:$0xff]
        %v3373 = vld [vmem:[%s5 + $0x44] sm:$0xf]
        %v3374 = vld [vmem:[%s5 + $0x48] sm:$0xff]
        %v3375 = vld [vmem:[%s5 + $0x50] sm:$0xf]
        %v3376 = vld [vmem:[%s5 + $0x54] sm:$0xff]
        %v3377 = vld [vmem:[%s5 + $0x5c] sm:$0xf]
        %v3378 = vld [vmem:[%s5 + $0x60] sm:$0xff]
        %v3379 = vld [vmem:[%s5 + $0x68] sm:$0xf]
        %v3380 = vld [vmem:[%s5 + $0x6c] sm:$0xff]
        %v3381 = vld [vmem:[%s5 + $0x74] sm:$0xf]
        %v3382 = vld [vmem:[%s5 + $0x78] sm:$0xff]
        %v3383 = vld [vmem:[%s5 + $0x80] sm:$0xf]
        %v3384 = vld [vmem:[%s5 + $0x84] sm:$0xff]
        %v3385 = vld [vmem:[%s5 + $0x8c] sm:$0xf]
        %v3386 = vld [vmem:[%s5 + $0x90] sm:$0xff]
        %v3387 = vld [vmem:[%s5 + $0x98] sm:$0xf]
        %v3388 = vld [vmem:[%s5 + $0x9c] sm:$0xff]
        %v3389 = vld [vmem:[%s5 + $0xa4] sm:$0xf]
        %v3390 = vld [vmem:[%s5 + $0xa8] sm:$0xff]
        %v3391 = vld [vmem:[%s5 + $0xb0] sm:$0xf]
        %v3392 = vld [vmem:[%s5 + $0xb4] sm:$0xff]
        %v3393 = vld [vmem:[%s5 + $0xbc] sm:$0xf]
        %v3394 = vld [vmem:[%s5 + $0xc0] sm:$0xff]
        %v3395 = vld [vmem:[%s5 + $0xc8] sm:$0xf]
        %v3396 = vld [vmem:[%s5 + $0xcc] sm:$0xff]
        %v3397 = vld [vmem:[%s5 + $0xd4] sm:$0xf]
        %v3398 = vld [vmem:[%s5 + $0xd8] sm:$0xff]
        %v3399 = vld [vmem:[%s5 + $0xe0] sm:$0xf]
        %v3400 = vld [vmem:[%s5 + $0xe4] sm:$0xff]
        %v3401 = vld [vmem:[%s5 + $0xec] sm:$0xf]
        %v3402 = vld [vmem:[%s5 + $0xf0] sm:$0xff]
        %v3403 = vld [vmem:[%s5 + $0xf8] sm:$0xf]
        %v3404 = vld [vmem:[%s5 + $0xfc] sm:$0xff]
        %v3405 = vld [vmem:[%s5 + $0x104] sm:$0xf]
        %v3406 = vld [vmem:[%s5 + $0x108] sm:$0xff]
        %v3407 = vld [vmem:[%s5 + $0x110] sm:$0xf]
        %v3408 = vld [vmem:[%s5 + $0x114] sm:$0xff]
        %v3409 = vld [vmem:[%s5 + $0x11c] sm:$0xf]
        %v3410 = vld [vmem:[%s5 + $0x120] sm:$0xff]
        %v3411 = vld [vmem:[%s5 + $0x128] sm:$0xf]
        %v3412 = vld [vmem:[%s5 + $0x12c] sm:$0xff]
        %v3413 = vld [vmem:[%s5 + $0x134] sm:$0xf]
        %v3414 = vld [vmem:[%s5 + $0x138] sm:$0xff]
        %v3415 = vld [vmem:[%s5 + $0x140] sm:$0xf]
        %v3416 = vld [vmem:[%s5 + $0x144] sm:$0xff]
        %v3417 = vld [vmem:[%s5 + $0x14c] sm:$0xf]
        %v3418 = vld [vmem:[%s5 + $0x150] sm:$0xff]
        %v3419 = vld [vmem:[%s5 + $0x158] sm:$0xf]
        %v3420 = vld [vmem:[%s5 + $0x15c] sm:$0xff]
        %v3421 = vld [vmem:[%s5 + $0x164] sm:$0xf]
        %v3422 = vld [vmem:[%s5 + $0x168] sm:$0xff]
        %v3423 = vld [vmem:[%s5 + $0x170] sm:$0xf]
        %v3424 = vld [vmem:[%s5 + $0x174] sm:$0xff]
        %v3425 = vld [vmem:[%s5 + $0x17c] sm:$0xf]
        %v3426 = vld [vmem:[%s5 + $0x180] sm:$0xff]
        %v3427 = vld [vmem:[%s5 + $0x188] sm:$0xf]
        %v3428 = vld [vmem:[%s5 + $0x18c] sm:$0xff]
        %v3429 = vld [vmem:[%s5 + $0x194] sm:$0xf]
        %v3430 = vld [vmem:[%s5 + $0x198] sm:$0xff]
        %v3431 = vld [vmem:[%s5 + $0x1a0] sm:$0xf]
        %v3432 = vld [vmem:[%s5 + $0x1a4] sm:$0xff]
        %v3433 = vld [vmem:[%s5 + $0x1ac] sm:$0xf]
        %v3434 = vld [vmem:[%s5 + $0x1b0] sm:$0xff]
        %v3435 = vld [vmem:[%s5 + $0x1b8] sm:$0xf]
        %v3436 = vld [vmem:[%s5 + $0x1bc] sm:$0xff]
        %v3437 = vld [vmem:[%s5 + $0x1c4] sm:$0xf]
        %v3438 = vld [vmem:[%s5 + $0x1c8] sm:$0xff]
        %v3439 = vld [vmem:[%s5 + $0x1d0] sm:$0xf]
        %v3440 = vld [vmem:[%s5 + $0x1d4] sm:$0xff]
        %v3441 = vld [vmem:[%s5 + $0x1dc] sm:$0xf]
        %v3442 = vld [vmem:[%s5 + $0x1e0] sm:$0xff]
        %v3443 = vld [vmem:[%s5 + $0x1e8] sm:$0xf]
        %v3444 = vld [vmem:[%s5 + $0x1ec] sm:$0xff]
        %v3445 = vld [vmem:[%s5 + $0x1f4] sm:$0xf]
        %v3446 = vld [vmem:[%s5 + $0x1f8] sm:$0xff]
        %v3447 = vld [vmem:[%s5 + $0x200] sm:$0xf]
        %v3448 = vld [vmem:[%s5 + $0x204] sm:$0xff]
        %v3449 = vld [vmem:[%s5 + $0x20c] sm:$0xf]
        %v3450 = vld [vmem:[%s5 + $0x210] sm:$0xff]
        %v3451 = vld [vmem:[%s5 + $0x218] sm:$0xf]
        %v3452 = vld [vmem:[%s5 + $0x21c] sm:$0xff]
        %v3453 = vld [vmem:[%s5 + $0x224] sm:$0xf]
        %v3454 = vld [vmem:[%s5 + $0x228] sm:$0xff]
        %v3455 = vld [vmem:[%s5 + $0x230] sm:$0xf]
        %v3456 = vld [vmem:[%s5 + $0x234] sm:$0xff]
        %v3457 = vld [vmem:[%s5 + $0x23c] sm:$0xf]
        %v3458 = vpack.c.bf16 %v3268, %v3266
        %v3459 = vpack.c.bf16 %v3269, %v3267
        %v3460 = vpack.c.bf16 %v3272, %v3270
        %v3461 = vpack.c.bf16 %v3273, %v3271
        %v3462 = vpack.c.bf16 %v3276, %v3274
        %v3463 = vpack.c.bf16 %v3277, %v3275
        %v3464 = vpack.c.bf16 %v3280, %v3278
        %v3465 = vpack.c.bf16 %v3281, %v3279
        %v3466 = vpack.c.bf16 %v3284, %v3282
        %v3467 = vpack.c.bf16 %v3285, %v3283
        %v3468 = vpack.c.bf16 %v3288, %v3286
        %v3469 = vpack.c.bf16 %v3289, %v3287
        %v3470 = vpack.c.bf16 %v3292, %v3290
        %v3471 = vpack.c.bf16 %v3293, %v3291
        %v3472 = vpack.c.bf16 %v3296, %v3294
        %v3473 = vpack.c.bf16 %v3297, %v3295
        %v3474 = vpack.c.bf16 %v3300, %v3298
        %v3475 = vpack.c.bf16 %v3301, %v3299
        %v3476 = vpack.c.bf16 %v3304, %v3302
        %v3477 = vpack.c.bf16 %v3305, %v3303
        %v3478 = vpack.c.bf16 %v3308, %v3306
        %v3479 = vpack.c.bf16 %v3309, %v3307
        %v3480 = vpack.c.bf16 %v3312, %v3310
        %v3481 = vpack.c.bf16 %v3313, %v3311
        %v3482 = vpack.c.bf16 %v3316, %v3314
        %v3483 = vpack.c.bf16 %v3317, %v3315
        %v3484 = vpack.c.bf16 %v3320, %v3318
        %v3485 = vpack.c.bf16 %v3321, %v3319
        %v3486 = vpack.c.bf16 %v3324, %v3322
        %v3487 = vpack.c.bf16 %v3325, %v3323
        %v3488 = vpack.c.bf16 %v3328, %v3326
        %v3489 = vpack.c.bf16 %v3329, %v3327
        %v3490 = vpack.c.bf16 %v3332, %v3330
        %v3491 = vpack.c.bf16 %v3333, %v3331
        %v3492 = vpack.c.bf16 %v3336, %v3334
        %v3493 = vpack.c.bf16 %v3337, %v3335
        %v3494 = vpack.c.bf16 %v3340, %v3338
        %v3495 = vpack.c.bf16 %v3341, %v3339
        %v3496 = vpack.c.bf16 %v3344, %v3342
        %v3497 = vpack.c.bf16 %v3345, %v3343
        %v3498 = vpack.c.bf16 %v3348, %v3346
        %v3499 = vpack.c.bf16 %v3349, %v3347
        %v3500 = vpack.c.bf16 %v3352, %v3350
        %v3501 = vpack.c.bf16 %v3353, %v3351
        %v3502 = vpack.c.bf16 %v3356, %v3354
        %v3503 = vpack.c.bf16 %v3357, %v3355
        %v3504 = vpack.c.bf16 %v3360, %v3358
        %v3505 = vpack.c.bf16 %v3361, %v3359
        %v3602 = vunpack.c.l.b16 %v3362
        %v3603 = vunpack.c.h.b16 %v3362
        %v3604 = vunpack.c.l.b16 %v3363
        %v3605 = vunpack.c.l.b16 %v3364
        %v3606 = vunpack.c.h.b16 %v3364
        %v3607 = vunpack.c.l.b16 %v3365
        %v3608 = vunpack.c.l.b16 %v3366
        %v3609 = vunpack.c.h.b16 %v3366
        %v3610 = vunpack.c.l.b16 %v3367
        %v3611 = vunpack.c.l.b16 %v3368
        %v3612 = vunpack.c.h.b16 %v3368
        %v3613 = vunpack.c.l.b16 %v3369
        %v3614 = vunpack.c.l.b16 %v3370
        %v3615 = vunpack.c.h.b16 %v3370
        %v3616 = vunpack.c.l.b16 %v3371
        %v3617 = vunpack.c.l.b16 %v3372
        %v3618 = vunpack.c.h.b16 %v3372
        %v3619 = vunpack.c.l.b16 %v3373
        %v3620 = vunpack.c.l.b16 %v3374
        %v3621 = vunpack.c.h.b16 %v3374
        %v3622 = vunpack.c.l.b16 %v3375
        %v3623 = vunpack.c.l.b16 %v3376
        %v3624 = vunpack.c.h.b16 %v3376
        %v3625 = vunpack.c.l.b16 %v3377
        %v3626 = vunpack.c.l.b16 %v3378
        %v3627 = vunpack.c.h.b16 %v3378
        %v3628 = vunpack.c.l.b16 %v3379
        %v3629 = vunpack.c.l.b16 %v3380
        %v3630 = vunpack.c.h.b16 %v3380
        %v3631 = vunpack.c.l.b16 %v3381
        %v3632 = vunpack.c.l.b16 %v3382
        %v3633 = vunpack.c.h.b16 %v3382
        %v3634 = vunpack.c.l.b16 %v3383
        %v3635 = vunpack.c.l.b16 %v3384
        %v3636 = vunpack.c.h.b16 %v3384
        %v3637 = vunpack.c.l.b16 %v3385
        %v3638 = vunpack.c.l.b16 %v3386
        %v3639 = vunpack.c.h.b16 %v3386
        %v3640 = vunpack.c.l.b16 %v3387
        %v3641 = vunpack.c.l.b16 %v3388
        %v3642 = vunpack.c.h.b16 %v3388
        %v3643 = vunpack.c.l.b16 %v3389
        %v3644 = vunpack.c.l.b16 %v3390
        %v3645 = vunpack.c.h.b16 %v3390
        %v3646 = vunpack.c.l.b16 %v3391
        %v3647 = vunpack.c.l.b16 %v3392
        %v3648 = vunpack.c.h.b16 %v3392
        %v3649 = vunpack.c.l.b16 %v3393
        %v3650 = vunpack.c.l.b16 %v3394
        %v3651 = vunpack.c.h.b16 %v3394
        %v3652 = vunpack.c.l.b16 %v3395
        %v3653 = vunpack.c.l.b16 %v3396
        %v3654 = vunpack.c.h.b16 %v3396
        %v3655 = vunpack.c.l.b16 %v3397
        %v3656 = vunpack.c.l.b16 %v3398
        %v3657 = vunpack.c.h.b16 %v3398
        %v3658 = vunpack.c.l.b16 %v3399
        %v3659 = vunpack.c.l.b16 %v3400
        %v3660 = vunpack.c.h.b16 %v3400
        %v3661 = vunpack.c.l.b16 %v3401
        %v3662 = vunpack.c.l.b16 %v3402
        %v3663 = vunpack.c.h.b16 %v3402
        %v3664 = vunpack.c.l.b16 %v3403
        %v3665 = vunpack.c.l.b16 %v3404
        %v3666 = vunpack.c.h.b16 %v3404
        %v3667 = vunpack.c.l.b16 %v3405
        %v3668 = vunpack.c.l.b16 %v3406
        %v3669 = vunpack.c.h.b16 %v3406
        %v3670 = vunpack.c.l.b16 %v3407
        %v3671 = vunpack.c.l.b16 %v3408
        %v3672 = vunpack.c.h.b16 %v3408
        %v3673 = vunpack.c.l.b16 %v3409
        %v3674 = vunpack.c.l.b16 %v3410
        %v3675 = vunpack.c.h.b16 %v3410
        %v3676 = vunpack.c.l.b16 %v3411
        %v3677 = vunpack.c.l.b16 %v3412
        %v3678 = vunpack.c.h.b16 %v3412
        %v3679 = vunpack.c.l.b16 %v3413
        %v3680 = vunpack.c.l.b16 %v3414
        %v3681 = vunpack.c.h.b16 %v3414
        %v3682 = vunpack.c.l.b16 %v3415
        %v3683 = vunpack.c.l.b16 %v3416
        %v3684 = vunpack.c.h.b16 %v3416
        %v3685 = vunpack.c.l.b16 %v3417
        %v3686 = vunpack.c.l.b16 %v3418
        %v3687 = vunpack.c.h.b16 %v3418
        %v3688 = vunpack.c.l.b16 %v3419
        %v3689 = vunpack.c.l.b16 %v3420
        %v3690 = vunpack.c.h.b16 %v3420
        %v3691 = vunpack.c.l.b16 %v3421
        %v3692 = vunpack.c.l.b16 %v3422
        %v3693 = vunpack.c.h.b16 %v3422
        %v3694 = vunpack.c.l.b16 %v3423
        %v3695 = vunpack.c.l.b16 %v3424
        %v3696 = vunpack.c.h.b16 %v3424
        %v3697 = vunpack.c.l.b16 %v3425
        %v3698 = vunpack.c.l.b16 %v3426
        %v3699 = vunpack.c.h.b16 %v3426
        %v3700 = vunpack.c.l.b16 %v3427
        %v3701 = vunpack.c.l.b16 %v3428
        %v3702 = vunpack.c.h.b16 %v3428
        %v3703 = vunpack.c.l.b16 %v3429
        %v3704 = vunpack.c.l.b16 %v3430
        %v3705 = vunpack.c.h.b16 %v3430
        %v3706 = vunpack.c.l.b16 %v3431
        %v3707 = vunpack.c.l.b16 %v3432
        %v3708 = vunpack.c.h.b16 %v3432
        %v3709 = vunpack.c.l.b16 %v3433
        %v3710 = vunpack.c.l.b16 %v3434
        %v3711 = vunpack.c.h.b16 %v3434
        %v3712 = vunpack.c.l.b16 %v3435
        %v3713 = vunpack.c.l.b16 %v3436
        %v3714 = vunpack.c.h.b16 %v3436
        %v3715 = vunpack.c.l.b16 %v3437
        %v3716 = vunpack.c.l.b16 %v3438
        %v3717 = vunpack.c.h.b16 %v3438
        %v3718 = vunpack.c.l.b16 %v3439
        %v3719 = vunpack.c.l.b16 %v3440
        %v3720 = vunpack.c.h.b16 %v3440
        %v3721 = vunpack.c.l.b16 %v3441
        %v3722 = vunpack.c.l.b16 %v3442
        %v3723 = vunpack.c.h.b16 %v3442
        %v3724 = vunpack.c.l.b16 %v3443
        %v3725 = vunpack.c.l.b16 %v3444
        %v3726 = vunpack.c.h.b16 %v3444
        %v3727 = vunpack.c.l.b16 %v3445
        %v3728 = vunpack.c.l.b16 %v3446
        %v3729 = vunpack.c.h.b16 %v3446
        %v3730 = vunpack.c.l.b16 %v3447
        %v3731 = vunpack.c.l.b16 %v3448
        %v3732 = vunpack.c.h.b16 %v3448
        %v3733 = vunpack.c.l.b16 %v3449
        %v3734 = vunpack.c.l.b16 %v3450
        %v3735 = vunpack.c.h.b16 %v3450
        %v3736 = vunpack.c.l.b16 %v3451
        %v3737 = vunpack.c.l.b16 %v3452
        %v3738 = vunpack.c.h.b16 %v3452
        %v3739 = vunpack.c.l.b16 %v3453
        %v3740 = vunpack.c.l.b16 %v3454
        %v3741 = vunpack.c.h.b16 %v3454
        %v3742 = vunpack.c.l.b16 %v3455
        %v3743 = vunpack.c.l.b16 %v3456
        %v3744 = vunpack.c.h.b16 %v3456
        %v3745 = vunpack.c.l.b16 %v3457
        %v3746 = vpack.c.b16 %v3605, %v3602
        %v3747 = vpack.c.b16 %v3606, %v3603
        %v3748 = vpack.c.b16 %v3607, %v3604
        %v3749 = vpack.c.b16 %v3611, %v3608
        %v3750 = vpack.c.b16 %v3612, %v3609
        %v3751 = vpack.c.b16 %v3613, %v3610
        %v3752 = vpack.c.b16 %v3617, %v3614
        %v3753 = vpack.c.b16 %v3618, %v3615
        %v3754 = vpack.c.b16 %v3619, %v3616
        %v3755 = vpack.c.b16 %v3623, %v3620
        %v3756 = vpack.c.b16 %v3624, %v3621
        %v3757 = vpack.c.b16 %v3625, %v3622
        %v3758 = vpack.c.b16 %v3629, %v3626
        %v3759 = vpack.c.b16 %v3630, %v3627
        %v3760 = vpack.c.b16 %v3631, %v3628
        %v3761 = vpack.c.b16 %v3635, %v3632
        %v3762 = vpack.c.b16 %v3636, %v3633
        %v3763 = vpack.c.b16 %v3637, %v3634
        %v3764 = vpack.c.b16 %v3641, %v3638
        %v3765 = vpack.c.b16 %v3642, %v3639
        %v3766 = vpack.c.b16 %v3643, %v3640
        %v3767 = vpack.c.b16 %v3647, %v3644
        %v3768 = vpack.c.b16 %v3648, %v3645
        %v3769 = vpack.c.b16 %v3649, %v3646
        %v3770 = vpack.c.b16 %v3653, %v3650
        %v3771 = vpack.c.b16 %v3654, %v3651
        %v3772 = vpack.c.b16 %v3655, %v3652
        %v3773 = vpack.c.b16 %v3659, %v3656
        %v3774 = vpack.c.b16 %v3660, %v3657
        %v3775 = vpack.c.b16 %v3661, %v3658
        %v3776 = vpack.c.b16 %v3665, %v3662
        %v3777 = vpack.c.b16 %v3666, %v3663
        %v3778 = vpack.c.b16 %v3667, %v3664
        %v3779 = vpack.c.b16 %v3671, %v3668
        %v3780 = vpack.c.b16 %v3672, %v3669
        %v3781 = vpack.c.b16 %v3673, %v3670
        %v3782 = vpack.c.b16 %v3677, %v3674
        %v3783 = vpack.c.b16 %v3678, %v3675
        %v3784 = vpack.c.b16 %v3679, %v3676
        %v3785 = vpack.c.b16 %v3683, %v3680
        %v3786 = vpack.c.b16 %v3684, %v3681
        %v3787 = vpack.c.b16 %v3685, %v3682
        %v3788 = vpack.c.b16 %v3689, %v3686
        %v3789 = vpack.c.b16 %v3690, %v3687
        %v3790 = vpack.c.b16 %v3691, %v3688
        %v3791 = vpack.c.b16 %v3695, %v3692
        %v3792 = vpack.c.b16 %v3696, %v3693
        %v3793 = vpack.c.b16 %v3697, %v3694
        %v3794 = vpack.c.b16 %v3701, %v3698
        %v3795 = vpack.c.b16 %v3702, %v3699
        %v3796 = vpack.c.b16 %v3703, %v3700
        %v3797 = vpack.c.b16 %v3707, %v3704
        %v3798 = vpack.c.b16 %v3708, %v3705
        %v3799 = vpack.c.b16 %v3709, %v3706
        %v3800 = vpack.c.b16 %v3713, %v3710
        %v3801 = vpack.c.b16 %v3714, %v3711
        %v3802 = vpack.c.b16 %v3715, %v3712
        %v3803 = vpack.c.b16 %v3719, %v3716
        %v3804 = vpack.c.b16 %v3720, %v3717
        %v3805 = vpack.c.b16 %v3721, %v3718
        %v3806 = vpack.c.b16 %v3725, %v3722
        %v3807 = vpack.c.b16 %v3726, %v3723
        %v3808 = vpack.c.b16 %v3727, %v3724
        %v3809 = vpack.c.b16 %v3731, %v3728
        %v3810 = vpack.c.b16 %v3732, %v3729
        %v3811 = vpack.c.b16 %v3733, %v3730
        %v3812 = vpack.c.b16 %v3737, %v3734
        %v3813 = vpack.c.b16 %v3738, %v3735
        %v3814 = vpack.c.b16 %v3739, %v3736
        %v3815 = vpack.c.b16 %v3743, %v3740
        %v3816 = vpack.c.b16 %v3744, %v3741
        %v3817 = vpack.c.b16 %v3745, %v3742
        %3890 = vmatprep.subr.bf16.mxu0 %v3459
        %3891 = vmatpush1.bf16.msra.mxu0 %v3458
        %3892 = vmatprep.subr.bf16.mxu0 %v3461
        %3893 = vmatpush1.bf16.msra.mxu0 %v3460
        %3894 = vmatprep.subr.bf16.mxu0 %v3463
        %3895 = vmatpush1.bf16.msra.mxu0 %v3462
        %3896 = vmatprep.subr.bf16.mxu0 %v3465
        %3897 = vmatpush1.bf16.msra.mxu0 %v3464
        %3898 = vmatprep.subr.bf16.mxu0 %v3467
        %3899 = vmatpush1.bf16.msra.mxu0 %v3466
        %3900 = vmatprep.subr.bf16.mxu0 %v3469
        %3901 = vmatpush1.bf16.msra.mxu0 %v3468
        %3902 = vmatprep.subr.bf16.mxu0 %v3471
        %3903 = vmatpush1.bf16.msra.mxu0 %v3470
        %3904 = vmatprep.subr.bf16.mxu0 %v3473
        %3905 = vmatpush1.bf16.msra.mxu0 %v3472
        %3906 = vmatprep.subr.bf16.mxu0 %v3475
        %3907 = vmatpush1.bf16.msra.mxu0 %v3474
        %3908 = vmatprep.subr.bf16.mxu0 %v3477
        %3909 = vmatpush1.bf16.msra.mxu0 %v3476
        %3910 = vmatprep.subr.bf16.mxu0 %v3479
        %3911 = vmatpush1.bf16.msra.mxu0 %v3478
        %3912 = vmatprep.subr.bf16.mxu0 %v3481
        %3913 = vmatpush1.bf16.msra.mxu0 %v3480
        %3914 = vmatprep.subr.bf16.mxu0 %v3483
        %3915 = vmatpush1.bf16.msra.mxu0 %v3482
        %3916 = vmatprep.subr.bf16.mxu0 %v3485
        %3917 = vmatpush1.bf16.msra.mxu0 %v3484
        %3918 = vmatprep.subr.bf16.mxu0 %v3487
        %3919 = vmatpush1.bf16.msra.mxu0 %v3486
        %3920 = vmatprep.subr.bf16.mxu0 %v3489
        %3921 = vmatpush1.bf16.msra.mxu0 %v3488
        %3922 = vmatprep.mubr.bf16.mxu0 %v3747
        %3923 = vmatmul.mubr.bf16.gmra.mrb[0].mxu0 %v3746
        %v3924 = vpop.f32.mrb[0].mxu0
        %v3925 = vadd.f32 0.0, %v3924
        %v3926 = vpop.f32.mrb[0].mxu0
        %v3927 = vadd.f32 0.0, %v3926
        %v3928 = vpop.f32.mrb[0].mxu0
        %v3929 = vadd.f32 0.0, %v3928
        %v3930 = vpop.f32.mrb[0].mxu0
        %v3931 = vadd.f32 0.0, %v3930
        %3932 = vmatprep.mubr.bf16.mxu0 %v3750
        %3933 = vmatmul.mubr.bf16.gmra.mrb[0].mxu0 %v3749
        %v3934 = vpop.f32.mrb[0].mxu0
        %v3935 = vadd.f32 0.0, %v3934
        %v3936 = vpop.f32.mrb[0].mxu0
        %v3937 = vadd.f32 0.0, %v3936
        %v3938 = vpop.f32.mrb[0].mxu0
        %v3939 = vadd.f32 0.0, %v3938
        %v3940 = vpop.f32.mrb[0].mxu0
        %v3941 = vadd.f32 0.0, %v3940
        %3942 = vmatprep.mubr.bf16.mxu0 %v3753
        %3943 = vmatmul.mubr.bf16.gmra.mrb[0].mxu0 %v3752
        %v3944 = vpop.f32.mrb[0].mxu0
        %v3945 = vadd.f32 0.0, %v3944
        %v3946 = vpop.f32.mrb[0].mxu0
        %v3947 = vadd.f32 0.0, %v3946
        %v3948 = vpop.f32.mrb[0].mxu0
        %v3949 = vadd.f32 0.0, %v3948
        %v3950 = vpop.f32.mrb[0].mxu0
        %v3951 = vadd.f32 0.0, %v3950
        %3952 = vmatprep.mubr.bf16.mxu0 %v3756
        %3953 = vmatmul.mubr.bf16.gmra.mrb[0].mxu0 %v3755
        %v3954 = vpop.f32.mrb[0].mxu0
        %v3955 = vadd.f32 0.0, %v3954
        %v3956 = vpop.f32.mrb[0].mxu0
        %v3957 = vadd.f32 0.0, %v3956
        %v3958 = vpop.f32.mrb[0].mxu0
        %v3959 = vadd.f32 0.0, %v3958
        %v3960 = vpop.f32.mrb[0].mxu0
        %v3961 = vadd.f32 0.0, %v3960
        %3962 = vmatprep.mubr.bf16.mxu0 %v3759
        %3963 = vmatmul.mubr.bf16.gmra.mrb[0].mxu0 %v3758
        %v3964 = vpop.f32.mrb[0].mxu0
        %v3965 = vadd.f32 0.0, %v3964
        %v3966 = vpop.f32.mrb[0].mxu0
        %v3967 = vadd.f32 0.0, %v3966
        %v3968 = vpop.f32.mrb[0].mxu0
        %v3969 = vadd.f32 0.0, %v3968
        %v3970 = vpop.f32.mrb[0].mxu0
        %v3971 = vadd.f32 0.0, %v3970
        %3972 = vmatprep.mubr.bf16.mxu0 %v3762
        %3973 = vmatmul.mubr.bf16.gmra.mrb[0].mxu0 %v3761
        %v3974 = vpop.f32.mrb[0].mxu0
        %v3975 = vadd.f32 0.0, %v3974
        %v3976 = vpop.f32.mrb[0].mxu0
        %v3977 = vadd.f32 0.0, %v3976
        %v3978 = vpop.f32.mrb[0].mxu0
        %v3979 = vadd.f32 0.0, %v3978
        %v3980 = vpop.f32.mrb[0].mxu0
        %v3981 = vadd.f32 0.0, %v3980
        %3982 = vmatprep.mubr.bf16.mxu0 %v3765
        %3983 = vmatmul.mubr.bf16.gmra.mrb[0].mxu0 %v3764
        %v3984 = vpop.f32.mrb[0].mxu0
        %v3985 = vadd.f32 0.0, %v3984
        %v3986 = vpop.f32.mrb[0].mxu0
        %v3987 = vadd.f32 0.0, %v3986
        %v3988 = vpop.f32.mrb[0].mxu0
        %v3989 = vadd.f32 0.0, %v3988
        %v3990 = vpop.f32.mrb[0].mxu0
        %v3991 = vadd.f32 0.0, %v3990
        %3992 = vmatprep.mubr.bf16.mxu0 %v3768
        %3993 = vmatmul.mubr.bf16.gmra.mrb[0].mxu0 %v3767
        %v3994 = vpop.f32.mrb[0].mxu0
        %v3995 = vadd.f32 0.0, %v3994
        %v3996 = vpop.f32.mrb[0].mxu0
        %v3997 = vadd.f32 0.0, %v3996
        %v3998 = vpop.f32.mrb[0].mxu0
        %v3999 = vadd.f32 0.0, %v3998
        %v4000 = vpop.f32.mrb[0].mxu0
        %v4001 = vadd.f32 0.0, %v4000
        %4002 = vmatprep.mubr.bf16.mxu0 %v3771
        %4003 = vmatmul.mubr.bf16.gmra.mrb[0].mxu0 %v3770
        %v4004 = vpop.f32.mrb[0].mxu0
        %v4005 = vadd.f32 0.0, %v4004
        %v4006 = vpop.f32.mrb[0].mxu0
        %v4007 = vadd.f32 0.0, %v4006
        %v4008 = vpop.f32.mrb[0].mxu0
        %v4009 = vadd.f32 0.0, %v4008
        %v4010 = vpop.f32.mrb[0].mxu0
        %v4011 = vadd.f32 0.0, %v4010
        %4012 = vmatprep.mubr.bf16.mxu0 %v3774
        %4013 = vmatmul.mubr.bf16.gmra.mrb[0].mxu0 %v3773
        %v4014 = vpop.f32.mrb[0].mxu0
        %v4015 = vadd.f32 0.0, %v4014
        %v4016 = vpop.f32.mrb[0].mxu0
        %v4017 = vadd.f32 0.0, %v4016
        %v4018 = vpop.f32.mrb[0].mxu0
        %v4019 = vadd.f32 0.0, %v4018
        %v4020 = vpop.f32.mrb[0].mxu0
        %v4021 = vadd.f32 0.0, %v4020
        %4022 = vmatprep.mubr.bf16.mxu0 %v3777
        %4023 = vmatmul.mubr.bf16.gmra.mrb[0].mxu0 %v3776
        %v4024 = vpop.f32.mrb[0].mxu0
        %v4025 = vadd.f32 0.0, %v4024
        %v4026 = vpop.f32.mrb[0].mxu0
        %v4027 = vadd.f32 0.0, %v4026
        %v4028 = vpop.f32.mrb[0].mxu0
        %v4029 = vadd.f32 0.0, %v4028
        %v4030 = vpop.f32.mrb[0].mxu0
        %v4031 = vadd.f32 0.0, %v4030
        %4032 = vmatprep.mubr.bf16.mxu0 %v3780
        %4033 = vmatmul.mubr.bf16.gmra.mrb[0].mxu0 %v3779
        %v4034 = vpop.f32.mrb[0].mxu0
        %v4035 = vadd.f32 0.0, %v4034
        %v4036 = vpop.f32.mrb[0].mxu0
        %v4037 = vadd.f32 0.0, %v4036
        %v4038 = vpop.f32.mrb[0].mxu0
        %v4039 = vadd.f32 0.0, %v4038
        %v4040 = vpop.f32.mrb[0].mxu0
        %v4041 = vadd.f32 0.0, %v4040
        %4042 = vmatprep.mubr.bf16.mxu0 %v3783
        %4043 = vmatmul.mubr.bf16.gmra.mrb[0].mxu0 %v3782
        %v4044 = vpop.f32.mrb[0].mxu0
        %v4045 = vadd.f32 0.0, %v4044
        %v4046 = vpop.f32.mrb[0].mxu0
        %v4047 = vadd.f32 0.0, %v4046
        %v4048 = vpop.f32.mrb[0].mxu0
        %v4049 = vadd.f32 0.0, %v4048
        %v4050 = vpop.f32.mrb[0].mxu0
        %v4051 = vadd.f32 0.0, %v4050
        %4052 = vmatprep.mubr.bf16.mxu0 %v3786
        %4053 = vmatmul.mubr.bf16.gmra.mrb[0].mxu0 %v3785
        %v4054 = vpop.f32.mrb[0].mxu0
        %v4055 = vadd.f32 0.0, %v4054
        %v4056 = vpop.f32.mrb[0].mxu0
        %v4057 = vadd.f32 0.0, %v4056
        %v4058 = vpop.f32.mrb[0].mxu0
        %v4059 = vadd.f32 0.0, %v4058
        %v4060 = vpop.f32.mrb[0].mxu0
        %v4061 = vadd.f32 0.0, %v4060
        %4062 = vmatprep.mubr.bf16.mxu0 %v3789
        %4063 = vmatmul.mubr.bf16.gmra.mrb[0].mxu0 %v3788
        %v4064 = vpop.f32.mrb[0].mxu0
        %v4065 = vadd.f32 0.0, %v4064
        %v4066 = vpop.f32.mrb[0].mxu0
        %v4067 = vadd.f32 0.0, %v4066
        %v4068 = vpop.f32.mrb[0].mxu0
        %v4069 = vadd.f32 0.0, %v4068
        %v4070 = vpop.f32.mrb[0].mxu0
        %v4071 = vadd.f32 0.0, %v4070
        %4072 = vmatprep.mubr.bf16.mxu0 %v3792
        %4073 = vmatmul.mubr.bf16.gmra.mrb[0].mxu0 %v3791
        %v4074 = vpop.f32.mrb[0].mxu0
        %v4075 = vadd.f32 0.0, %v4074
        %v4076 = vpop.f32.mrb[0].mxu0
        %v4077 = vadd.f32 0.0, %v4076
        %v4078 = vpop.f32.mrb[0].mxu0
        %v4079 = vadd.f32 0.0, %v4078
        %v4080 = vpop.f32.mrb[0].mxu0
        %v4081 = vadd.f32 0.0, %v4080
        %4082 = vmatprep.mubr.bf16.mxu0 %v3795
        %4083 = vmatmul.mubr.bf16.gmra.mrb[0].mxu0 %v3794
        %v4084 = vpop.f32.mrb[0].mxu0
        %v4085 = vadd.f32 0.0, %v4084
        %v4086 = vpop.f32.mrb[0].mxu0
        %v4087 = vadd.f32 0.0, %v4086
        %v4088 = vpop.f32.mrb[0].mxu0
        %v4089 = vadd.f32 0.0, %v4088
        %v4090 = vpop.f32.mrb[0].mxu0
        %v4091 = vadd.f32 0.0, %v4090
        %4092 = vmatprep.mubr.bf16.mxu0 %v3798
        %4093 = vmatmul.mubr.bf16.gmra.mrb[0].mxu0 %v3797
        %v4094 = vpop.f32.mrb[0].mxu0
        %v4095 = vadd.f32 0.0, %v4094
        %v4096 = vpop.f32.mrb[0].mxu0
        %v4097 = vadd.f32 0.0, %v4096
        %v4098 = vpop.f32.mrb[0].mxu0
        %v4099 = vadd.f32 0.0, %v4098
        %v4100 = vpop.f32.mrb[0].mxu0
        %v4101 = vadd.f32 0.0, %v4100
        %4102 = vmatprep.mubr.bf16.mxu0 %v3801
        %4103 = vmatmul.mubr.bf16.gmra.mrb[0].mxu0 %v3800
        %v4104 = vpop.f32.mrb[0].mxu0
        %v4105 = vadd.f32 0.0, %v4104
        %v4106 = vpop.f32.mrb[0].mxu0
        %v4107 = vadd.f32 0.0, %v4106
        %v4108 = vpop.f32.mrb[0].mxu0
        %v4109 = vadd.f32 0.0, %v4108
        %v4110 = vpop.f32.mrb[0].mxu0
        %v4111 = vadd.f32 0.0, %v4110
        %4112 = vmatprep.mubr.bf16.mxu0 %v3804
        %4113 = vmatmul.mubr.bf16.gmra.mrb[0].mxu0 %v3803
        %v4114 = vpop.f32.mrb[0].mxu0
        %v4115 = vadd.f32 0.0, %v4114
        %v4116 = vpop.f32.mrb[0].mxu0
        %v4117 = vadd.f32 0.0, %v4116
        %v4118 = vpop.f32.mrb[0].mxu0
        %v4119 = vadd.f32 0.0, %v4118
        %v4120 = vpop.f32.mrb[0].mxu0
        %v4121 = vadd.f32 0.0, %v4120
        %4122 = vmatprep.mubr.bf16.mxu0 %v3807
        %4123 = vmatmul.mubr.bf16.gmra.mrb[0].mxu0 %v3806
        %v4124 = vpop.f32.mrb[0].mxu0
        %v4125 = vadd.f32 0.0, %v4124
        %v4126 = vpop.f32.mrb[0].mxu0
        %v4127 = vadd.f32 0.0, %v4126
        %v4128 = vpop.f32.mrb[0].mxu0
        %v4129 = vadd.f32 0.0, %v4128
        %v4130 = vpop.f32.mrb[0].mxu0
        %v4131 = vadd.f32 0.0, %v4130
        %4132 = vmatprep.mubr.bf16.mxu0 %v3810
        %4133 = vmatmul.mubr.bf16.gmra.mrb[0].mxu0 %v3809
        %v4134 = vpop.f32.mrb[0].mxu0
        %v4135 = vadd.f32 0.0, %v4134
        %v4136 = vpop.f32.mrb[0].mxu0
        %v4137 = vadd.f32 0.0, %v4136
        %v4138 = vpop.f32.mrb[0].mxu0
        %v4139 = vadd.f32 0.0, %v4138
        %v4140 = vpop.f32.mrb[0].mxu0
        %v4141 = vadd.f32 0.0, %v4140
        %4142 = vmatprep.mubr.bf16.mxu0 %v3813
        %4143 = vmatmul.mubr.bf16.gmra.mrb[0].mxu0 %v3812
        %v4144 = vpop.f32.mrb[0].mxu0
        %v4145 = vadd.f32 0.0, %v4144
        %v4146 = vpop.f32.mrb[0].mxu0
        %v4147 = vadd.f32 0.0, %v4146
        %v4148 = vpop.f32.mrb[0].mxu0
        %v4149 = vadd.f32 0.0, %v4148
        %v4150 = vpop.f32.mrb[0].mxu0
        %v4151 = vadd.f32 0.0, %v4150
        %4152 = vmatprep.mubr.bf16.mxu0 %v3816
        %4153 = vmatmul.mubr.bf16.gmra.mrb[0].mxu0 %v3815
        %v4154 = vpop.f32.mrb[0].mxu0
        %v4155 = vadd.f32 0.0, %v4154
        %v4156 = vpop.f32.mrb[0].mxu0
        %v4157 = vadd.f32 0.0, %v4156
        %v4158 = vpop.f32.mrb[0].mxu0
        %v4159 = vadd.f32 0.0, %v4158
        %v4160 = vpop.f32.mrb[0].mxu0
        %v4161 = vadd.f32 0.0, %v4160
        %4162 = vdwg.mxu0
        %4163 = vmatprep.subr.bf16.mxu0 %v3491
        %4164 = vmatpush1.bf16.msra.mxu0 %v3490
        %4165 = vmatprep.subr.bf16.mxu0 %v3493
        %4166 = vmatpush1.bf16.msra.mxu0 %v3492
        %4167 = vmatprep.subr.bf16.mxu0 %v3495
        %4168 = vmatpush1.bf16.msra.mxu0 %v3494
        %4169 = vmatprep.subr.bf16.mxu0 %v3497
        %4170 = vmatpush1.bf16.msra.mxu0 %v3496
        %4171 = vmatprep.subr.bf16.mxu0 %v3499
        %4172 = vmatpush1.bf16.msra.mxu0 %v3498
        %4173 = vmatprep.subr.bf16.mxu0 %v3501
        %4174 = vmatpush1.bf16.msra.mxu0 %v3500
        %4175 = vmatprep.subr.bf16.mxu0 %v3503
        %4176 = vmatpush1.bf16.msra.mxu0 %v3502
        %4177 = vmatprep.subr.bf16.mxu0 %v3505
        %4178 = vmatpush1.bf16.msra.mxu0 %v3504
        %4179 = vmatprep.subr.bf16.mxu0 0
        %4180 = vmatpush1.bf16.msra.mxu0 0
        %4181 = vmatprep.subr.bf16.mxu0 0
        %4182 = vmatpush1.bf16.msra.mxu0 0
        %4183 = vmatprep.subr.bf16.mxu0 0
        %4184 = vmatpush1.bf16.msra.mxu0 0
        %4185 = vmatprep.subr.bf16.mxu0 0
        %4186 = vmatpush1.bf16.msra.mxu0 0
        %4187 = vmatprep.subr.bf16.mxu0 0
        %4188 = vmatpush1.bf16.msra.mxu0 0
        %4189 = vmatprep.subr.bf16.mxu0 0
        %4190 = vmatpush1.bf16.msra.mxu0 0
        %4191 = vmatprep.subr.bf16.mxu0 0
        %4192 = vmatpush1.bf16.msra.mxu0 0
        %4193 = vmatprep.subr.bf16.mxu0 0
        %4194 = vmatpush1.bf16.msra.mxu0 0
        %4195 = vmatprep.mubr.bf16.mxu0 0
        %4196 = vmatmul.mubr.bf16.gmra.mrb[0].mxu0 %v3748
        %v4197 = vpop.f32.mrb[0].mxu0
        %v4198 = vadd.f32 %v3925, %v4197
        %v4199 = vpop.f32.mrb[0].mxu0
        %v4200 = vadd.f32 %v3927, %v4199
        %v4201 = vpop.f32.mrb[0].mxu0
        %v4202 = vadd.f32 %v3929, %v4201
        %v4203 = vpop.f32.mrb[0].mxu0
        %v4204 = vadd.f32 %v3931, %v4203
        %4205 = vmatprep.mubr.bf16.mxu0 0
        %4206 = vmatmul.mubr.bf16.gmra.mrb[0].mxu0 %v3751
        %v4207 = vpop.f32.mrb[0].mxu0
        %v4208 = vadd.f32 %v3935, %v4207
        %v4209 = vpop.f32.mrb[0].mxu0
        %v4210 = vadd.f32 %v3937, %v4209
        %v4211 = vpop.f32.mrb[0].mxu0
        %v4212 = vadd.f32 %v3939, %v4211
        %v4213 = vpop.f32.mrb[0].mxu0
        %v4214 = vadd.f32 %v3941, %v4213
        %4215 = vmatprep.mubr.bf16.mxu0 0
        %4216 = vmatmul.mubr.bf16.gmra.mrb[0].mxu0 %v3754
        %v4217 = vpop.f32.mrb[0].mxu0
        %v4218 = vadd.f32 %v3945, %v4217
        %v4219 = vpop.f32.mrb[0].mxu0
        %v4220 = vadd.f32 %v3947, %v4219
        %v4221 = vpop.f32.mrb[0].mxu0
        %v4222 = vadd.f32 %v3949, %v4221
        %v4223 = vpop.f32.mrb[0].mxu0
        %v4224 = vadd.f32 %v3951, %v4223
        %4225 = vmatprep.mubr.bf16.mxu0 0
        %4226 = vmatmul.mubr.bf16.gmra.mrb[0].mxu0 %v3757
        %v4227 = vpop.f32.mrb[0].mxu0
        %v4228 = vadd.f32 %v3955, %v4227
        %v4229 = vpop.f32.mrb[0].mxu0
        %v4230 = vadd.f32 %v3957, %v4229
        %v4231 = vpop.f32.mrb[0].mxu0
        %v4232 = vadd.f32 %v3959, %v4231
        %v4233 = vpop.f32.mrb[0].mxu0
        %v4234 = vadd.f32 %v3961, %v4233
        %4235 = vmatprep.mubr.bf16.mxu0 0
        %4236 = vmatmul.mubr.bf16.gmra.mrb[0].mxu0 %v3760
        %v4237 = vpop.f32.mrb[0].mxu0
        %v4238 = vadd.f32 %v3965, %v4237
        %v4239 = vpop.f32.mrb[0].mxu0
        %v4240 = vadd.f32 %v3967, %v4239
        %v4241 = vpop.f32.mrb[0].mxu0
        %v4242 = vadd.f32 %v3969, %v4241
        %v4243 = vpop.f32.mrb[0].mxu0
        %v4244 = vadd.f32 %v3971, %v4243
        %4245 = vmatprep.mubr.bf16.mxu0 0
        %4246 = vmatmul.mubr.bf16.gmra.mrb[0].mxu0 %v3763
        %v4247 = vpop.f32.mrb[0].mxu0
        %v4248 = vadd.f32 %v3975, %v4247
        %v4249 = vpop.f32.mrb[0].mxu0
        %v4250 = vadd.f32 %v3977, %v4249
        %v4251 = vpop.f32.mrb[0].mxu0
        %v4252 = vadd.f32 %v3979, %v4251
        %v4253 = vpop.f32.mrb[0].mxu0
        %v4254 = vadd.f32 %v3981, %v4253
        %4255 = vmatprep.mubr.bf16.mxu0 0
        %4256 = vmatmul.mubr.bf16.gmra.mrb[0].mxu0 %v3766
        %v4257 = vpop.f32.mrb[0].mxu0
        %v4258 = vadd.f32 %v3985, %v4257
        %v4259 = vpop.f32.mrb[0].mxu0
        %v4260 = vadd.f32 %v3987, %v4259
        %v4261 = vpop.f32.mrb[0].mxu0
        %v4262 = vadd.f32 %v3989, %v4261
        %v4263 = vpop.f32.mrb[0].mxu0
        %v4264 = vadd.f32 %v3991, %v4263
        %4265 = vmatprep.mubr.bf16.mxu0 0
        %4266 = vmatmul.mubr.bf16.gmra.mrb[0].mxu0 %v3769
        %v4267 = vpop.f32.mrb[0].mxu0
        %v4268 = vadd.f32 %v3995, %v4267
        %v4269 = vpop.f32.mrb[0].mxu0
        %v4270 = vadd.f32 %v3997, %v4269
        %v4271 = vpop.f32.mrb[0].mxu0
        %v4272 = vadd.f32 %v3999, %v4271
        %v4273 = vpop.f32.mrb[0].mxu0
        %v4274 = vadd.f32 %v4001, %v4273
        %4275 = vmatprep.mubr.bf16.mxu0 0
        %4276 = vmatmul.mubr.bf16.gmra.mrb[0].mxu0 %v3772
        %v4277 = vpop.f32.mrb[0].mxu0
        %v4278 = vadd.f32 %v4005, %v4277
        %v4279 = vpop.f32.mrb[0].mxu0
        %v4280 = vadd.f32 %v4007, %v4279
        %v4281 = vpop.f32.mrb[0].mxu0
        %v4282 = vadd.f32 %v4009, %v4281
        %v4283 = vpop.f32.mrb[0].mxu0
        %v4284 = vadd.f32 %v4011, %v4283
        %4285 = vmatprep.mubr.bf16.mxu0 0
        %4286 = vmatmul.mubr.bf16.gmra.mrb[0].mxu0 %v3775
        %v4287 = vpop.f32.mrb[0].mxu0
        %v4288 = vadd.f32 %v4015, %v4287
        %v4289 = vpop.f32.mrb[0].mxu0
        %v4290 = vadd.f32 %v4017, %v4289
        %v4291 = vpop.f32.mrb[0].mxu0
        %v4292 = vadd.f32 %v4019, %v4291
        %v4293 = vpop.f32.mrb[0].mxu0
        %v4294 = vadd.f32 %v4021, %v4293
        %4295 = vmatprep.mubr.bf16.mxu0 0
        %4296 = vmatmul.mubr.bf16.gmra.mrb[0].mxu0 %v3778
        %v4297 = vpop.f32.mrb[0].mxu0
        %v4298 = vadd.f32 %v4025, %v4297
        %v4299 = vpop.f32.mrb[0].mxu0
        %v4300 = vadd.f32 %v4027, %v4299
        %v4301 = vpop.f32.mrb[0].mxu0
        %v4302 = vadd.f32 %v4029, %v4301
        %v4303 = vpop.f32.mrb[0].mxu0
        %v4304 = vadd.f32 %v4031, %v4303
        %4305 = vmatprep.mubr.bf16.mxu0 0
        %4306 = vmatmul.mubr.bf16.gmra.mrb[0].mxu0 %v3781
        %v4307 = vpop.f32.mrb[0].mxu0
        %v4308 = vadd.f32 %v4035, %v4307
        %v4309 = vpop.f32.mrb[0].mxu0
        %v4310 = vadd.f32 %v4037, %v4309
        %v4311 = vpop.f32.mrb[0].mxu0
        %v4312 = vadd.f32 %v4039, %v4311
        %v4313 = vpop.f32.mrb[0].mxu0
        %v4314 = vadd.f32 %v4041, %v4313
        %4315 = vmatprep.mubr.bf16.mxu0 0
        %4316 = vmatmul.mubr.bf16.gmra.mrb[0].mxu0 %v3784
        %v4317 = vpop.f32.mrb[0].mxu0
        %v4318 = vadd.f32 %v4045, %v4317
        %v4319 = vpop.f32.mrb[0].mxu0
        %v4320 = vadd.f32 %v4047, %v4319
        %v4321 = vpop.f32.mrb[0].mxu0
        %v4322 = vadd.f32 %v4049, %v4321
        %v4323 = vpop.f32.mrb[0].mxu0
        %v4324 = vadd.f32 %v4051, %v4323
        %4325 = vmatprep.mubr.bf16.mxu0 0
        %4326 = vmatmul.mubr.bf16.gmra.mrb[0].mxu0 %v3787
        %v4327 = vpop.f32.mrb[0].mxu0
        %v4328 = vadd.f32 %v4055, %v4327
        %v4329 = vpop.f32.mrb[0].mxu0
        %v4330 = vadd.f32 %v4057, %v4329
        %v4331 = vpop.f32.mrb[0].mxu0
        %v4332 = vadd.f32 %v4059, %v4331
        %v4333 = vpop.f32.mrb[0].mxu0
        %v4334 = vadd.f32 %v4061, %v4333
        %4335 = vmatprep.mubr.bf16.mxu0 0
        %4336 = vmatmul.mubr.bf16.gmra.mrb[0].mxu0 %v3790
        %v4337 = vpop.f32.mrb[0].mxu0
        %v4338 = vadd.f32 %v4065, %v4337
        %v4339 = vpop.f32.mrb[0].mxu0
        %v4340 = vadd.f32 %v4067, %v4339
        %v4341 = vpop.f32.mrb[0].mxu0
        %v4342 = vadd.f32 %v4069, %v4341
        %v4343 = vpop.f32.mrb[0].mxu0
        %v4344 = vadd.f32 %v4071, %v4343
        %4345 = vmatprep.mubr.bf16.mxu0 0
        %4346 = vmatmul.mubr.bf16.gmra.mrb[0].mxu0 %v3793
        %v4347 = vpop.f32.mrb[0].mxu0
        %v4348 = vadd.f32 %v4075, %v4347
        %v4349 = vpop.f32.mrb[0].mxu0
        %v4350 = vadd.f32 %v4077, %v4349
        %v4351 = vpop.f32.mrb[0].mxu0
        %v4352 = vadd.f32 %v4079, %v4351
        %v4353 = vpop.f32.mrb[0].mxu0
        %v4354 = vadd.f32 %v4081, %v4353
        %4355 = vmatprep.mubr.bf16.mxu0 0
        %4356 = vmatmul.mubr.bf16.gmra.mrb[0].mxu0 %v3796
        %v4357 = vpop.f32.mrb[0].mxu0
        %v4358 = vadd.f32 %v4085, %v4357
        %v4359 = vpop.f32.mrb[0].mxu0
        %v4360 = vadd.f32 %v4087, %v4359
        %v4361 = vpop.f32.mrb[0].mxu0
        %v4362 = vadd.f32 %v4089, %v4361
        %v4363 = vpop.f32.mrb[0].mxu0
        %v4364 = vadd.f32 %v4091, %v4363
        %4365 = vmatprep.mubr.bf16.mxu0 0
        %4366 = vmatmul.mubr.bf16.gmra.mrb[0].mxu0 %v3799
        %v4367 = vpop.f32.mrb[0].mxu0
        %v4368 = vadd.f32 %v4095, %v4367
        %v4369 = vpop.f32.mrb[0].mxu0
        %v4370 = vadd.f32 %v4097, %v4369
        %v4371 = vpop.f32.mrb[0].mxu0
        %v4372 = vadd.f32 %v4099, %v4371
        %v4373 = vpop.f32.mrb[0].mxu0
        %v4374 = vadd.f32 %v4101, %v4373
        %4375 = vmatprep.mubr.bf16.mxu0 0
        %4376 = vmatmul.mubr.bf16.gmra.mrb[0].mxu0 %v3802
        %v4377 = vpop.f32.mrb[0].mxu0
        %v4378 = vadd.f32 %v4105, %v4377
        %v4379 = vpop.f32.mrb[0].mxu0
        %v4380 = vadd.f32 %v4107, %v4379
        %v4381 = vpop.f32.mrb[0].mxu0
        %v4382 = vadd.f32 %v4109, %v4381
        %v4383 = vpop.f32.mrb[0].mxu0
        %v4384 = vadd.f32 %v4111, %v4383
        %4385 = vmatprep.mubr.bf16.mxu0 0
        %4386 = vmatmul.mubr.bf16.gmra.mrb[0].mxu0 %v3805
        %v4387 = vpop.f32.mrb[0].mxu0
        %v4388 = vadd.f32 %v4115, %v4387
        %v4389 = vpop.f32.mrb[0].mxu0
        %v4390 = vadd.f32 %v4117, %v4389
        %v4391 = vpop.f32.mrb[0].mxu0
        %v4392 = vadd.f32 %v4119, %v4391
        %v4393 = vpop.f32.mrb[0].mxu0
        %v4394 = vadd.f32 %v4121, %v4393
        %4395 = vmatprep.mubr.bf16.mxu0 0
        %4396 = vmatmul.mubr.bf16.gmra.mrb[0].mxu0 %v3808
        %v4397 = vpop.f32.mrb[0].mxu0
        %v4398 = vadd.f32 %v4125, %v4397
        %v4399 = vpop.f32.mrb[0].mxu0
        %v4400 = vadd.f32 %v4127, %v4399
        %v4401 = vpop.f32.mrb[0].mxu0
        %v4402 = vadd.f32 %v4129, %v4401
        %v4403 = vpop.f32.mrb[0].mxu0
        %v4404 = vadd.f32 %v4131, %v4403
        %4405 = vmatprep.mubr.bf16.mxu0 0
        %4406 = vmatmul.mubr.bf16.gmra.mrb[0].mxu0 %v3811
        %v4407 = vpop.f32.mrb[0].mxu0
        %v4408 = vadd.f32 %v4135, %v4407
        %v4409 = vpop.f32.mrb[0].mxu0
        %v4410 = vadd.f32 %v4137, %v4409
        %v4411 = vpop.f32.mrb[0].mxu0
        %v4412 = vadd.f32 %v4139, %v4411
        %v4413 = vpop.f32.mrb[0].mxu0
        %v4414 = vadd.f32 %v4141, %v4413
        %4415 = vmatprep.mubr.bf16.mxu0 0
        %4416 = vmatmul.mubr.bf16.gmra.mrb[0].mxu0 %v3814
        %v4417 = vpop.f32.mrb[0].mxu0
        %v4418 = vadd.f32 %v4145, %v4417
        %v4419 = vpop.f32.mrb[0].mxu0
        %v4420 = vadd.f32 %v4147, %v4419
        %v4421 = vpop.f32.mrb[0].mxu0
        %v4422 = vadd.f32 %v4149, %v4421
        %v4423 = vpop.f32.mrb[0].mxu0
        %v4424 = vadd.f32 %v4151, %v4423
        %4425 = vmatprep.mubr.bf16.mxu0 0
        %4426 = vmatmul.mubr.bf16.gmra.mrb[0].mxu0 %v3817
        %v4427 = vpop.f32.mrb[0].mxu0
        %v4428 = vadd.f32 %v4155, %v4427
        %v4429 = vpop.f32.mrb[0].mxu0
        %v4430 = vadd.f32 %v4157, %v4429
        %v4431 = vpop.f32.mrb[0].mxu0
        %v4432 = vadd.f32 %v4159, %v4431
        %v4433 = vpop.f32.mrb[0].mxu0
        %v4434 = vadd.f32 %v4161, %v4433
        %4435 = vdwg.mxu0
        %4436 = vst [vmem:[%s332] sm:$0xff] %v4198
        %4437 = vst [vmem:[%s332 + $0x8] sm:$0xff] %v4200
        %4438 = vst [vmem:[%s332 + $0x10] sm:$0xff] %v4202
        %4439 = vst [vmem:[%s332 + $0x18] sm:$0xff] %v4204
        %4440 = vst [vmem:[%s332 + $0x20] sm:$0xff] %v4208
        %4441 = vst [vmem:[%s332 + $0x28] sm:$0xff] %v4210
        %4442 = vst [vmem:[%s332 + $0x30] sm:$0xff] %v4212
        %4443 = vst [vmem:[%s332 + $0x38] sm:$0xff] %v4214
        %4444 = vst [vmem:[%s332 + $0x40] sm:$0xff] %v4218
        %4445 = vst [vmem:[%s332 + $0x48] sm:$0xff] %v4220
        %4446 = vst [vmem:[%s332 + $0x50] sm:$0xff] %v4222
        %4447 = vst [vmem:[%s332 + $0x58] sm:$0xff] %v4224
        %4448 = vst [vmem:[%s332 + $0x60] sm:$0xff] %v4228
        %4449 = vst [vmem:[%s332 + $0x68] sm:$0xff] %v4230
        %4450 = vst [vmem:[%s332 + $0x70] sm:$0xff] %v4232
        %4451 = vst [vmem:[%s332 + $0x78] sm:$0xff] %v4234
        %4452 = vst [vmem:[%s332 + $0x80] sm:$0xff] %v4238
        %4453 = vst [vmem:[%s332 + $0x88] sm:$0xff] %v4240
        %4454 = vst [vmem:[%s332 + $0x90] sm:$0xff] %v4242
        %4455 = vst [vmem:[%s332 + $0x98] sm:$0xff] %v4244
        %4456 = vst [vmem:[%s332 + $0xa0] sm:$0xff] %v4248
        %4457 = vst [vmem:[%s332 + $0xa8] sm:$0xff] %v4250
        %4458 = vst [vmem:[%s332 + $0xb0] sm:$0xff] %v4252
        %4459 = vst [vmem:[%s332 + $0xb8] sm:$0xff] %v4254
        %4460 = vst [vmem:[%s332 + $0xc0] sm:$0xff] %v4258
        %4461 = vst [vmem:[%s332 + $0xc8] sm:$0xff] %v4260
        %4462 = vst [vmem:[%s332 + $0xd0] sm:$0xff] %v4262
        %4463 = vst [vmem:[%s332 + $0xd8] sm:$0xff] %v4264
        %4464 = vst [vmem:[%s332 + $0xe0] sm:$0xff] %v4268
        %4465 = vst [vmem:[%s332 + $0xe8] sm:$0xff] %v4270
        %4466 = vst [vmem:[%s332 + $0xf0] sm:$0xff] %v4272
        %4467 = vst [vmem:[%s332 + $0xf8] sm:$0xff] %v4274
        %4468 = vst [vmem:[%s332 + $0x100] sm:$0xff] %v4278
        %4469 = vst [vmem:[%s332 + $0x108] sm:$0xff] %v4280
        %4470 = vst [vmem:[%s332 + $0x110] sm:$0xff] %v4282
        %4471 = vst [vmem:[%s332 + $0x118] sm:$0xff] %v4284
        %4472 = vst [vmem:[%s332 + $0x120] sm:$0xff] %v4288
        %4473 = vst [vmem:[%s332 + $0x128] sm:$0xff] %v4290
        %4474 = vst [vmem:[%s332 + $0x130] sm:$0xff] %v4292
        %4475 = vst [vmem:[%s332 + $0x138] sm:$0xff] %v4294
        %4476 = vst [vmem:[%s332 + $0x140] sm:$0xff] %v4298
        %4477 = vst [vmem:[%s332 + $0x148] sm:$0xff] %v4300
        %4478 = vst [vmem:[%s332 + $0x150] sm:$0xff] %v4302
        %4479 = vst [vmem:[%s332 + $0x158] sm:$0xff] %v4304
        %4480 = vst [vmem:[%s332 + $0x160] sm:$0xff] %v4308
        %4481 = vst [vmem:[%s332 + $0x168] sm:$0xff] %v4310
        %4482 = vst [vmem:[%s332 + $0x170] sm:$0xff] %v4312
        %4483 = vst [vmem:[%s332 + $0x178] sm:$0xff] %v4314
        %4484 = vst [vmem:[%s332 + $0x180] sm:$0xff] %v4318
        %4485 = vst [vmem:[%s332 + $0x188] sm:$0xff] %v4320
        %4486 = vst [vmem:[%s332 + $0x190] sm:$0xff] %v4322
        %4487 = vst [vmem:[%s332 + $0x198] sm:$0xff] %v4324
        %4488 = vst [vmem:[%s332 + $0x1a0] sm:$0xff] %v4328
        %4489 = vst [vmem:[%s332 + $0x1a8] sm:$0xff] %v4330
        %4490 = vst [vmem:[%s332 + $0x1b0] sm:$0xff] %v4332
        %4491 = vst [vmem:[%s332 + $0x1b8] sm:$0xff] %v4334
        %4492 = vst [vmem:[%s332 + $0x1c0] sm:$0xff] %v4338
        %4493 = vst [vmem:[%s332 + $0x1c8] sm:$0xff] %v4340
        %4494 = vst [vmem:[%s332 + $0x1d0] sm:$0xff] %v4342
        %4495 = vst [vmem:[%s332 + $0x1d8] sm:$0xff] %v4344
        %4496 = vst [vmem:[%s332 + $0x1e0] sm:$0xff] %v4348
        %4497 = vst [vmem:[%s332 + $0x1e8] sm:$0xff] %v4350
        %4498 = vst [vmem:[%s332 + $0x1f0] sm:$0xff] %v4352
        %4499 = vst [vmem:[%s332 + $0x1f8] sm:$0xff] %v4354
        %4500 = vst [vmem:[%s332 + $0x200] sm:$0xff] %v4358
        %4501 = vst [vmem:[%s332 + $0x208] sm:$0xff] %v4360
        %4502 = vst [vmem:[%s332 + $0x210] sm:$0xff] %v4362
        %4503 = vst [vmem:[%s332 + $0x218] sm:$0xff] %v4364
        %4504 = vst [vmem:[%s332 + $0x220] sm:$0xff] %v4368
        %4505 = vst [vmem:[%s332 + $0x228] sm:$0xff] %v4370
        %4506 = vst [vmem:[%s332 + $0x230] sm:$0xff] %v4372
        %4507 = vst [vmem:[%s332 + $0x238] sm:$0xff] %v4374
        %4508 = vst [vmem:[%s332 + $0x240] sm:$0xff] %v4378
        %4509 = vst [vmem:[%s332 + $0x248] sm:$0xff] %v4380
        %4510 = vst [vmem:[%s332 + $0x250] sm:$0xff] %v4382
        %4511 = vst [vmem:[%s332 + $0x258] sm:$0xff] %v4384
        %4512 = vst [vmem:[%s332 + $0x260] sm:$0xff] %v4388
        %4513 = vst [vmem:[%s332 + $0x268] sm:$0xff] %v4390
        %4514 = vst [vmem:[%s332 + $0x270] sm:$0xff] %v4392
        %4515 = vst [vmem:[%s332 + $0x278] sm:$0xff] %v4394
        %4516 = vst [vmem:[%s332 + $0x280] sm:$0xff] %v4398
        %4517 = vst [vmem:[%s332 + $0x288] sm:$0xff] %v4400
        %4518 = vst [vmem:[%s332 + $0x290] sm:$0xff] %v4402
        %4519 = vst [vmem:[%s332 + $0x298] sm:$0xff] %v4404
        %4520 = vst [vmem:[%s332 + $0x2a0] sm:$0xff] %v4408
        %4521 = vst [vmem:[%s332 + $0x2a8] sm:$0xff] %v4410
        %4522 = vst [vmem:[%s332 + $0x2b0] sm:$0xff] %v4412
        %4523 = vst [vmem:[%s332 + $0x2b8] sm:$0xff] %v4414
        %4524 = vst [vmem:[%s332 + $0x2c0] sm:$0xff] %v4418
        %4525 = vst [vmem:[%s332 + $0x2c8] sm:$0xff] %v4420
        %4526 = vst [vmem:[%s332 + $0x2d0] sm:$0xff] %v4422
        %4527 = vst [vmem:[%s332 + $0x2d8] sm:$0xff] %v4424
        %4528 = vst [vmem:[%s332 + $0x2e0] sm:$0xff] %v4428
        %4529 = vst [vmem:[%s332 + $0x2e8] sm:$0xff] %v4430
        %4530 = vst [vmem:[%s332 + $0x2f0] sm:$0xff] %v4432
        %4531 = vst [vmem:[%s332 + $0x2f8] sm:$0xff] %v4434
      $region56: #{fused_forward.1} parent=43 // pred_fallthru
        _
      %s4532 = smul.u32 2, %s24
      %p4533 = scmp.lt.s32.totalorder %s23, 0
      %s4534 = scalar_select %p4533, %s23, 0
      %p4535 = scmp.lt.s32.totalorder %s4532, 1
      %s4536 = scalar_select %p4535, %s4532, 1
      %s4537 = smul.addr %s4534, 96
      %s4538 = sadd.s32 %s4536, %s4537
      %s4539 = smul.addr %s4538, 8
      %s4540 = scalar_lea.vmem %s6, %s4539
      // Predicated region
      $region57: #{fused_forward.1} parent=43 // pred_check
        %p4541 = pneg %p196
      $region58: #{fused_forward.1} parent=43 // pred_check_branch
        %4543 = sbr.rel (%p4541) target = $region60
      $region59: #{fused_forward.1} parent=43 // pred_region
        %s4544 = smul.u32 2, %s24
      $region60: #{fused_forward.1} parent=43 // pred_fallthru
        _
      // Predicated region
      $region61: #{fused_forward.1} parent=43 // pred_check
        %p4545 = pneg %p196
      $region62: #{fused_forward.1} parent=43 // pred_check_branch
        %4547 = sbr.rel (%p4545) target = $region64
      $region63: #{fused_forward.1} parent=43 // pred_region
        %s4548 = smul.u32 2, %s24
        %p4549 = scmp.lt.s32.totalorder %s23, 0
        %s4550 = scalar_select %p4549, %s23, 0
        %p4551 = scmp.lt.s32.totalorder %s4548, 1
        %s4552 = scalar_select %p4551, %s4548, 1
        %s4553 = smul.addr %s4550, 96
        %s4554 = sadd.s32 %s4552, %s4553
        %s4555 = smul.addr %s4554, 8
        %s4556 = scalar_lea.vmem %s6, %s4555
      $region64: #{fused_forward.1} parent=43 // pred_fallthru
        _
    $region44: #{fused_forward.1} parent=5 // pred_fallthru
      _
    %p4557 = scmp.le.s32.totalorder 2, %s12
    // Predicated region
    $region65: #{fused_forward.1} parent=5 // pred_check
      %p4558 = pneg %p4557
    $region66: #{fused_forward.1} parent=5 // pred_check_branch
      %4560 = sbr.rel (%p4558) target = $region68
    $region67: #{fused_forward.1} parent=5 // pred_region
      %s4561 = ssub.s32 %s12, 2
    $region68: #{fused_forward.1} parent=5 // pred_fallthru
      _
  $region6: #{fused_forward.1} parent=0 // loop_footer
    %s16 = sadd.s32 1, %s12
  $region7: #{fused_forward.1} parent=0 // loop_footer_branch
    %11 = sbr.rel target = $region3
  $region8: #{fused_forward.1} parent=0 // loop_exit
    _

</llo_original>
